<compile_context>
chip_gen: v7x
topology: tpu7x:2x2x1
jax: 0.10.0
libtpu: 0.0.40
codegen_flags: <defaults>
</compile_context>

<pallas_src>
import functools

import jax
import jax.numpy as jnp
from jax.experimental import pallas as pl
from jax.experimental.pallas import tpu as pltpu


def _round_up(x, m):
    return ((x + m - 1) // m) * m


def _vmem_limit_bytes():
    try:
        cap = int(pltpu.get_tpu_info().vmem_capacity_bytes)
    except Exception:
        cap = 64 * 1024 * 1024            # conservative (v7x per-core VMEM)
    return min(int(cap * 0.85), 110 * 1024 * 1024)


_VMEM_LIMIT = _vmem_limit_bytes()


# ---------------------------------------------------------------------------
# Pallas kernels
# ---------------------------------------------------------------------------
def _conv_wide_kernel(*refs, taps, tm, act, has_residual):
    """Fused in-kernel-im2col stride-1 conv: one MXU dot per tap, loop-carried
    f32 accumulator, bias (+ optional residual) + activation epilogue.

    x_ref : (Lp, Cin)        whole padded image flattened to rows (bf16),
                             resident in VMEM across the M-tile grid axis.
    w_ref : (k*k, Cin, Cout) folded-BN weights (bf16).
    b_ref : (1, Cout)        folded-BN bias (f32).
    r_ref : (TM, Cout)       optional residual in the same wide-row layout.
    o_ref : (TM, Cout)       "wide" output rows (bf16); garbage columns
                             j >= Wo are sliced off by the wrapper.
    """
    if has_residual:
        x_ref, w_ref, b_ref, r_ref, o_ref = refs
    else:
        x_ref, w_ref, b_ref, o_ref = refs
        r_ref = None

    base = pl.multiple_of(pl.program_id(1) * tm, 8)
    acc = jnp.dot(x_ref[pl.ds(base + taps[0], tm), :], w_ref[0],
                  preferred_element_type=jnp.float32)
    for t in range(1, len(taps)):
        acc = acc + jnp.dot(x_ref[pl.ds(base + taps[t], tm), :], w_ref[t],
                            preferred_element_type=jnp.float32)
    res = acc + b_ref[...]
    if act == "relu":
        res = jnp.maximum(res, 0.0)
    elif act == "tanh":
        res = jnp.tanh(res)
    if r_ref is not None:
        res = res + r_ref[...].astype(jnp.float32)
    o_ref[...] = res.astype(o_ref.dtype)


def _mm_bias_act_kernel(a_ref, w_ref, b_ref, o_ref, *, act):
    """Fused (TM,K)@(K,N) + bias + activation (im2col path / fallback)."""
    acc = jnp.dot(a_ref[...], w_ref[...], preferred_element_type=jnp.float32)
    acc = acc + b_ref[...]
    if act == "relu":
        acc = jnp.maximum(acc, 0.0)
    elif act == "tanh":
        acc = jnp.tanh(acc)
    o_ref[...] = acc.astype(o_ref.dtype)


def _masked_sl1_kernel(a_ref, b_ref, idx_ref, num_ref, den_ref):
    """Tiled masked SmoothL1 (beta=1); mask built in-kernel from int32 index."""
    @pl.when(pl.program_id(0) == 0)
    def _():
        num_ref[...] = jnp.zeros_like(num_ref)
        den_ref[...] = jnp.zeros_like(den_ref)

    d = a_ref[...] - b_ref[...]
    ad = jnp.abs(d)
    e = jnp.where(ad < 1.0, 0.5 * d * d, ad - 0.5)
    m = (idx_ref[...] == 1).astype(jnp.float32)
    num_ref[...] += jnp.sum(e * m, axis=0, keepdims=True)
    den_ref[...] += jnp.sum(m, axis=0, keepdims=True)


# ---------------------------------------------------------------------------
# Pallas wrappers
# ---------------------------------------------------------------------------
def _wide_layout(Ho, Wp):
    """Tile size / padded row-count for the wide-row conv output layout."""
    Mo = Ho * Wp
    ntiles = pl.cdiv(Mo, 512)
    TM = _round_up(pl.cdiv(Mo, ntiles), 8)
    Mo_pad = TM * ntiles
    return TM, Mo, Mo_pad


def matmul_bias_act(a, w, b, act):
    """a: (M,K) bf16, w: (K,N) bf16, b: (1,N) f32 -> (M,N) bf16, fused on MXU."""
    M, K = a.shape
    Kw, N = w.shape
    assert Kw == K
    ntiles = pl.cdiv(M, 512)
    TM = _round_up(pl.cdiv(M, ntiles), 8)
    Mp = TM * ntiles
    if Mp > M:
        a = jnp.pad(a, ((0, Mp - M), (0, 0)))

    out = pl.pallas_call(
        functools.partial(_mm_bias_act_kernel, act=act),
        out_shape=jax.ShapeDtypeStruct((Mp, N), jnp.bfloat16),
        grid=(Mp // TM,),
        in_specs=[pl.BlockSpec((TM, K), lambda i: (i, 0)),
                  pl.BlockSpec((K, N), lambda i: (0, 0)),
                  pl.BlockSpec((1, N), lambda i: (0, 0))],
        out_specs=pl.BlockSpec((TM, N), lambda i: (i, 0)),
        compiler_params=pltpu.CompilerParams(
            dimension_semantics=("parallel",),
            vmem_limit_bytes=_VMEM_LIMIT),
        cost_estimate=pl.CostEstimate(
            flops=int(2 * Mp * K * N), transcendentals=0,
            bytes_accessed=int(Mp * K * 2 + K * N * 2 + Mp * N * 2 + N * 4)),
    )(a, w, b)
    return out[:M] if Mp > M else out


def conv2d_im2col(x, w_flat, b, *, k, stride, pad, pad_mode, act):
    """Conv2d via host im2col + fused Pallas matmul (small-Cin layers / fallback)."""
    B, H, W, Cin = x.shape
    if pad > 0:
        mode = "reflect" if pad_mode == "reflect" else "constant"
        x = jnp.pad(x, ((0, 0), (pad, pad), (pad, pad), (0, 0)), mode=mode)
    Hp, Wp = H + 2 * pad, W + 2 * pad
    Ho, Wo = (Hp - k) // stride + 1, (Wp - k) // stride + 1
    cols = [x[:, di:di + stride * (Ho - 1) + 1:stride,
              dj:dj + stride * (Wo - 1) + 1:stride, :]
            for di in range(k) for dj in range(k)]
    rows = jnp.concatenate(cols, axis=-1).reshape(B * Ho * Wo, k * k * Cin)
    Kw = w_flat.shape[0]
    if Kw > k * k * Cin:
        rows = jnp.pad(rows, ((0, 0), (0, Kw - k * k * Cin)))
    y = matmul_bias_act(rows, w_flat, b, act)
    return y.reshape(B, Ho, Wo, -1)


def conv2d_wide(x, w, b, *, k, pad, pad_mode, act,
                residual_wide=None, return_wide=False):
    """Stride-1 Conv2d (+folded BN, +act[, +fused residual]) with in-kernel im2col.

    x: (B, H, W, Cin) bf16 NHWC.  Returns NHWC (or the raw wide buffer when
    `return_wide=True`, for feeding the next block's fused residual add).
    """
    B, H, W, Cin = x.shape
    ntap, Cin_w, Cout = w.shape
    assert ntap == k * k and Cin_w == Cin
    Hp, Wp = H + 2 * pad, W + 2 * pad
    Ho, Wo = Hp - k + 1, Wp - k + 1
    TM, Mo, Mo_pad = _wide_layout(Ho, Wp)
    max_off = (k - 1) * (Wp + 1)
    Lp_needed = Mo_pad + max_off
    has_res = residual_wide is not None
    if has_res:
        assert residual_wide.shape == (B, Mo_pad, Cout)

    # VMEM feasibility of the whole-image-resident strategy (v7x: 64 MiB VMEM).
    resident = (2 * Lp_needed * Cin * 2 + 2 * ntap * Cin * Cout * 2
                + 4 * TM * Cout * 2 + TM * Cout * 4
                + (2 * TM * Cout * 2 if has_res else 0))
    if resident > int(0.7 * _VMEM_LIMIT):
        # Fallback: M-tiled im2col matmul (no resident image in VMEM).
        out = conv2d_im2col(x, w.reshape(ntap * Cin, Cout), b, k=k, stride=1,
                            pad=pad, pad_mode=pad_mode, act=act)
        if has_res:
            r = residual_wide[:, :Mo, :].reshape(B, Ho, Wp, Cout)[:, :, :Wo, :]
            out = (out.astype(jnp.float32) + r.astype(jnp.float32)).astype(jnp.bfloat16)
        if return_wide:
            ow = jnp.pad(out, ((0, 0), (0, 0), (0, Wp - Wo), (0, 0))).reshape(B, Mo, Cout)
            return jnp.pad(ow, ((0, 0), (0, Mo_pad - Mo), (0, 0)))
        return out

    # Host-side padding: single jnp.pad for zero / no padding; reflect keeps the
    # reflect pad + a small tail pad (tail values only feed sliced-off columns).
    if pad == 0 or pad_mode != "reflect":
        extra_h = max(0, -(-(Lp_needed - Hp * Wp) // Wp))
        xp = jnp.pad(x, ((0, 0), (pad, pad + extra_h), (pad, pad), (0, 0)))
        Lp = (Hp + extra_h) * Wp
        x_flat = xp.reshape(B, Lp, Cin)
    else:
        xp = jnp.pad(x, ((0, 0), (pad, pad), (pad, pad), (0, 0)), mode="reflect")
        x_flat = xp.reshape(B, Hp * Wp, Cin)
        Lp = max(Lp_needed, Hp * Wp)
        if Lp > Hp * Wp:
            x_flat = jnp.pad(x_flat, ((0, 0), (0, Lp - Hp * Wp), (0, 0)))

    taps = tuple(di * Wp + dj for di in range(k) for dj in range(k))

    in_specs = [
        pl.BlockSpec((None, Lp, Cin), lambda bb, mm: (bb, 0, 0)),
        pl.BlockSpec((ntap, Cin, Cout), lambda bb, mm: (0, 0, 0)),
        pl.BlockSpec((1, Cout), lambda bb, mm: (0, 0)),
    ]
    args = [x_flat, w, b]
    if has_res:
        in_specs.append(pl.BlockSpec((None, TM, Cout), lambda bb, mm: (bb, mm, 0)))
        args.append(residual_wide)

    flops = int(2 * B * Mo_pad * ntap * Cin * Cout)
    bytes_accessed = int(B * Lp * Cin * 2 + ntap * Cin * Cout * 2
                         + (2 if has_res else 1) * B * Mo_pad * Cout * 2 + Cout * 4)

    out = pl.pallas_call(
        functools.partial(_conv_wide_kernel, taps=taps, tm=TM, act=act,
                          has_residual=has_res),
        out_shape=jax.ShapeDtypeStruct((B, Mo_pad, Cout), jnp.bfloat16),
        grid=(B, Mo_pad // TM),
        in_specs=in_specs,
        out_specs=pl.BlockSpec((None, TM, Cout), lambda bb, mm: (bb, mm, 0)),
        compiler_params=pltpu.CompilerParams(
            dimension_semantics=("parallel", "parallel"),
            vmem_limit_bytes=_VMEM_LIMIT),
        cost_estimate=pl.CostEstimate(flops=flops, transcendentals=0,
                                      bytes_accessed=bytes_accessed),
    )(*args)

    if return_wide:
        return out
    return out[:, :Mo, :].reshape(B, Ho, Wp, Cout)[:, :, :Wo, :]


def conv2d_s2(x, w_s2d, b, *, act):
    """3x3 stride-2 pad-1 Conv2d (+folded BN, +act) as space-to-depth + a 2x2
    stride-1 wide conv.  x: (B, H, W, Cin_real) bf16, H and W even."""
    B, H, W, C = x.shape
    assert H % 2 == 0 and W % 2 == 0
    xp = jnp.pad(x, ((0, 0), (1, 1), (1, 1), (0, 0)))
    Hh, Wh = (H + 2) // 2, (W + 2) // 2
    xs = xp.reshape(B, Hh, 2, Wh, 2, C)
    xs = jnp.transpose(xs, (0, 1, 3, 2, 4, 5)).reshape(B, Hh, Wh, 4 * C)
    return conv2d_wide(xs, w_s2d, b, k=2, pad=0, pad_mode="zero", act=act)


def masked_smooth_l1(a, b, index):
    """== F.smooth_l1_loss(a[index==1], b[index==1]) with mean reduction."""
    af = a.reshape(-1).astype(jnp.float32)
    bf = b.reshape(-1).astype(jnp.float32)
    idx = index.reshape(-1).astype(jnp.int32)
    n = af.shape[0]
    L = 128
    R = pl.cdiv(n, L)
    ntiles = pl.cdiv(R, 2048)
    TR = _round_up(pl.cdiv(R, ntiles), 8)
    Rp = TR * ntiles
    padn = Rp * L - n
    af = jnp.pad(af, (0, padn)).reshape(Rp, L)
    bf = jnp.pad(bf, (0, padn)).reshape(Rp, L)
    idx = jnp.pad(idx, (0, padn)).reshape(Rp, L)   # pad value 0 != 1 -> excluded

    num_v, den_v = pl.pallas_call(
        _masked_sl1_kernel,
        out_shape=(jax.ShapeDtypeStruct((1, L), jnp.float32),
                   jax.ShapeDtypeStruct((1, L), jnp.float32)),
        grid=(Rp // TR,),
        in_specs=[pl.BlockSpec((TR, L), lambda i: (i, 0)),
                  pl.BlockSpec((TR, L), lambda i: (i, 0)),
                  pl.BlockSpec((TR, L), lambda i: (i, 0))],
        out_specs=(pl.BlockSpec((1, L), lambda i: (0, 0)),
                   pl.BlockSpec((1, L), lambda i: (0, 0))),
        compiler_params=pltpu.CompilerParams(
            dimension_semantics=("arbitrary",),
            vmem_limit_bytes=_VMEM_LIMIT),
        cost_estimate=pl.CostEstimate(flops=int(8 * Rp * L), transcendentals=0,
                                      bytes_accessed=int(2 * Rp * L * 4 + Rp * L * 4 + 2 * L * 4)),
    )(af, bf, idx)
    num = jnp.sum(num_v)
    den = jnp.sum(den_v)   # NOTE: empty mask -> 0/0 -> NaN (PyTorch NaNs too).
    return num / den


# ---------------------------------------------------------------------------
# deterministic parameter init (mimics init_net('normal', 0.02), BN eval-folded)
# ---------------------------------------------------------------------------
def _bn_scale(key, cout, with_bn, eps=1e-5):
    if with_bn:
        gamma = 1.0 + 0.02 * jax.random.normal(key, (cout,), jnp.float32)
        return gamma / jnp.sqrt(1.0 + eps)   # running_mean=0, running_var=1, beta=0
    return jnp.ones((cout,), jnp.float32)


def _make_conv_wide(key, cin, cout, k, with_bn=True):
    kw, kb = jax.random.split(key)
    w = 0.02 * jax.random.normal(kw, (cout, cin, k, k), jnp.float32)
    w = w * _bn_scale(kb, cout, with_bn)[:, None, None, None]
    wt = jnp.transpose(w, (2, 3, 1, 0)).reshape(k * k, cin, cout)  # tap-major
    return wt.astype(jnp.bfloat16), jnp.zeros((1, cout), jnp.float32)


def _make_conv_im2col(key, cin, cout, k, k_pad, cout_pad, with_bn=True):
    kw, kb = jax.random.split(key)
    w = 0.02 * jax.random.normal(kw, (cout, cin, k, k), jnp.float32)
    w = w * _bn_scale(kb, cout, with_bn)[:, None, None, None]
    wf = jnp.transpose(w, (2, 3, 1, 0)).reshape(k * k * cin, cout)
    wf = jnp.pad(wf, ((0, k_pad - k * k * cin), (0, cout_pad - cout)))
    return wf.astype(jnp.bfloat16), jnp.zeros((1, cout_pad), jnp.float32)


def _make_conv_s2d(key, cin, cout, with_bn=True):
    """3x3 stride-2 pad-1 conv (+BN folded), rewritten as a 2x2 stride-1 conv
    over the 2x2 space-to-depth of the zero-padded input."""
    kw, kb = jax.random.split(key)
    w = 0.02 * jax.random.normal(kw, (cout, cin, 3, 3), jnp.float32)
    w = w * _bn_scale(kb, cout, with_bn)[:, None, None, None]
    w4 = jnp.zeros((cout, cin, 4, 4), jnp.float32).at[:, :, :3, :3].set(w)
    w4 = w4.reshape(cout, cin, 2, 2, 2, 2)               # (cout, c, a, p, b, q)
    ws = jnp.transpose(w4, (2, 4, 3, 5, 1, 0)).reshape(4, 4 * cin, cout)
    return ws.astype(jnp.bfloat16), jnp.zeros((1, cout), jnp.float32)


def init_pint_params(key):
    keys = iter(jax.random.split(key, 32))
    nxt = lambda: next(keys)

    filt = {
        "head": _make_conv_im2col(nxt(), 3, 64, 7, k_pad=256, cout_pad=128),
        "down0": _make_conv_s2d(nxt(), 64, 128),
        "down1": _make_conv_s2d(nxt(), 128, 256),
        "blocks": [
            (_make_conv_wide(nxt(), 256, 256, 3),
             _make_conv_wide(nxt(), 256, 256, 3, with_bn=(i != 5)))  # last: no norm
            for i in range(6)
        ],
    }
    # TODO(synk): NestedUNet internals unavailable; 3->3 spatial-preserving stub.
    nunet = {
        "c0": _make_conv_im2col(nxt(), 3, 16, 3, k_pad=128, cout_pad=128),
        "c1": _make_conv_im2col(nxt(), 16, 16, 3, k_pad=256, cout_pad=128),
        "c2": _make_conv_im2col(nxt(), 16, 3, 1, k_pad=128, cout_pad=128, with_bn=False),
    }
    return {"image_filter": filt, "nunet": nunet}


# ---------------------------------------------------------------------------
# model forward passes (public API is NCHW f32, like the PyTorch module)
# ---------------------------------------------------------------------------
def nested_unet_stub(np_, x_nchw):
    # TODO(synk): stand-in for NestedUNet(in_ch=3, out_ch=3) — source not provided.
    x = jnp.transpose(x_nchw, (0, 2, 3, 1)).astype(jnp.bfloat16)
    y = conv2d_im2col(x, *np_["c0"], k=3, stride=1, pad=1, pad_mode="zero", act="relu")
    y = conv2d_im2col(y[..., :16], *np_["c1"], k=3, stride=1, pad=1, pad_mode="zero", act="relu")
    y = conv2d_im2col(y[..., :16], *np_["c2"], k=1, stride=1, pad=0, pad_mode="zero", act="none")
    y = y[..., :3]
    return jnp.transpose(y, (0, 3, 1, 2)).astype(jnp.float32)


def pint_filter(fp, images):
    """Pint_Model.filter: im_feat = ResnetFilter(images).  [B,3,H,W] -> [B,256,H/4,W/4]."""
    x = jnp.transpose(images, (0, 2, 3, 1)).astype(jnp.bfloat16)      # NHWC bf16
    # 7x7 reflect head: Cin=3 -> im2col + fused matmul (MXU/lane dense)
    y = conv2d_im2col(x, *fp["head"], k=7, stride=1, pad=3, pad_mode="reflect", act="relu")
    # stride-2 downsamplers: space-to-depth + 2x2 stride-1 wide conv
    y = conv2d_s2(y[..., :64], *fp["down0"], act="relu")              # (B, H/2, W/2, 128)
    y = conv2d_s2(y, *fp["down1"], act="relu")                        # (B, H/4, W/4, 256)

    # 6 resnet blocks; residual add fused into the 2nd conv of each block.
    B, Ho, Wo, C = y.shape
    Wp = Wo + 2
    _, Mo, Mo_pad = _wide_layout(Ho, Wp)
    y_wide = jnp.pad(y, ((0, 0), (0, 0), (0, Wp - Wo), (0, 0))).reshape(B, Mo, C)
    y_wide = jnp.pad(y_wide, ((0, 0), (0, Mo_pad - Mo), (0, 0)))
    for pa, pb in fp["blocks"]:
        h = conv2d_wide(y, *pa, k=3, pad=1, pad_mode="reflect", act="relu")
        y_wide = conv2d_wide(h, *pb, k=3, pad=1, pad_mode="reflect", act="none",
                             residual_wide=y_wide, return_wide=True)
        y = y_wide[:, :Mo, :].reshape(B, Ho, Wp, C)[:, :, :Wo, :]
    # opt.use_tanh assumed False (no trailing Tanh)
    return jnp.transpose(y, (0, 3, 1, 2)).astype(jnp.float32)


def pint_forward(params, uv_A, uv_B, part_uv_B, index):
    """Pint_Model.forward(uv_A, uv_B, part_uv_B, index)."""
    complete_feat = nested_unet_stub(params["nunet"], uv_A)
    complete_feat_B = nested_unet_stub(params["nunet"], uv_B)
    # == SmoothL1Loss()(complete_feat[index==1], part_uv_B[index==1].detach())
    loss1 = masked_smooth_l1(complete_feat, part_uv_B, index)
    loss2 = jnp.float32(0.0)
    return complete_feat, complete_feat_B, loss1, loss2


# ---------------------------------------------------------------------------
if __name__ == "__main__":
    key = jax.random.PRNGKey(0)
    pk, k1, k2, k3, k4 = jax.random.split(key, 5)
    params = init_pint_params(pk)

    B, C, H, W = 2, 3, 16, 16
    uv_A = jax.random.normal(k1, (B, C, H, W), dtype=jnp.float32)
    uv_B = jax.random.normal(k2, (B, C, H, W), dtype=jnp.float32)
    part_uv_B = jax.random.normal(k3, (B, C, H, W), dtype=jnp.float32)
    index = (jax.random.uniform(k4, (B, C, H, W)) > 0.5).astype(jnp.int32)

    fwd = jax.jit(pint_forward)
    complete_feat, complete_feat_B, loss1, loss2 = fwd(params, uv_A, uv_B, part_uv_B, index)
    jax.block_until_ready((complete_feat, complete_feat_B, loss1, loss2))

    filt = jax.jit(pint_filter)
    im_feat = filt(params["image_filter"], uv_A)
    jax.block_until_ready(im_feat)

    assert complete_feat.shape == (B, 3, H, W)
    assert complete_feat_B.shape == (B, 3, H, W)
    assert im_feat.shape == (B, 256, H // 4, W // 4)
    assert bool(jnp.isfinite(loss1))
    print("KERNEL_OK")
</pallas_src>

<mosaic_0001>
module attributes {stable_mosaic.version = 11 : i64} {
  func.func @_mm_bias_act_kernel(%arg0: i32, %arg1: memref<512x128xbf16, #tpu.memory_space<vmem>>, %arg2: memref<128x128xbf16, #tpu.memory_space<vmem>>, %arg3: memref<1x128xf32, #tpu.memory_space<vmem>>, %arg4: memref<512x128xbf16, #tpu.memory_space<vmem>>) attributes {dimension_semantics = [#tpu.dimension_semantics<parallel>], iteration_bounds = array<i64: 1>, scalar_prefetch = 0 : i64, scratch_operands = 0 : i64, tpu.core_type = #tpu.core_type<tc>, window_params = [{transform_indices = @transform_0, window_bounds = array<i64: 512, 128>}, {pipeline_mode = #tpu.pipeline_mode<synchronous>, transform_indices = @transform_1, window_bounds = array<i64: 128, 128>}, {pipeline_mode = #tpu.pipeline_mode<synchronous>, transform_indices = @transform_2, window_bounds = array<i64: 1, 128>}, {transform_indices = @transform_3, window_bounds = array<i64: 512, 128>}]} {
    %c0 = arith.constant 0 : index
    %c0_0 = arith.constant 0 : index
    %0 = vector.load %arg1[%c0, %c0_0] : memref<512x128xbf16, #tpu.memory_space<vmem>>, vector<512x128xbf16>
    %c0_1 = arith.constant 0 : index
    %c0_2 = arith.constant 0 : index
    %1 = vector.load %arg2[%c0_1, %c0_2] : memref<128x128xbf16, #tpu.memory_space<vmem>>, vector<128x128xbf16>
    %cst = arith.constant dense<0.000000e+00> : vector<512x128xf32>
    %2 = tpu.matmul %0, %1, %cst {dimension_numbers = #tpu.dot_dimension_numbers<[1], [0], [0], [1], [0, 0, 1, 1], [], []>} : vector<512x128xbf16>, vector<128x128xbf16>, vector<512x128xf32> -> vector<512x128xf32>
    %c0_3 = arith.constant 0 : index
    %c0_4 = arith.constant 0 : index
    %3 = vector.load %arg3[%c0_3, %c0_4] : memref<1x128xf32, #tpu.memory_space<vmem>>, vector<1x128xf32>
    %4 = vector.broadcast %3 : vector<1x128xf32> to vector<512x128xf32>
    %5 = arith.addf %2, %4 : vector<512x128xf32>
    %cst_5 = arith.constant 0.000000e+00 : f32
    %6 = vector.broadcast %cst_5 : f32 to vector<512x128xf32>
    %7 = arith.maximumf %5, %6 : vector<512x128xf32>
    %8 = arith.truncf %7 : vector<512x128xf32> to vector<512x128xbf16>
    %c0_6 = arith.constant 0 : index
    %c0_7 = arith.constant 0 : index
    %9 = vector.load %arg4[%c0_6, %c0_7] : memref<512x128xbf16, #tpu.memory_space<vmem>>, vector<512x128xbf16>
    tpu.vector_store %arg4[%c0_6, %c0_7], %8 {strides = array<i32>} : memref<512x128xbf16, #tpu.memory_space<vmem>>, vector<512x128xbf16>,
    return
  }
  func.func @transform_0(%arg0: i32) -> (i32, i32) {
    %c0_i32 = arith.constant 0 : i32
    %c0_i32_0 = arith.constant 0 : i32
    return %arg0, %c0_i32 : i32, i32
  }
  func.func @transform_1(%arg0: i32) -> (i32, i32) {
    %c0_i32 = arith.constant 0 : i32
    %c0_i32_0 = arith.constant 0 : i32
    %c0_i32_1 = arith.constant 0 : i32
    return %c0_i32, %c0_i32_0 : i32, i32
  }
  func.func @transform_2(%arg0: i32) -> (i32, i32) {
    %c0_i32 = arith.constant 0 : i32
    %c0_i32_0 = arith.constant 0 : i32
    %c0_i32_1 = arith.constant 0 : i32
    return %c0_i32, %c0_i32_0 : i32, i32
  }
  func.func @transform_3(%arg0: i32) -> (i32, i32) {
    %c0_i32 = arith.constant 0 : i32
    %c0_i32_0 = arith.constant 0 : i32
    return %arg0, %c0_i32 : i32, i32
  }
}

module attributes {stable_mosaic.version = 11 : i64} {
  func.func @_mm_bias_act_kernel(%arg0: i32, %arg1: memref<512x256xbf16, #tpu.memory_space<vmem>>, %arg2: memref<256x128xbf16, #tpu.memory_space<vmem>>, %arg3: memref<1x128xf32, #tpu.memory_space<vmem>>, %arg4: memref<512x128xbf16, #tpu.memory_space<vmem>>) attributes {dimension_semantics = [#tpu.dimension_semantics<parallel>], iteration_bounds = array<i64: 1>, scalar_prefetch = 0 : i64, scratch_operands = 0 : i64, tpu.core_type = #tpu.core_type<tc>, window_params = [{transform_indices = @transform_0, window_bounds = array<i64: 512, 256>}, {pipeline_mode = #tpu.pipeline_mode<synchronous>, transform_indices = @transform_1, window_bounds = array<i64: 256, 128>}, {pipeline_mode = #tpu.pipeline_mode<synchronous>, transform_indices = @transform_2, window_bounds = array<i64: 1, 128>}, {transform_indices = @transform_3, window_bounds = array<i64: 512, 128>}]} {
    %c0 = arith.constant 0 : index
    %c0_0 = arith.constant 0 : index
    %0 = vector.load %arg1[%c0, %c0_0] : memref<512x256xbf16, #tpu.memory_space<vmem>>, vector<512x256xbf16>
    %c0_1 = arith.constant 0 : index
    %c0_2 = arith.constant 0 : index
    %1 = vector.load %arg2[%c0_1, %c0_2] : memref<256x128xbf16, #tpu.memory_space<vmem>>, vector<256x128xbf16>
    %cst = arith.constant dense<0.000000e+00> : vector<512x128xf32>
    %2 = tpu.matmul %0, %1, %cst {dimension_numbers = #tpu.dot_dimension_numbers<[1], [0], [0], [1], [0, 0, 1, 1], [], []>} : vector<512x256xbf16>, vector<256x128xbf16>, vector<512x128xf32> -> vector<512x128xf32>
    %c0_3 = arith.constant 0 : index
    %c0_4 = arith.constant 0 : index
    %3 = vector.load %arg3[%c0_3, %c0_4] : memref<1x128xf32, #tpu.memory_space<vmem>>, vector<1x128xf32>
    %4 = vector.broadcast %3 : vector<1x128xf32> to vector<512x128xf32>
    %5 = arith.addf %2, %4 : vector<512x128xf32>
    %cst_5 = arith.constant 0.000000e+00 : f32
    %6 = vector.broadcast %cst_5 : f32 to vector<512x128xf32>
    %7 = arith.maximumf %5, %6 : vector<512x128xf32>
    %8 = arith.truncf %7 : vector<512x128xf32> to vector<512x128xbf16>
    %c0_6 = arith.constant 0 : index
    %c0_7 = arith.constant 0 : index
    %9 = vector.load %arg4[%c0_6, %c0_7] : memref<512x128xbf16, #tpu.memory_space<vmem>>, vector<512x128xbf16>
    tpu.vector_store %arg4[%c0_6, %c0_7], %8 {strides = array<i32>} : memref<512x128xbf16, #tpu.memory_space<vmem>>, vector<512x128xbf16>,
    return
  }
  func.func @transform_0(%arg0: i32) -> (i32, i32) {
    %c0_i32 = arith.constant 0 : i32
    %c0_i32_0 = arith.constant 0 : i32
    return %arg0, %c0_i32 : i32, i32
  }
  func.func @transform_1(%arg0: i32) -> (i32, i32) {
    %c0_i32 = arith.constant 0 : i32
    %c0_i32_0 = arith.constant 0 : i32
    %c0_i32_1 = arith.constant 0 : i32
    return %c0_i32, %c0_i32_0 : i32, i32
  }
  func.func @transform_2(%arg0: i32) -> (i32, i32) {
    %c0_i32 = arith.constant 0 : i32
    %c0_i32_0 = arith.constant 0 : i32
    %c0_i32_1 = arith.constant 0 : i32
    return %c0_i32, %c0_i32_0 : i32, i32
  }
  func.func @transform_3(%arg0: i32) -> (i32, i32) {
    %c0_i32 = arith.constant 0 : i32
    %c0_i32_0 = arith.constant 0 : i32
    return %arg0, %c0_i32 : i32, i32
  }
}

module attributes {stable_mosaic.version = 11 : i64} {
  func.func @_mm_bias_act_kernel(%arg0: i32, %arg1: memref<512x128xbf16, #tpu.memory_space<vmem>>, %arg2: memref<128x128xbf16, #tpu.memory_space<vmem>>, %arg3: memref<1x128xf32, #tpu.memory_space<vmem>>, %arg4: memref<512x128xbf16, #tpu.memory_space<vmem>>) attributes {dimension_semantics = [#tpu.dimension_semantics<parallel>], iteration_bounds = array<i64: 1>, scalar_prefetch = 0 : i64, scratch_operands = 0 : i64, tpu.core_type = #tpu.core_type<tc>, window_params = [{transform_indices = @transform_0, window_bounds = array<i64: 512, 128>}, {pipeline_mode = #tpu.pipeline_mode<synchronous>, transform_indices = @transform_1, window_bounds = array<i64: 128, 128>}, {pipeline_mode = #tpu.pipeline_mode<synchronous>, transform_indices = @transform_2, window_bounds = array<i64: 1, 128>}, {transform_indices = @transform_3, window_bounds = array<i64: 512, 128>}]} {
    %c0 = arith.constant 0 : index
    %c0_0 = arith.constant 0 : index
    %0 = vector.load %arg1[%c0, %c0_0] : memref<512x128xbf16, #tpu.memory_space<vmem>>, vector<512x128xbf16>
    %c0_1 = arith.constant 0 : index
    %c0_2 = arith.constant 0 : index
    %1 = vector.load %arg2[%c0_1, %c0_2] : memref<128x128xbf16, #tpu.memory_space<vmem>>, vector<128x128xbf16>
    %cst = arith.constant dense<0.000000e+00> : vector<512x128xf32>
    %2 = tpu.matmul %0, %1, %cst {dimension_numbers = #tpu.dot_dimension_numbers<[1], [0], [0], [1], [0, 0, 1, 1], [], []>} : vector<512x128xbf16>, vector<128x128xbf16>, vector<512x128xf32> -> vector<512x128xf32>
    %c0_3 = arith.constant 0 : index
    %c0_4 = arith.constant 0 : index
    %3 = vector.load %arg3[%c0_3, %c0_4] : memref<1x128xf32, #tpu.memory_space<vmem>>, vector<1x128xf32>
    %4 = vector.broadcast %3 : vector<1x128xf32> to vector<512x128xf32>
    %5 = arith.addf %2, %4 : vector<512x128xf32>
    %6 = arith.truncf %5 : vector<512x128xf32> to vector<512x128xbf16>
    %c0_5 = arith.constant 0 : index
    %c0_6 = arith.constant 0 : index
    %7 = vector.load %arg4[%c0_5, %c0_6] : memref<512x128xbf16, #tpu.memory_space<vmem>>, vector<512x128xbf16>
    tpu.vector_store %arg4[%c0_5, %c0_6], %6 {strides = array<i32>} : memref<512x128xbf16, #tpu.memory_space<vmem>>, vector<512x128xbf16>,
    return
  }
  func.func @transform_0(%arg0: i32) -> (i32, i32) {
    %c0_i32 = arith.constant 0 : i32
    %c0_i32_0 = arith.constant 0 : i32
    return %arg0, %c0_i32 : i32, i32
  }
  func.func @transform_1(%arg0: i32) -> (i32, i32) {
    %c0_i32 = arith.constant 0 : i32
    %c0_i32_0 = arith.constant 0 : i32
    %c0_i32_1 = arith.constant 0 : i32
    return %c0_i32, %c0_i32_0 : i32, i32
  }
  func.func @transform_2(%arg0: i32) -> (i32, i32) {
    %c0_i32 = arith.constant 0 : i32
    %c0_i32_0 = arith.constant 0 : i32
    %c0_i32_1 = arith.constant 0 : i32
    return %c0_i32, %c0_i32_0 : i32, i32
  }
  func.func @transform_3(%arg0: i32) -> (i32, i32) {
    %c0_i32 = arith.constant 0 : i32
    %c0_i32_0 = arith.constant 0 : i32
    return %arg0, %c0_i32 : i32, i32
  }
}

module attributes {stable_mosaic.version = 11 : i64} {
  func.func @_masked_sl1_kernel(%arg0: i32, %arg1: memref<16x128xf32, #tpu.memory_space<vmem>>, %arg2: memref<16x128xf32, #tpu.memory_space<vmem>>, %arg3: memref<16x128xi32, #tpu.memory_space<vmem>>, %arg4: memref<1x128xf32, #tpu.memory_space<vmem>>, %arg5: memref<1x128xf32, #tpu.memory_space<vmem>>) attributes {dimension_semantics = [#tpu.dimension_semantics<arbitrary>], iteration_bounds = array<i64: 1>, scalar_prefetch = 0 : i64, scratch_operands = 0 : i64, tpu.core_type = #tpu.core_type<tc>, window_params = [{transform_indices = @transform_0, window_bounds = array<i64: 16, 128>}, {transform_indices = @transform_1, window_bounds = array<i64: 16, 128>}, {transform_indices = @transform_2, window_bounds = array<i64: 16, 128>}, {pipeline_mode = #tpu.pipeline_mode<synchronous>, transform_indices = @transform_3, window_bounds = array<i64: 1, 128>}, {pipeline_mode = #tpu.pipeline_mode<synchronous>, transform_indices = @transform_4, window_bounds = array<i64: 1, 128>}]} {
    %c0_i32 = arith.constant 0 : i32
    %0 = arith.cmpi eq, %arg0, %c0_i32 : i32
    %1 = arith.extui %0 : i1 to i32
    %c0_i32_0 = arith.constant 0 : i32
    %2 = arith.cmpi ne, %1, %c0_i32_0 : i32
    scf.if %2 {
      %cst_18 = arith.constant 0.000000e+00 : f32
      %31 = vector.broadcast %cst_18 : f32 to vector<1x128xf32>
      %c0_19 = arith.constant 0 : index
      %c0_20 = arith.constant 0 : index
      %32 = vector.load %arg4[%c0_19, %c0_20] : memref<1x128xf32, #tpu.memory_space<vmem>>, vector<1x128xf32>
      tpu.vector_store %arg4[%c0_19, %c0_20], %31 {strides = array<i32>} : memref<1x128xf32, #tpu.memory_space<vmem>>, vector<1x128xf32>,
      %cst_21 = arith.constant 0.000000e+00 : f32
      %33 = vector.broadcast %cst_21 : f32 to vector<1x128xf32>
      %c0_22 = arith.constant 0 : index
      %c0_23 = arith.constant 0 : index
      %34 = vector.load %arg5[%c0_22, %c0_23] : memref<1x128xf32, #tpu.memory_space<vmem>>, vector<1x128xf32>
      tpu.vector_store %arg5[%c0_22, %c0_23], %33 {strides = array<i32>} : memref<1x128xf32, #tpu.memory_space<vmem>>, vector<1x128xf32>,
    } else {
    }
    %c0 = arith.constant 0 : index
    %c0_1 = arith.constant 0 : index
    %3 = vector.load %arg1[%c0, %c0_1] : memref<16x128xf32, #tpu.memory_space<vmem>>, vector<16x128xf32>
    %c0_2 = arith.constant 0 : index
    %c0_3 = arith.constant 0 : index
    %4 = vector.load %arg2[%c0_2, %c0_3] : memref<16x128xf32, #tpu.memory_space<vmem>>, vector<16x128xf32>
    %5 = arith.subf %3, %4 : vector<16x128xf32>
    %6 = math.absf %5 : vector<16x128xf32>
    %cst = arith.constant 1.000000e+00 : f32
    %7 = vector.broadcast %cst : f32 to vector<16x128xf32>
    %8 = arith.cmpf olt, %6, %7 : vector<16x128xf32>
    %cst_4 = arith.constant 5.000000e-01 : f32
    %9 = vector.broadcast %cst_4 : f32 to vector<16x128xf32>
    %10 = arith.mulf %9, %5 : vector<16x128xf32>
    %11 = arith.mulf %10, %5 : vector<16x128xf32>
    %cst_5 = arith.constant 5.000000e-01 : f32
    %12 = vector.broadcast %cst_5 : f32 to vector<16x128xf32>
    %13 = arith.subf %6, %12 : vector<16x128xf32>
    %14 = arith.select %8, %11, %13 : vector<16x128xi1>, vector<16x128xf32>
    %c0_6 = arith.constant 0 : index
    %c0_7 = arith.constant 0 : index
    %15 = vector.load %arg3[%c0_6, %c0_7] : memref<16x128xi32, #tpu.memory_space<vmem>>, vector<16x128xi32>
    %c1_i32 = arith.constant 1 : i32
    %16 = vector.broadcast %c1_i32 : i32 to vector<16x128xi32>
    %17 = arith.cmpi eq, %15, %16 : vector<16x128xi32>
    %18 = arith.extui %17 : vector<16x128xi1> to vector<16x128xi32>
    %19 = arith.sitofp %18 : vector<16x128xi32> to vector<16x128xf32>
    %c0_8 = arith.constant 0 : index
    %c0_9 = arith.constant 0 : index
    %20 = vector.load %arg4[%c0_8, %c0_9] : memref<1x128xf32, #tpu.memory_space<vmem>>, vector<1x128xf32>
    %21 = arith.mulf %14, %19 : vector<16x128xf32>
    %cst_10 = arith.constant dense<0.000000e+00> : vector<128xf32>
    %22 = vector.multi_reduction <add>, %21, %cst_10 [0] : vector<16x128xf32> to vector<128xf32>
    %23 = vector.shape_cast %22 : vector<128xf32> to vector<1x128xf32>
    %24 = arith.addf %20, %23 : vector<1x128xf32>
    %c0_11 = arith.constant 0 : index
    %c0_12 = arith.constant 0 : index
    %25 = vector.load %arg4[%c0_11, %c0_12] : memref<1x128xf32, #tpu.memory_space<vmem>>, vector<1x128xf32>
    tpu.vector_store %arg4[%c0_11, %c0_12], %24 {strides = array<i32>} : memref<1x128xf32, #tpu.memory_space<vmem>>, vector<1x128xf32>,
    %c0_13 = arith.constant 0 : index
    %c0_14 = arith.constant 0 : index
    %26 = vector.load %arg5[%c0_13, %c0_14] : memref<1x128xf32, #tpu.memory_space<vmem>>, vector<1x128xf32>
    %cst_15 = arith.constant dense<0.000000e+00> : vector<128xf32>
    %27 = vector.multi_reduction <add>, %19, %cst_15 [0] : vector<16x128xf32> to vector<128xf32>
    %28 = vector.shape_cast %27 : vector<128xf32> to vector<1x128xf32>
    %29 = arith.addf %26, %28 : vector<1x128xf32>
    %c0_16 = arith.constant 0 : index
    %c0_17 = arith.constant 0 : index
    %30 = vector.load %arg5[%c0_16, %c0_17] : memref<1x128xf32, #tpu.memory_space<vmem>>, vector<1x128xf32>
    tpu.vector_store %arg5[%c0_16, %c0_17], %29 {strides = array<i32>} : memref<1x128xf32, #tpu.memory_space<vmem>>, vector<1x128xf32>,
    return
  }
  func.func @transform_0(%arg0: i32) -> (i32, i32) {
    %c0_i32 = arith.constant 0 : i32
    %c0_i32_0 = arith.constant 0 : i32
    return %arg0, %c0_i32 : i32, i32
  }
  func.func @transform_1(%arg0: i32) -> (i32, i32) {
    %c0_i32 = arith.constant 0 : i32
    %c0_i32_0 = arith.constant 0 : i32
    return %arg0, %c0_i32 : i32, i32
  }
  func.func @transform_2(%arg0: i32) -> (i32, i32) {
    %c0_i32 = arith.constant 0 : i32
    %c0_i32_0 = arith.constant 0 : i32
    return %arg0, %c0_i32 : i32, i32
  }
  func.func @transform_3(%arg0: i32) -> (i32, i32) {
    %c0_i32 = arith.constant 0 : i32
    %c0_i32_0 = arith.constant 0 : i32
    %c0_i32_1 = arith.constant 0 : i32
    return %c0_i32, %c0_i32_0 : i32, i32
  }
  func.func @transform_4(%arg0: i32) -> (i32, i32) {
    %c0_i32 = arith.constant 0 : i32
    %c0_i32_0 = arith.constant 0 : i32
    %c0_i32_1 = arith.constant 0 : i32
    return %c0_i32, %c0_i32_0 : i32, i32
  }
}

</mosaic_0001>

<llo_original>
// kernel: pint_forward.7
$region0: #{pint_forward.7}
  #allocation0 [shape = 'u32[]', space=smem, size = 0x4, offset = 0x4, fixed_abs, tag = 'smem constant byte address 0x4 - core index']
  #allocation1 [shape = 'u32[144,128]{1,0:T(1,128)}', space=vmem, size = 0x12000, scoped, tag = 'internal scratch']
  %s0 = inlined_call_operand.vmem [shape: bf16[512,128], index: 0, kind: input, shape index: {}]
  %s1 = inlined_call_operand.vmem [shape: bf16[128,128], index: 1, kind: input, shape index: {}]
  %s2 = inlined_call_operand.vmem [shape: f32[1,128], index: 2, kind: input, shape index: {}]
  %s3 = inlined_call_operand.vmem [shape: bf16[512,128], index: 3, kind: output, shape index: {}]
  %s4 = sld [smem:[#allocation0]]
  $region22: #{pint_forward.7} parent=0
    _
  %s6 = ssub.s32 1, %s4
  %s7 = scalar_select 0, %s6, %s4
  // Predicated region
  $region2: #{pint_forward.7} parent=0 // pred_check
    _
  $region3: #{pint_forward.7} parent=0 // pred_check_branch
    %9 = sbr.rel (0) target = $region5
  $region4: #{pint_forward.7} parent=0 // pred_region
    _
  $region5: #{pint_forward.7} parent=0 // pred_fallthru
    _
  // Predicated region
  $region6: #{pint_forward.7} parent=0 // pred_check
    _
  $region7: #{pint_forward.7} parent=0 // pred_check_branch
    %11 = sbr.rel (0) target = $region9
  $region8: #{pint_forward.7} parent=0 // pred_region
    _
  $region9: #{pint_forward.7} parent=0 // pred_fallthru
    _
  // Predicated region
  $region10: #{pint_forward.7} parent=0 // pred_check
    _
  $region11: #{pint_forward.7} parent=0 // pred_check_branch
    %13 = sbr.rel (0) target = $region13
  $region12: #{pint_forward.7} parent=0 // pred_region
    _
  $region13: #{pint_forward.7} parent=0 // pred_fallthru
    _
  %v15 = vld [vmem:[%s0] sm:$0xf]
  %v16 = vld [vmem:[%s0 + $0x4] sm:$0xf]
  %v17 = vld [vmem:[%s0 + $0x8] sm:$0xf]
  %v18 = vld [vmem:[%s0 + $0xc] sm:$0xf]
  %v19 = vld [vmem:[%s0 + $0x10] sm:$0xf]
  %v20 = vld [vmem:[%s0 + $0x14] sm:$0xf]
  %v21 = vld [vmem:[%s0 + $0x18] sm:$0xf]
  %v22 = vld [vmem:[%s0 + $0x1c] sm:$0xf]
  %v23 = vld [vmem:[%s0 + $0x20] sm:$0xf]
  %v24 = vld [vmem:[%s0 + $0x24] sm:$0xf]
  %v25 = vld [vmem:[%s0 + $0x28] sm:$0xf]
  %v26 = vld [vmem:[%s0 + $0x2c] sm:$0xf]
  %v27 = vld [vmem:[%s0 + $0x30] sm:$0xf]
  %v28 = vld [vmem:[%s0 + $0x34] sm:$0xf]
  %v29 = vld [vmem:[%s0 + $0x38] sm:$0xf]
  %v30 = vld [vmem:[%s0 + $0x3c] sm:$0xf]
  %v31 = vld [vmem:[%s0 + $0x40] sm:$0xf]
  %v32 = vld [vmem:[%s0 + $0x44] sm:$0xf]
  %v33 = vld [vmem:[%s0 + $0x48] sm:$0xf]
  %v34 = vld [vmem:[%s0 + $0x4c] sm:$0xf]
  %v35 = vld [vmem:[%s0 + $0x50] sm:$0xf]
  %v36 = vld [vmem:[%s0 + $0x54] sm:$0xf]
  %v37 = vld [vmem:[%s0 + $0x58] sm:$0xf]
  %v38 = vld [vmem:[%s0 + $0x5c] sm:$0xf]
  %v39 = vld [vmem:[%s0 + $0x60] sm:$0xf]
  %v40 = vld [vmem:[%s0 + $0x64] sm:$0xf]
  %v41 = vld [vmem:[%s0 + $0x68] sm:$0xf]
  %v42 = vld [vmem:[%s0 + $0x6c] sm:$0xf]
  %v43 = vld [vmem:[%s0 + $0x70] sm:$0xf]
  %v44 = vld [vmem:[%s0 + $0x74] sm:$0xf]
  %v45 = vld [vmem:[%s0 + $0x78] sm:$0xf]
  %v46 = vld [vmem:[%s0 + $0x7c] sm:$0xf]
  %v47 = vld [vmem:[%s0 + $0x80] sm:$0xf]
  %v48 = vld [vmem:[%s0 + $0x84] sm:$0xf]
  %v49 = vld [vmem:[%s0 + $0x88] sm:$0xf]
  %v50 = vld [vmem:[%s0 + $0x8c] sm:$0xf]
  %v51 = vld [vmem:[%s0 + $0x90] sm:$0xf]
  %v52 = vld [vmem:[%s0 + $0x94] sm:$0xf]
  %v53 = vld [vmem:[%s0 + $0x98] sm:$0xf]
  %v54 = vld [vmem:[%s0 + $0x9c] sm:$0xf]
  %v55 = vld [vmem:[%s0 + $0xa0] sm:$0xf]
  %v56 = vld [vmem:[%s0 + $0xa4] sm:$0xf]
  %v57 = vld [vmem:[%s0 + $0xa8] sm:$0xf]
  %v58 = vld [vmem:[%s0 + $0xac] sm:$0xf]
  %v59 = vld [vmem:[%s0 + $0xb0] sm:$0xf]
  %v60 = vld [vmem:[%s0 + $0xb4] sm:$0xf]
  %v61 = vld [vmem:[%s0 + $0xb8] sm:$0xf]
  %v62 = vld [vmem:[%s0 + $0xbc] sm:$0xf]
  %v63 = vld [vmem:[%s0 + $0xc0] sm:$0xf]
  %v64 = vld [vmem:[%s0 + $0xc4] sm:$0xf]
  %v65 = vld [vmem:[%s0 + $0xc8] sm:$0xf]
  %v66 = vld [vmem:[%s0 + $0xcc] sm:$0xf]
  %v67 = vld [vmem:[%s0 + $0xd0] sm:$0xf]
  %v68 = vld [vmem:[%s0 + $0xd4] sm:$0xf]
  %v69 = vld [vmem:[%s0 + $0xd8] sm:$0xf]
  %v70 = vld [vmem:[%s0 + $0xdc] sm:$0xf]
  %v71 = vld [vmem:[%s0 + $0xe0] sm:$0xf]
  %v72 = vld [vmem:[%s0 + $0xe4] sm:$0xf]
  %v73 = vld [vmem:[%s0 + $0xe8] sm:$0xf]
  %v74 = vld [vmem:[%s0 + $0xec] sm:$0xf]
  %v75 = vld [vmem:[%s0 + $0xf0] sm:$0xf]
  %v76 = vld [vmem:[%s0 + $0xf4] sm:$0xf]
  %v77 = vld [vmem:[%s0 + $0xf8] sm:$0xf]
  %v78 = vld [vmem:[%s0 + $0xfc] sm:$0xf]
  %v79 = vld [vmem:[%s1] sm:$0xf]
  %v80 = vld [vmem:[%s1 + $0x4] sm:$0xf]
  %v81 = vld [vmem:[%s1 + $0x8] sm:$0xf]
  %v82 = vld [vmem:[%s1 + $0xc] sm:$0xf]
  %v83 = vld [vmem:[%s1 + $0x10] sm:$0xf]
  %v84 = vld [vmem:[%s1 + $0x14] sm:$0xf]
  %v85 = vld [vmem:[%s1 + $0x18] sm:$0xf]
  %v86 = vld [vmem:[%s1 + $0x1c] sm:$0xf]
  %v87 = vld [vmem:[%s1 + $0x20] sm:$0xf]
  %v88 = vld [vmem:[%s1 + $0x24] sm:$0xf]
  %v89 = vld [vmem:[%s1 + $0x28] sm:$0xf]
  %v90 = vld [vmem:[%s1 + $0x2c] sm:$0xf]
  %v91 = vld [vmem:[%s1 + $0x30] sm:$0xf]
  %v92 = vld [vmem:[%s1 + $0x34] sm:$0xf]
  %v93 = vld [vmem:[%s1 + $0x38] sm:$0xf]
  %v94 = vld [vmem:[%s1 + $0x3c] sm:$0xf]
  %v95 = vld [vmem:[%s2] sm:$0x1]
  %v97 = vlaneseq
  %v98 = vshrl.u32 %v97, 7
  %v99 = vsub.s32 0, %v98
  %v100 = vrot.slane %v95, %v99
  %v166 = vunpack.c.l.b16 %v15
  %v167 = vunpack.c.l.b16 %v16
  %v168 = vunpack.c.l.b16 %v17
  %v169 = vunpack.c.l.b16 %v18
  %v170 = vunpack.c.l.b16 %v19
  %v171 = vunpack.c.l.b16 %v20
  %v172 = vunpack.c.l.b16 %v21
  %v173 = vunpack.c.l.b16 %v22
  %v174 = vunpack.c.l.b16 %v23
  %v175 = vunpack.c.l.b16 %v24
  %v176 = vunpack.c.l.b16 %v25
  %v177 = vunpack.c.l.b16 %v26
  %v178 = vunpack.c.l.b16 %v27
  %v179 = vunpack.c.l.b16 %v28
  %v180 = vunpack.c.l.b16 %v29
  %v181 = vunpack.c.l.b16 %v30
  %v182 = vunpack.c.l.b16 %v31
  %v183 = vunpack.c.l.b16 %v32
  %v184 = vunpack.c.l.b16 %v33
  %v185 = vunpack.c.l.b16 %v34
  %v186 = vunpack.c.l.b16 %v35
  %v187 = vunpack.c.l.b16 %v36
  %v188 = vunpack.c.l.b16 %v37
  %v189 = vunpack.c.l.b16 %v38
  %v190 = vunpack.c.l.b16 %v39
  %v191 = vunpack.c.l.b16 %v40
  %v192 = vunpack.c.l.b16 %v41
  %v193 = vunpack.c.l.b16 %v42
  %v194 = vunpack.c.l.b16 %v43
  %v195 = vunpack.c.l.b16 %v44
  %v196 = vunpack.c.l.b16 %v45
  %v197 = vunpack.c.l.b16 %v46
  %v198 = vunpack.c.l.b16 %v47
  %v199 = vunpack.c.l.b16 %v48
  %v200 = vunpack.c.l.b16 %v49
  %v201 = vunpack.c.l.b16 %v50
  %v202 = vunpack.c.l.b16 %v51
  %v203 = vunpack.c.l.b16 %v52
  %v204 = vunpack.c.l.b16 %v53
  %v205 = vunpack.c.l.b16 %v54
  %v206 = vunpack.c.l.b16 %v55
  %v207 = vunpack.c.l.b16 %v56
  %v208 = vunpack.c.l.b16 %v57
  %v209 = vunpack.c.l.b16 %v58
  %v210 = vunpack.c.l.b16 %v59
  %v211 = vunpack.c.l.b16 %v60
  %v212 = vunpack.c.l.b16 %v61
  %v213 = vunpack.c.l.b16 %v62
  %v214 = vunpack.c.l.b16 %v63
  %v215 = vunpack.c.l.b16 %v64
  %v216 = vunpack.c.l.b16 %v65
  %v217 = vunpack.c.l.b16 %v66
  %v218 = vunpack.c.l.b16 %v67
  %v219 = vunpack.c.l.b16 %v68
  %v220 = vunpack.c.l.b16 %v69
  %v221 = vunpack.c.l.b16 %v70
  %v222 = vunpack.c.l.b16 %v71
  %v223 = vunpack.c.l.b16 %v72
  %v224 = vunpack.c.l.b16 %v73
  %v225 = vunpack.c.l.b16 %v74
  %v226 = vunpack.c.l.b16 %v75
  %v227 = vunpack.c.l.b16 %v76
  %v228 = vunpack.c.l.b16 %v77
  %v229 = vunpack.c.l.b16 %v78
  %v230 = vpack.c.b16 %v167, %v166
  %v231 = vpack.c.b16 %v169, %v168
  %v232 = vpack.c.b16 %v171, %v170
  %v233 = vpack.c.b16 %v173, %v172
  %v234 = vpack.c.b16 %v175, %v174
  %v235 = vpack.c.b16 %v177, %v176
  %v236 = vpack.c.b16 %v179, %v178
  %v237 = vpack.c.b16 %v181, %v180
  %v238 = vpack.c.b16 %v183, %v182
  %v239 = vpack.c.b16 %v185, %v184
  %v240 = vpack.c.b16 %v187, %v186
  %v241 = vpack.c.b16 %v189, %v188
  %v242 = vpack.c.b16 %v191, %v190
  %v243 = vpack.c.b16 %v193, %v192
  %v244 = vpack.c.b16 %v195, %v194
  %v245 = vpack.c.b16 %v197, %v196
  %v246 = vpack.c.b16 %v199, %v198
  %v247 = vpack.c.b16 %v201, %v200
  %v248 = vpack.c.b16 %v203, %v202
  %v249 = vpack.c.b16 %v205, %v204
  %v250 = vpack.c.b16 %v207, %v206
  %v251 = vpack.c.b16 %v209, %v208
  %v252 = vpack.c.b16 %v211, %v210
  %v253 = vpack.c.b16 %v213, %v212
  %v254 = vpack.c.b16 %v215, %v214
  %v255 = vpack.c.b16 %v217, %v216
  %v256 = vpack.c.b16 %v219, %v218
  %v257 = vpack.c.b16 %v221, %v220
  %v258 = vpack.c.b16 %v223, %v222
  %v259 = vpack.c.b16 %v225, %v224
  %v260 = vpack.c.b16 %v227, %v226
  %v261 = vpack.c.b16 %v229, %v228
  %v310 = vunpack.c.l.b16 %v79
  %v311 = vunpack.c.l.b16 %v80
  %v312 = vunpack.c.l.b16 %v81
  %v313 = vunpack.c.l.b16 %v82
  %v314 = vunpack.c.l.b16 %v83
  %v315 = vunpack.c.l.b16 %v84
  %v316 = vunpack.c.l.b16 %v85
  %v317 = vunpack.c.l.b16 %v86
  %v318 = vunpack.c.l.b16 %v87
  %v319 = vunpack.c.l.b16 %v88
  %v320 = vunpack.c.l.b16 %v89
  %v321 = vunpack.c.l.b16 %v90
  %v322 = vunpack.c.l.b16 %v91
  %v323 = vunpack.c.l.b16 %v92
  %v324 = vunpack.c.l.b16 %v93
  %v325 = vunpack.c.l.b16 %v94
  %v326 = vpack.c.b16 %v311, %v310
  %v327 = vpack.c.b16 %v313, %v312
  %v328 = vpack.c.b16 %v315, %v314
  %v329 = vpack.c.b16 %v317, %v316
  %v330 = vpack.c.b16 %v319, %v318
  %v331 = vpack.c.b16 %v321, %v320
  %v332 = vpack.c.b16 %v323, %v322
  %v333 = vpack.c.b16 %v325, %v324
  %342 = vmatprep.subr.bf16.mxu0 0
  %343 = vmatpush1.bf16.msra.mxu0 %v326
  %344 = vmatprep.subr.bf16.mxu0 0
  %345 = vmatpush1.bf16.msra.mxu0 %v327
  %346 = vmatprep.subr.bf16.mxu0 0
  %347 = vmatpush1.bf16.msra.mxu0 %v328
  %348 = vmatprep.subr.bf16.mxu0 0
  %349 = vmatpush1.bf16.msra.mxu0 %v329
  %350 = vmatprep.subr.bf16.mxu0 0
  %351 = vmatpush1.bf16.msra.mxu0 %v330
  %352 = vmatprep.subr.bf16.mxu0 0
  %353 = vmatpush1.bf16.msra.mxu0 %v331
  %354 = vmatprep.subr.bf16.mxu0 0
  %355 = vmatpush1.bf16.msra.mxu0 %v332
  %356 = vmatprep.subr.bf16.mxu0 0
  %357 = vmatpush1.bf16.msra.mxu0 %v333
  %358 = vmatprep.subr.bf16.mxu0 0
  %359 = vmatpush1.bf16.msra.mxu0 0
  %360 = vmatprep.subr.bf16.mxu0 0
  %361 = vmatpush1.bf16.msra.mxu0 0
  %362 = vmatprep.subr.bf16.mxu0 0
  %363 = vmatpush1.bf16.msra.mxu0 0
  %364 = vmatprep.subr.bf16.mxu0 0
  %365 = vmatpush1.bf16.msra.mxu0 0
  %366 = vmatprep.subr.bf16.mxu0 0
  %367 = vmatpush1.bf16.msra.mxu0 0
  %368 = vmatprep.subr.bf16.mxu0 0
  %369 = vmatpush1.bf16.msra.mxu0 0
  %370 = vmatprep.subr.bf16.mxu0 0
  %371 = vmatpush1.bf16.msra.mxu0 0
  %372 = vmatprep.subr.bf16.mxu0 0
  %373 = vmatpush1.bf16.msra.mxu0 0
  %374 = vmatprep.mubr.bf16.mxu0 0
  %375 = vmatmul.mubr.bf16.gmra.mrb[0].mxu0 %v230
  %v376 = vpop.f32.mrb[0].mxu0
  %v377 = vadd.f32 %v100, %v376
  %v378 = vpop.f32.mrb[0].mxu0
  %v379 = vpop.f32.mrb[0].mxu0
  %v380 = vadd.f32 %v100, %v379
  %v381 = vpop.f32.mrb[0].mxu0
  %382 = vmatprep.mubr.bf16.mxu0 0
  %383 = vmatmul.mubr.bf16.gmra.mrb[0].mxu0 %v231
  %v384 = vpop.f32.mrb[0].mxu0
  %v385 = vadd.f32 %v100, %v384
  %v386 = vpop.f32.mrb[0].mxu0
  %v387 = vpop.f32.mrb[0].mxu0
  %v388 = vadd.f32 %v100, %v387
  %v389 = vpop.f32.mrb[0].mxu0
  %390 = vmatprep.mubr.bf16.mxu0 0
  %391 = vmatmul.mubr.bf16.gmra.mrb[0].mxu0 %v232
  %v392 = vpop.f32.mrb[0].mxu0
  %v393 = vadd.f32 %v100, %v392
  %v394 = vpop.f32.mrb[0].mxu0
  %v395 = vpop.f32.mrb[0].mxu0
  %v396 = vadd.f32 %v100, %v395
  %v397 = vpop.f32.mrb[0].mxu0
  %398 = vmatprep.mubr.bf16.mxu0 0
  %399 = vmatmul.mubr.bf16.gmra.mrb[0].mxu0 %v233
  %v400 = vpop.f32.mrb[0].mxu0
  %v401 = vadd.f32 %v100, %v400
  %v402 = vpop.f32.mrb[0].mxu0
  %v403 = vpop.f32.mrb[0].mxu0
  %v404 = vadd.f32 %v100, %v403
  %v405 = vpop.f32.mrb[0].mxu0
  %406 = vmatprep.mubr.bf16.mxu0 0
  %407 = vmatmul.mubr.bf16.gmra.mrb[0].mxu0 %v234
  %v408 = vpop.f32.mrb[0].mxu0
  %v409 = vadd.f32 %v100, %v408
  %v410 = vpop.f32.mrb[0].mxu0
  %v411 = vpop.f32.mrb[0].mxu0
  %v412 = vadd.f32 %v100, %v411
  %v413 = vpop.f32.mrb[0].mxu0
  %414 = vmatprep.mubr.bf16.mxu0 0
  %415 = vmatmul.mubr.bf16.gmra.mrb[0].mxu0 %v235
  %v416 = vpop.f32.mrb[0].mxu0
  %v417 = vadd.f32 %v100, %v416
  %v418 = vpop.f32.mrb[0].mxu0
  %v419 = vpop.f32.mrb[0].mxu0
  %v420 = vadd.f32 %v100, %v419
  %v421 = vpop.f32.mrb[0].mxu0
  %422 = vmatprep.mubr.bf16.mxu0 0
  %423 = vmatmul.mubr.bf16.gmra.mrb[0].mxu0 %v236
  %v424 = vpop.f32.mrb[0].mxu0
  %v425 = vadd.f32 %v100, %v424
  %v426 = vpop.f32.mrb[0].mxu0
  %v427 = vpop.f32.mrb[0].mxu0
  %v428 = vadd.f32 %v100, %v427
  %v429 = vpop.f32.mrb[0].mxu0
  %430 = vmatprep.mubr.bf16.mxu0 0
  %431 = vmatmul.mubr.bf16.gmra.mrb[0].mxu0 %v237
  %v432 = vpop.f32.mrb[0].mxu0
  %v433 = vadd.f32 %v100, %v432
  %v434 = vpop.f32.mrb[0].mxu0
  %v435 = vpop.f32.mrb[0].mxu0
  %v436 = vadd.f32 %v100, %v435
  %v437 = vpop.f32.mrb[0].mxu0
  %438 = vmatprep.mubr.bf16.mxu0 0
  %439 = vmatmul.mubr.bf16.gmra.mrb[0].mxu0 %v238
  %v440 = vpop.f32.mrb[0].mxu0
  %v441 = vadd.f32 %v100, %v440
  %v442 = vpop.f32.mrb[0].mxu0
  %v443 = vpop.f32.mrb[0].mxu0
  %v444 = vadd.f32 %v100, %v443
  %v445 = vpop.f32.mrb[0].mxu0
  %446 = vmatprep.mubr.bf16.mxu0 0
  %447 = vmatmul.mubr.bf16.gmra.mrb[0].mxu0 %v239
  %v448 = vpop.f32.mrb[0].mxu0
  %v449 = vadd.f32 %v100, %v448
  %v450 = vpop.f32.mrb[0].mxu0
  %v451 = vpop.f32.mrb[0].mxu0
  %v452 = vadd.f32 %v100, %v451
  %v453 = vpop.f32.mrb[0].mxu0
  %454 = vmatprep.mubr.bf16.mxu0 0
  %455 = vmatmul.mubr.bf16.gmra.mrb[0].mxu0 %v240
  %v456 = vpop.f32.mrb[0].mxu0
  %v457 = vadd.f32 %v100, %v456
  %v458 = vpop.f32.mrb[0].mxu0
  %v459 = vpop.f32.mrb[0].mxu0
  %v460 = vadd.f32 %v100, %v459
  %v461 = vpop.f32.mrb[0].mxu0
  %462 = vmatprep.mubr.bf16.mxu0 0
  %463 = vmatmul.mubr.bf16.gmra.mrb[0].mxu0 %v241
  %v464 = vpop.f32.mrb[0].mxu0
  %v465 = vadd.f32 %v100, %v464
  %v466 = vpop.f32.mrb[0].mxu0
  %v467 = vpop.f32.mrb[0].mxu0
  %v468 = vadd.f32 %v100, %v467
  %v469 = vpop.f32.mrb[0].mxu0
  %470 = vmatprep.mubr.bf16.mxu0 0
  %471 = vmatmul.mubr.bf16.gmra.mrb[0].mxu0 %v242
  %v472 = vpop.f32.mrb[0].mxu0
  %v473 = vadd.f32 %v100, %v472
  %v474 = vpop.f32.mrb[0].mxu0
  %v475 = vpop.f32.mrb[0].mxu0
  %v476 = vadd.f32 %v100, %v475
  %v477 = vpop.f32.mrb[0].mxu0
  %478 = vmatprep.mubr.bf16.mxu0 0
  %479 = vmatmul.mubr.bf16.gmra.mrb[0].mxu0 %v243
  %v480 = vpop.f32.mrb[0].mxu0
  %v481 = vadd.f32 %v100, %v480
  %v482 = vpop.f32.mrb[0].mxu0
  %v483 = vpop.f32.mrb[0].mxu0
  %v484 = vadd.f32 %v100, %v483
  %v485 = vpop.f32.mrb[0].mxu0
  %486 = vmatprep.mubr.bf16.mxu0 0
  %487 = vmatmul.mubr.bf16.gmra.mrb[0].mxu0 %v244
  %v488 = vpop.f32.mrb[0].mxu0
  %v489 = vadd.f32 %v100, %v488
  %v490 = vpop.f32.mrb[0].mxu0
  %v491 = vpop.f32.mrb[0].mxu0
  %v492 = vadd.f32 %v100, %v491
  %v493 = vpop.f32.mrb[0].mxu0
  %494 = vmatprep.mubr.bf16.mxu0 0
  %495 = vmatmul.mubr.bf16.gmra.mrb[0].mxu0 %v245
  %v496 = vpop.f32.mrb[0].mxu0
  %v497 = vadd.f32 %v100, %v496
  %v498 = vpop.f32.mrb[0].mxu0
  %v499 = vpop.f32.mrb[0].mxu0
  %v500 = vadd.f32 %v100, %v499
  %v501 = vpop.f32.mrb[0].mxu0
  %502 = vmatprep.mubr.bf16.mxu0 0
  %503 = vmatmul.mubr.bf16.gmra.mrb[0].mxu0 %v246
  %v504 = vpop.f32.mrb[0].mxu0
  %v505 = vadd.f32 %v100, %v504
  %v506 = vpop.f32.mrb[0].mxu0
  %v507 = vpop.f32.mrb[0].mxu0
  %v508 = vadd.f32 %v100, %v507
  %v509 = vpop.f32.mrb[0].mxu0
  %510 = vmatprep.mubr.bf16.mxu0 0
  %511 = vmatmul.mubr.bf16.gmra.mrb[0].mxu0 %v247
  %v512 = vpop.f32.mrb[0].mxu0
  %v513 = vadd.f32 %v100, %v512
  %v514 = vpop.f32.mrb[0].mxu0
  %v515 = vpop.f32.mrb[0].mxu0
  %v516 = vadd.f32 %v100, %v515
  %v517 = vpop.f32.mrb[0].mxu0
  %518 = vmatprep.mubr.bf16.mxu0 0
  %519 = vmatmul.mubr.bf16.gmra.mrb[0].mxu0 %v248
  %v520 = vpop.f32.mrb[0].mxu0
  %v521 = vadd.f32 %v100, %v520
  %v522 = vpop.f32.mrb[0].mxu0
  %v523 = vpop.f32.mrb[0].mxu0
  %v524 = vadd.f32 %v100, %v523
  %v525 = vpop.f32.mrb[0].mxu0
  %526 = vmatprep.mubr.bf16.mxu0 0
  %527 = vmatmul.mubr.bf16.gmra.mrb[0].mxu0 %v249
  %v528 = vpop.f32.mrb[0].mxu0
  %v529 = vadd.f32 %v100, %v528
  %v530 = vpop.f32.mrb[0].mxu0
  %v531 = vpop.f32.mrb[0].mxu0
  %v532 = vadd.f32 %v100, %v531
  %v533 = vpop.f32.mrb[0].mxu0
  %534 = vmatprep.mubr.bf16.mxu0 0
  %535 = vmatmul.mubr.bf16.gmra.mrb[0].mxu0 %v250
  %v536 = vpop.f32.mrb[0].mxu0
  %v537 = vadd.f32 %v100, %v536
  %v538 = vpop.f32.mrb[0].mxu0
  %v539 = vpop.f32.mrb[0].mxu0
  %v540 = vadd.f32 %v100, %v539
  %v541 = vpop.f32.mrb[0].mxu0
  %542 = vmatprep.mubr.bf16.mxu0 0
  %543 = vmatmul.mubr.bf16.gmra.mrb[0].mxu0 %v251
  %v544 = vpop.f32.mrb[0].mxu0
  %v545 = vadd.f32 %v100, %v544
  %v546 = vpop.f32.mrb[0].mxu0
  %v547 = vpop.f32.mrb[0].mxu0
  %v548 = vadd.f32 %v100, %v547
  %v549 = vpop.f32.mrb[0].mxu0
  %550 = vmatprep.mubr.bf16.mxu0 0
  %551 = vmatmul.mubr.bf16.gmra.mrb[0].mxu0 %v252
  %v552 = vpop.f32.mrb[0].mxu0
  %v553 = vadd.f32 %v100, %v552
  %v554 = vpop.f32.mrb[0].mxu0
  %v555 = vpop.f32.mrb[0].mxu0
  %v556 = vadd.f32 %v100, %v555
  %v557 = vpop.f32.mrb[0].mxu0
  %558 = vmatprep.mubr.bf16.mxu0 0
  %559 = vmatmul.mubr.bf16.gmra.mrb[0].mxu0 %v253
  %v560 = vpop.f32.mrb[0].mxu0
  %v561 = vadd.f32 %v100, %v560
  %v562 = vpop.f32.mrb[0].mxu0
  %v563 = vpop.f32.mrb[0].mxu0
  %v564 = vadd.f32 %v100, %v563
  %v565 = vpop.f32.mrb[0].mxu0
  %566 = vmatprep.mubr.bf16.mxu0 0
  %567 = vmatmul.mubr.bf16.gmra.mrb[0].mxu0 %v254
  %v568 = vpop.f32.mrb[0].mxu0
  %v569 = vadd.f32 %v100, %v568
  %v570 = vpop.f32.mrb[0].mxu0
  %v571 = vpop.f32.mrb[0].mxu0
  %v572 = vadd.f32 %v100, %v571
  %v573 = vpop.f32.mrb[0].mxu0
  %574 = vmatprep.mubr.bf16.mxu0 0
  %575 = vmatmul.mubr.bf16.gmra.mrb[0].mxu0 %v255
  %v576 = vpop.f32.mrb[0].mxu0
  %v577 = vadd.f32 %v100, %v576
  %v578 = vpop.f32.mrb[0].mxu0
  %v579 = vpop.f32.mrb[0].mxu0
  %v580 = vadd.f32 %v100, %v579
  %v581 = vpop.f32.mrb[0].mxu0
  %582 = vmatprep.mubr.bf16.mxu0 0
  %583 = vmatmul.mubr.bf16.gmra.mrb[0].mxu0 %v256
  %v584 = vpop.f32.mrb[0].mxu0
  %v585 = vadd.f32 %v100, %v584
  %v586 = vpop.f32.mrb[0].mxu0
  %v587 = vpop.f32.mrb[0].mxu0
  %v588 = vadd.f32 %v100, %v587
  %v589 = vpop.f32.mrb[0].mxu0
  %590 = vmatprep.mubr.bf16.mxu0 0
  %591 = vmatmul.mubr.bf16.gmra.mrb[0].mxu0 %v257
  %v592 = vpop.f32.mrb[0].mxu0
  %v593 = vadd.f32 %v100, %v592
  %v594 = vpop.f32.mrb[0].mxu0
  %v595 = vpop.f32.mrb[0].mxu0
  %v596 = vadd.f32 %v100, %v595
  %v597 = vpop.f32.mrb[0].mxu0
  %598 = vmatprep.mubr.bf16.mxu0 0
  %599 = vmatmul.mubr.bf16.gmra.mrb[0].mxu0 %v258
  %v600 = vpop.f32.mrb[0].mxu0
  %v601 = vadd.f32 %v100, %v600
  %v602 = vpop.f32.mrb[0].mxu0
  %v603 = vpop.f32.mrb[0].mxu0
  %v604 = vadd.f32 %v100, %v603
  %v605 = vpop.f32.mrb[0].mxu0
  %606 = vmatprep.mubr.bf16.mxu0 0
  %607 = vmatmul.mubr.bf16.gmra.mrb[0].mxu0 %v259
  %v608 = vpop.f32.mrb[0].mxu0
  %v609 = vadd.f32 %v100, %v608
  %v610 = vpop.f32.mrb[0].mxu0
  %v611 = vpop.f32.mrb[0].mxu0
  %v612 = vadd.f32 %v100, %v611
  %v613 = vpop.f32.mrb[0].mxu0
  %614 = vmatprep.mubr.bf16.mxu0 0
  %615 = vmatmul.mubr.bf16.gmra.mrb[0].mxu0 %v260
  %v616 = vpop.f32.mrb[0].mxu0
  %v617 = vadd.f32 %v100, %v616
  %v618 = vpop.f32.mrb[0].mxu0
  %v619 = vpop.f32.mrb[0].mxu0
  %v620 = vadd.f32 %v100, %v619
  %v621 = vpop.f32.mrb[0].mxu0
  %622 = vmatprep.mubr.bf16.mxu0 0
  %623 = vmatmul.mubr.bf16.gmra.mrb[0].mxu0 %v261
  %v624 = vpop.f32.mrb[0].mxu0
  %v625 = vadd.f32 %v100, %v624
  %v626 = vpop.f32.mrb[0].mxu0
  %v627 = vpop.f32.mrb[0].mxu0
  %v628 = vadd.f32 %v100, %v627
  %v629 = vpop.f32.mrb[0].mxu0
  %630 = vdwg.mxu0
  %v631 = vmax.f32 %v377, 0.0
  %v632 = vmax.f32 %v380, 0.0
  %v633 = vmax.f32 %v385, 0.0
  %v634 = vmax.f32 %v388, 0.0
  %v635 = vmax.f32 %v393, 0.0
  %v636 = vmax.f32 %v396, 0.0
  %v637 = vmax.f32 %v401, 0.0
  %v638 = vmax.f32 %v404, 0.0
  %v639 = vmax.f32 %v409, 0.0
  %v640 = vmax.f32 %v412, 0.0
  %v641 = vmax.f32 %v417, 0.0
  %v642 = vmax.f32 %v420, 0.0
  %v643 = vmax.f32 %v425, 0.0
  %v644 = vmax.f32 %v428, 0.0
  %v645 = vmax.f32 %v433, 0.0
  %v646 = vmax.f32 %v436, 0.0
  %v647 = vmax.f32 %v441, 0.0
  %v648 = vmax.f32 %v444, 0.0
  %v649 = vmax.f32 %v449, 0.0
  %v650 = vmax.f32 %v452, 0.0
  %v651 = vmax.f32 %v457, 0.0
  %v652 = vmax.f32 %v460, 0.0
  %v653 = vmax.f32 %v465, 0.0
  %v654 = vmax.f32 %v468, 0.0
  %v655 = vmax.f32 %v473, 0.0
  %v656 = vmax.f32 %v476, 0.0
  %v657 = vmax.f32 %v481, 0.0
  %v658 = vmax.f32 %v484, 0.0
  %v659 = vmax.f32 %v489, 0.0
  %v660 = vmax.f32 %v492, 0.0
  %v661 = vmax.f32 %v497, 0.0
  %v662 = vmax.f32 %v500, 0.0
  %v663 = vmax.f32 %v505, 0.0
  %v664 = vmax.f32 %v508, 0.0
  %v665 = vmax.f32 %v513, 0.0
  %v666 = vmax.f32 %v516, 0.0
  %v667 = vmax.f32 %v521, 0.0
  %v668 = vmax.f32 %v524, 0.0
  %v669 = vmax.f32 %v529, 0.0
  %v670 = vmax.f32 %v532, 0.0
  %v671 = vmax.f32 %v537, 0.0
  %v672 = vmax.f32 %v540, 0.0
  %v673 = vmax.f32 %v545, 0.0
  %v674 = vmax.f32 %v548, 0.0
  %v675 = vmax.f32 %v553, 0.0
  %v676 = vmax.f32 %v556, 0.0
  %v677 = vmax.f32 %v561, 0.0
  %v678 = vmax.f32 %v564, 0.0
  %v679 = vmax.f32 %v569, 0.0
  %v680 = vmax.f32 %v572, 0.0
  %v681 = vmax.f32 %v577, 0.0
  %v682 = vmax.f32 %v580, 0.0
  %v683 = vmax.f32 %v585, 0.0
  %v684 = vmax.f32 %v588, 0.0
  %v685 = vmax.f32 %v593, 0.0
  %v686 = vmax.f32 %v596, 0.0
  %v687 = vmax.f32 %v601, 0.0
  %v688 = vmax.f32 %v604, 0.0
  %v689 = vmax.f32 %v609, 0.0
  %v690 = vmax.f32 %v612, 0.0
  %v691 = vmax.f32 %v617, 0.0
  %v692 = vmax.f32 %v620, 0.0
  %v693 = vmax.f32 %v625, 0.0
  %v694 = vmax.f32 %v628, 0.0
  %v695 = vpack.c.bf16 %v632, %v631
  %v696 = vpack.c.bf16 %v634, %v633
  %v697 = vpack.c.bf16 %v636, %v635
  %v698 = vpack.c.bf16 %v638, %v637
  %v699 = vpack.c.bf16 %v640, %v639
  %v700 = vpack.c.bf16 %v642, %v641
  %v701 = vpack.c.bf16 %v644, %v643
  %v702 = vpack.c.bf16 %v646, %v645
  %v703 = vpack.c.bf16 %v648, %v647
  %v704 = vpack.c.bf16 %v650, %v649
  %v705 = vpack.c.bf16 %v652, %v651
  %v706 = vpack.c.bf16 %v654, %v653
  %v707 = vpack.c.bf16 %v656, %v655
  %v708 = vpack.c.bf16 %v658, %v657
  %v709 = vpack.c.bf16 %v660, %v659
  %v710 = vpack.c.bf16 %v662, %v661
  %v711 = vpack.c.bf16 %v664, %v663
  %v712 = vpack.c.bf16 %v666, %v665
  %v713 = vpack.c.bf16 %v668, %v667
  %v714 = vpack.c.bf16 %v670, %v669
  %v715 = vpack.c.bf16 %v672, %v671
  %v716 = vpack.c.bf16 %v674, %v673
  %v717 = vpack.c.bf16 %v676, %v675
  %v718 = vpack.c.bf16 %v678, %v677
  %v719 = vpack.c.bf16 %v680, %v679
  %v720 = vpack.c.bf16 %v682, %v681
  %v721 = vpack.c.bf16 %v684, %v683
  %v722 = vpack.c.bf16 %v686, %v685
  %v723 = vpack.c.bf16 %v688, %v687
  %v724 = vpack.c.bf16 %v690, %v689
  %v725 = vpack.c.bf16 %v692, %v691
  %v726 = vpack.c.bf16 %v694, %v693
  %v759 = vunpack.c.l.b16 %v695
  %v760 = vunpack.c.h.b16 %v695
  %v761 = vunpack.c.l.b16 %v696
  %v762 = vunpack.c.h.b16 %v696
  %v763 = vunpack.c.l.b16 %v697
  %v764 = vunpack.c.h.b16 %v697
  %v765 = vunpack.c.l.b16 %v698
  %v766 = vunpack.c.h.b16 %v698
  %v767 = vunpack.c.l.b16 %v699
  %v768 = vunpack.c.h.b16 %v699
  %v769 = vunpack.c.l.b16 %v700
  %v770 = vunpack.c.h.b16 %v700
  %v771 = vunpack.c.l.b16 %v701
  %v772 = vunpack.c.h.b16 %v701
  %v773 = vunpack.c.l.b16 %v702
  %v774 = vunpack.c.h.b16 %v702
  %v775 = vunpack.c.l.b16 %v703
  %v776 = vunpack.c.h.b16 %v703
  %v777 = vunpack.c.l.b16 %v704
  %v778 = vunpack.c.h.b16 %v704
  %v779 = vunpack.c.l.b16 %v705
  %v780 = vunpack.c.h.b16 %v705
  %v781 = vunpack.c.l.b16 %v706
  %v782 = vunpack.c.h.b16 %v706
  %v783 = vunpack.c.l.b16 %v707
  %v784 = vunpack.c.h.b16 %v707
  %v785 = vunpack.c.l.b16 %v708
  %v786 = vunpack.c.h.b16 %v708
  %v787 = vunpack.c.l.b16 %v709
  %v788 = vunpack.c.h.b16 %v709
  %v789 = vunpack.c.l.b16 %v710
  %v790 = vunpack.c.h.b16 %v710
  %v791 = vunpack.c.l.b16 %v711
  %v792 = vunpack.c.h.b16 %v711
  %v793 = vunpack.c.l.b16 %v712
  %v794 = vunpack.c.h.b16 %v712
  %v795 = vunpack.c.l.b16 %v713
  %v796 = vunpack.c.h.b16 %v713
  %v797 = vunpack.c.l.b16 %v714
  %v798 = vunpack.c.h.b16 %v714
  %v799 = vunpack.c.l.b16 %v715
  %v800 = vunpack.c.h.b16 %v715
  %v801 = vunpack.c.l.b16 %v716
  %v802 = vunpack.c.h.b16 %v716
  %v803 = vunpack.c.l.b16 %v717
  %v804 = vunpack.c.h.b16 %v717
  %v805 = vunpack.c.l.b16 %v718
  %v806 = vunpack.c.h.b16 %v718
  %v807 = vunpack.c.l.b16 %v719
  %v808 = vunpack.c.h.b16 %v719
  %v809 = vunpack.c.l.b16 %v720
  %v810 = vunpack.c.h.b16 %v720
  %v811 = vunpack.c.l.b16 %v721
  %v812 = vunpack.c.h.b16 %v721
  %v813 = vunpack.c.l.b16 %v722
  %v814 = vunpack.c.h.b16 %v722
  %v815 = vunpack.c.l.b16 %v723
  %v816 = vunpack.c.h.b16 %v723
  %v817 = vunpack.c.l.b16 %v724
  %v818 = vunpack.c.h.b16 %v724
  %v819 = vunpack.c.l.b16 %v725
  %v820 = vunpack.c.h.b16 %v725
  %v821 = vunpack.c.l.b16 %v726
  %v822 = vunpack.c.h.b16 %v726
  %v823 = vpack.c.b16 %v759, %v759
  %v824 = vpack.c.b16 %v760, %v760
  %v825 = vpack.c.b16 %v761, %v761
  %v826 = vpack.c.b16 %v762, %v762
  %v827 = vpack.c.b16 %v763, %v763
  %v828 = vpack.c.b16 %v764, %v764
  %v829 = vpack.c.b16 %v765, %v765
  %v830 = vpack.c.b16 %v766, %v766
  %v831 = vpack.c.b16 %v767, %v767
  %v832 = vpack.c.b16 %v768, %v768
  %v833 = vpack.c.b16 %v769, %v769
  %v834 = vpack.c.b16 %v770, %v770
  %v835 = vpack.c.b16 %v771, %v771
  %v836 = vpack.c.b16 %v772, %v772
  %v837 = vpack.c.b16 %v773, %v773
  %v838 = vpack.c.b16 %v774, %v774
  %v839 = vpack.c.b16 %v775, %v775
  %v840 = vpack.c.b16 %v776, %v776
  %v841 = vpack.c.b16 %v777, %v777
  %v842 = vpack.c.b16 %v778, %v778
  %v843 = vpack.c.b16 %v779, %v779
  %v844 = vpack.c.b16 %v780, %v780
  %v845 = vpack.c.b16 %v781, %v781
  %v846 = vpack.c.b16 %v782, %v782
  %v847 = vpack.c.b16 %v783, %v783
  %v848 = vpack.c.b16 %v784, %v784
  %v849 = vpack.c.b16 %v785, %v785
  %v850 = vpack.c.b16 %v786, %v786
  %v851 = vpack.c.b16 %v787, %v787
  %v852 = vpack.c.b16 %v788, %v788
  %v853 = vpack.c.b16 %v789, %v789
  %v854 = vpack.c.b16 %v790, %v790
  %v855 = vpack.c.b16 %v791, %v791
  %v856 = vpack.c.b16 %v792, %v792
  %v857 = vpack.c.b16 %v793, %v793
  %v858 = vpack.c.b16 %v794, %v794
  %v859 = vpack.c.b16 %v795, %v795
  %v860 = vpack.c.b16 %v796, %v796
  %v861 = vpack.c.b16 %v797, %v797
  %v862 = vpack.c.b16 %v798, %v798
  %v863 = vpack.c.b16 %v799, %v799
  %v864 = vpack.c.b16 %v800, %v800
  %v865 = vpack.c.b16 %v801, %v801
  %v866 = vpack.c.b16 %v802, %v802
  %v867 = vpack.c.b16 %v803, %v803
  %v868 = vpack.c.b16 %v804, %v804
  %v869 = vpack.c.b16 %v805, %v805
  %v870 = vpack.c.b16 %v806, %v806
  %v871 = vpack.c.b16 %v807, %v807
  %v872 = vpack.c.b16 %v808, %v808
  %v873 = vpack.c.b16 %v809, %v809
  %v874 = vpack.c.b16 %v810, %v810
  %v875 = vpack.c.b16 %v811, %v811
  %v876 = vpack.c.b16 %v812, %v812
  %v877 = vpack.c.b16 %v813, %v813
  %v878 = vpack.c.b16 %v814, %v814
  %v879 = vpack.c.b16 %v815, %v815
  %v880 = vpack.c.b16 %v816, %v816
  %v881 = vpack.c.b16 %v817, %v817
  %v882 = vpack.c.b16 %v818, %v818
  %v883 = vpack.c.b16 %v819, %v819
  %v884 = vpack.c.b16 %v820, %v820
  %v885 = vpack.c.b16 %v821, %v821
  %v886 = vpack.c.b16 %v822, %v822
  %951 = vst [vmem:[%s3] sm:$0xf] %v823
  %952 = vst [vmem:[%s3 + $0x4] sm:$0xf] %v824
  %953 = vst [vmem:[%s3 + $0x8] sm:$0xf] %v825
  %954 = vst [vmem:[%s3 + $0xc] sm:$0xf] %v826
  %955 = vst [vmem:[%s3 + $0x10] sm:$0xf] %v827
  %956 = vst [vmem:[%s3 + $0x14] sm:$0xf] %v828
  %957 = vst [vmem:[%s3 + $0x18] sm:$0xf] %v829
  %958 = vst [vmem:[%s3 + $0x1c] sm:$0xf] %v830
  %959 = vst [vmem:[%s3 + $0x20] sm:$0xf] %v831
  %960 = vst [vmem:[%s3 + $0x24] sm:$0xf] %v832
  %961 = vst [vmem:[%s3 + $0x28] sm:$0xf] %v833
  %962 = vst [vmem:[%s3 + $0x2c] sm:$0xf] %v834
  %963 = vst [vmem:[%s3 + $0x30] sm:$0xf] %v835
  %964 = vst [vmem:[%s3 + $0x34] sm:$0xf] %v836
  %965 = vst [vmem:[%s3 + $0x38] sm:$0xf] %v837
  %966 = vst [vmem:[%s3 + $0x3c] sm:$0xf] %v838
  %967 = vst [vmem:[%s3 + $0x40] sm:$0xf] %v839
  %968 = vst [vmem:[%s3 + $0x44] sm:$0xf] %v840
  %969 = vst [vmem:[%s3 + $0x48] sm:$0xf] %v841
  %970 = vst [vmem:[%s3 + $0x4c] sm:$0xf] %v842
  %971 = vst [vmem:[%s3 + $0x50] sm:$0xf] %v843
  %972 = vst [vmem:[%s3 + $0x54] sm:$0xf] %v844
  %973 = vst [vmem:[%s3 + $0x58] sm:$0xf] %v845
  %974 = vst [vmem:[%s3 + $0x5c] sm:$0xf] %v846
  %975 = vst [vmem:[%s3 + $0x60] sm:$0xf] %v847
  %976 = vst [vmem:[%s3 + $0x64] sm:$0xf] %v848
  %977 = vst [vmem:[%s3 + $0x68] sm:$0xf] %v849
  %978 = vst [vmem:[%s3 + $0x6c] sm:$0xf] %v850
  %979 = vst [vmem:[%s3 + $0x70] sm:$0xf] %v851
  %980 = vst [vmem:[%s3 + $0x74] sm:$0xf] %v852
  %981 = vst [vmem:[%s3 + $0x78] sm:$0xf] %v853
  %982 = vst [vmem:[%s3 + $0x7c] sm:$0xf] %v854
  %983 = vst [vmem:[%s3 + $0x80] sm:$0xf] %v855
  %984 = vst [vmem:[%s3 + $0x84] sm:$0xf] %v856
  %985 = vst [vmem:[%s3 + $0x88] sm:$0xf] %v857
  %986 = vst [vmem:[%s3 + $0x8c] sm:$0xf] %v858
  %987 = vst [vmem:[%s3 + $0x90] sm:$0xf] %v859
  %988 = vst [vmem:[%s3 + $0x94] sm:$0xf] %v860
  %989 = vst [vmem:[%s3 + $0x98] sm:$0xf] %v861
  %990 = vst [vmem:[%s3 + $0x9c] sm:$0xf] %v862
  %991 = vst [vmem:[%s3 + $0xa0] sm:$0xf] %v863
  %992 = vst [vmem:[%s3 + $0xa4] sm:$0xf] %v864
  %993 = vst [vmem:[%s3 + $0xa8] sm:$0xf] %v865
  %994 = vst [vmem:[%s3 + $0xac] sm:$0xf] %v866
  %995 = vst [vmem:[%s3 + $0xb0] sm:$0xf] %v867
  %996 = vst [vmem:[%s3 + $0xb4] sm:$0xf] %v868
  %997 = vst [vmem:[%s3 + $0xb8] sm:$0xf] %v869
  %998 = vst [vmem:[%s3 + $0xbc] sm:$0xf] %v870
  %999 = vst [vmem:[%s3 + $0xc0] sm:$0xf] %v871
  %1000 = vst [vmem:[%s3 + $0xc4] sm:$0xf] %v872
  %1001 = vst [vmem:[%s3 + $0xc8] sm:$0xf] %v873
  %1002 = vst [vmem:[%s3 + $0xcc] sm:$0xf] %v874
  %1003 = vst [vmem:[%s3 + $0xd0] sm:$0xf] %v875
  %1004 = vst [vmem:[%s3 + $0xd4] sm:$0xf] %v876
  %1005 = vst [vmem:[%s3 + $0xd8] sm:$0xf] %v877
  %1006 = vst [vmem:[%s3 + $0xdc] sm:$0xf] %v878
  %1007 = vst [vmem:[%s3 + $0xe0] sm:$0xf] %v879
  %1008 = vst [vmem:[%s3 + $0xe4] sm:$0xf] %v880
  %1009 = vst [vmem:[%s3 + $0xe8] sm:$0xf] %v881
  %1010 = vst [vmem:[%s3 + $0xec] sm:$0xf] %v882
  %1011 = vst [vmem:[%s3 + $0xf0] sm:$0xf] %v883
  %1012 = vst [vmem:[%s3 + $0xf4] sm:$0xf] %v884
  %1013 = vst [vmem:[%s3 + $0xf8] sm:$0xf] %v885
  %1014 = vst [vmem:[%s3 + $0xfc] sm:$0xf] %v886
  // Predicated region
  $region14: #{pint_forward.7} parent=0 // pred_check
    _
  $region15: #{pint_forward.7} parent=0 // pred_check_branch
    %1016 = sbr.rel (0) target = $region17
  $region16: #{pint_forward.7} parent=0 // pred_region
    _
  $region17: #{pint_forward.7} parent=0 // pred_fallthru
    _
  // Predicated region
  $region18: #{pint_forward.7} parent=0 // pred_check
    _
  $region19: #{pint_forward.7} parent=0 // pred_check_branch
    %1018 = sbr.rel (0) target = $region21
  $region20: #{pint_forward.7} parent=0 // pred_region
    _
  $region21: #{pint_forward.7} parent=0 // pred_fallthru
    _

// kernel: pint_forward.8
$region0: #{pint_forward.8}
  #allocation0 [shape = 'u32[]', space=smem, size = 0x4, offset = 0x4, fixed_abs, tag = 'smem constant byte address 0x4 - core index']
  #allocation1 [shape = 'u32[144,128]{1,0:T(1,128)}', space=vmem, size = 0x12000, scoped, tag = 'internal scratch']
  %s0 = inlined_call_operand.vmem [shape: bf16[512,256], index: 0, kind: input, shape index: {}]
  %s1 = inlined_call_operand.vmem [shape: bf16[256,128], index: 1, kind: input, shape index: {}]
  %s2 = inlined_call_operand.vmem [shape: f32[1,128], index: 2, kind: input, shape index: {}]
  %s3 = inlined_call_operand.vmem [shape: bf16[512,128], index: 3, kind: output, shape index: {}]
  %s4 = sld [smem:[#allocation0]]
  $region22: #{pint_forward.8} parent=0
    _
  %s6 = ssub.s32 1, %s4
  %s7 = scalar_select 0, %s6, %s4
  // Predicated region
  $region2: #{pint_forward.8} parent=0 // pred_check
    _
  $region3: #{pint_forward.8} parent=0 // pred_check_branch
    %9 = sbr.rel (0) target = $region5
  $region4: #{pint_forward.8} parent=0 // pred_region
    _
  $region5: #{pint_forward.8} parent=0 // pred_fallthru
    _
  // Predicated region
  $region6: #{pint_forward.8} parent=0 // pred_check
    _
  $region7: #{pint_forward.8} parent=0 // pred_check_branch
    %11 = sbr.rel (0) target = $region9
  $region8: #{pint_forward.8} parent=0 // pred_region
    _
  $region9: #{pint_forward.8} parent=0 // pred_fallthru
    _
  // Predicated region
  $region10: #{pint_forward.8} parent=0 // pred_check
    _
  $region11: #{pint_forward.8} parent=0 // pred_check_branch
    %13 = sbr.rel (0) target = $region13
  $region12: #{pint_forward.8} parent=0 // pred_region
    _
  $region13: #{pint_forward.8} parent=0 // pred_fallthru
    _
  %v15 = vld [vmem:[%s0] sm:$0xff]
  %v16 = vld [vmem:[%s0 + $0x8] sm:$0xff]
  %v17 = vld [vmem:[%s0 + $0x10] sm:$0xff]
  %v18 = vld [vmem:[%s0 + $0x18] sm:$0xff]
  %v19 = vld [vmem:[%s0 + $0x20] sm:$0xff]
  %v20 = vld [vmem:[%s0 + $0x28] sm:$0xff]
  %v21 = vld [vmem:[%s0 + $0x30] sm:$0xff]
  %v22 = vld [vmem:[%s0 + $0x38] sm:$0xff]
  %v23 = vld [vmem:[%s0 + $0x40] sm:$0xff]
  %v24 = vld [vmem:[%s0 + $0x48] sm:$0xff]
  %v25 = vld [vmem:[%s0 + $0x50] sm:$0xff]
  %v26 = vld [vmem:[%s0 + $0x58] sm:$0xff]
  %v27 = vld [vmem:[%s0 + $0x60] sm:$0xff]
  %v28 = vld [vmem:[%s0 + $0x68] sm:$0xff]
  %v29 = vld [vmem:[%s0 + $0x70] sm:$0xff]
  %v30 = vld [vmem:[%s0 + $0x78] sm:$0xff]
  %v31 = vld [vmem:[%s0 + $0x80] sm:$0xff]
  %v32 = vld [vmem:[%s0 + $0x88] sm:$0xff]
  %v33 = vld [vmem:[%s0 + $0x90] sm:$0xff]
  %v34 = vld [vmem:[%s0 + $0x98] sm:$0xff]
  %v35 = vld [vmem:[%s0 + $0xa0] sm:$0xff]
  %v36 = vld [vmem:[%s0 + $0xa8] sm:$0xff]
  %v37 = vld [vmem:[%s0 + $0xb0] sm:$0xff]
  %v38 = vld [vmem:[%s0 + $0xb8] sm:$0xff]
  %v39 = vld [vmem:[%s0 + $0xc0] sm:$0xff]
  %v40 = vld [vmem:[%s0 + $0xc8] sm:$0xff]
  %v41 = vld [vmem:[%s0 + $0xd0] sm:$0xff]
  %v42 = vld [vmem:[%s0 + $0xd8] sm:$0xff]
  %v43 = vld [vmem:[%s0 + $0xe0] sm:$0xff]
  %v44 = vld [vmem:[%s0 + $0xe8] sm:$0xff]
  %v45 = vld [vmem:[%s0 + $0xf0] sm:$0xff]
  %v46 = vld [vmem:[%s0 + $0xf8] sm:$0xff]
  %v47 = vld [vmem:[%s0 + $0x100] sm:$0xff]
  %v48 = vld [vmem:[%s0 + $0x108] sm:$0xff]
  %v49 = vld [vmem:[%s0 + $0x110] sm:$0xff]
  %v50 = vld [vmem:[%s0 + $0x118] sm:$0xff]
  %v51 = vld [vmem:[%s0 + $0x120] sm:$0xff]
  %v52 = vld [vmem:[%s0 + $0x128] sm:$0xff]
  %v53 = vld [vmem:[%s0 + $0x130] sm:$0xff]
  %v54 = vld [vmem:[%s0 + $0x138] sm:$0xff]
  %v55 = vld [vmem:[%s0 + $0x140] sm:$0xff]
  %v56 = vld [vmem:[%s0 + $0x148] sm:$0xff]
  %v57 = vld [vmem:[%s0 + $0x150] sm:$0xff]
  %v58 = vld [vmem:[%s0 + $0x158] sm:$0xff]
  %v59 = vld [vmem:[%s0 + $0x160] sm:$0xff]
  %v60 = vld [vmem:[%s0 + $0x168] sm:$0xff]
  %v61 = vld [vmem:[%s0 + $0x170] sm:$0xff]
  %v62 = vld [vmem:[%s0 + $0x178] sm:$0xff]
  %v63 = vld [vmem:[%s0 + $0x180] sm:$0xff]
  %v64 = vld [vmem:[%s0 + $0x188] sm:$0xff]
  %v65 = vld [vmem:[%s0 + $0x190] sm:$0xff]
  %v66 = vld [vmem:[%s0 + $0x198] sm:$0xff]
  %v67 = vld [vmem:[%s0 + $0x1a0] sm:$0xff]
  %v68 = vld [vmem:[%s0 + $0x1a8] sm:$0xff]
  %v69 = vld [vmem:[%s0 + $0x1b0] sm:$0xff]
  %v70 = vld [vmem:[%s0 + $0x1b8] sm:$0xff]
  %v71 = vld [vmem:[%s0 + $0x1c0] sm:$0xff]
  %v72 = vld [vmem:[%s0 + $0x1c8] sm:$0xff]
  %v73 = vld [vmem:[%s0 + $0x1d0] sm:$0xff]
  %v74 = vld [vmem:[%s0 + $0x1d8] sm:$0xff]
  %v75 = vld [vmem:[%s0 + $0x1e0] sm:$0xff]
  %v76 = vld [vmem:[%s0 + $0x1e8] sm:$0xff]
  %v77 = vld [vmem:[%s0 + $0x1f0] sm:$0xff]
  %v78 = vld [vmem:[%s0 + $0x1f8] sm:$0xff]
  %v79 = vld [vmem:[%s1] sm:$0xf]
  %v80 = vld [vmem:[%s1 + $0x4] sm:$0xf]
  %v81 = vld [vmem:[%s1 + $0x8] sm:$0xf]
  %v82 = vld [vmem:[%s1 + $0xc] sm:$0xf]
  %v83 = vld [vmem:[%s1 + $0x10] sm:$0xf]
  %v84 = vld [vmem:[%s1 + $0x14] sm:$0xf]
  %v85 = vld [vmem:[%s1 + $0x18] sm:$0xf]
  %v86 = vld [vmem:[%s1 + $0x1c] sm:$0xf]
  %v87 = vld [vmem:[%s1 + $0x20] sm:$0xf]
  %v88 = vld [vmem:[%s1 + $0x24] sm:$0xf]
  %v89 = vld [vmem:[%s1 + $0x28] sm:$0xf]
  %v90 = vld [vmem:[%s1 + $0x2c] sm:$0xf]
  %v91 = vld [vmem:[%s1 + $0x30] sm:$0xf]
  %v92 = vld [vmem:[%s1 + $0x34] sm:$0xf]
  %v93 = vld [vmem:[%s1 + $0x38] sm:$0xf]
  %v94 = vld [vmem:[%s1 + $0x3c] sm:$0xf]
  %v95 = vld [vmem:[%s1 + $0x40] sm:$0xf]
  %v96 = vld [vmem:[%s1 + $0x44] sm:$0xf]
  %v97 = vld [vmem:[%s1 + $0x48] sm:$0xf]
  %v98 = vld [vmem:[%s1 + $0x4c] sm:$0xf]
  %v99 = vld [vmem:[%s1 + $0x50] sm:$0xf]
  %v100 = vld [vmem:[%s1 + $0x54] sm:$0xf]
  %v101 = vld [vmem:[%s1 + $0x58] sm:$0xf]
  %v102 = vld [vmem:[%s1 + $0x5c] sm:$0xf]
  %v103 = vld [vmem:[%s1 + $0x60] sm:$0xf]
  %v104 = vld [vmem:[%s1 + $0x64] sm:$0xf]
  %v105 = vld [vmem:[%s1 + $0x68] sm:$0xf]
  %v106 = vld [vmem:[%s1 + $0x6c] sm:$0xf]
  %v107 = vld [vmem:[%s1 + $0x70] sm:$0xf]
  %v108 = vld [vmem:[%s1 + $0x74] sm:$0xf]
  %v109 = vld [vmem:[%s1 + $0x78] sm:$0xf]
  %v110 = vld [vmem:[%s1 + $0x7c] sm:$0xf]
  %v111 = vld [vmem:[%s2] sm:$0x1]
  %v113 = vlaneseq
  %v114 = vshrl.u32 %v113, 7
  %v115 = vsub.s32 0, %v114
  %v116 = vrot.slane %v111, %v115
  %v182 = vunpack.c.l.b16 %v15
  %v183 = vunpack.c.h.b16 %v15
  %v184 = vunpack.c.l.b16 %v16
  %v185 = vunpack.c.h.b16 %v16
  %v186 = vunpack.c.l.b16 %v17
  %v187 = vunpack.c.h.b16 %v17
  %v188 = vunpack.c.l.b16 %v18
  %v189 = vunpack.c.h.b16 %v18
  %v190 = vunpack.c.l.b16 %v19
  %v191 = vunpack.c.h.b16 %v19
  %v192 = vunpack.c.l.b16 %v20
  %v193 = vunpack.c.h.b16 %v20
  %v194 = vunpack.c.l.b16 %v21
  %v195 = vunpack.c.h.b16 %v21
  %v196 = vunpack.c.l.b16 %v22
  %v197 = vunpack.c.h.b16 %v22
  %v198 = vunpack.c.l.b16 %v23
  %v199 = vunpack.c.h.b16 %v23
  %v200 = vunpack.c.l.b16 %v24
  %v201 = vunpack.c.h.b16 %v24
  %v202 = vunpack.c.l.b16 %v25
  %v203 = vunpack.c.h.b16 %v25
  %v204 = vunpack.c.l.b16 %v26
  %v205 = vunpack.c.h.b16 %v26
  %v206 = vunpack.c.l.b16 %v27
  %v207 = vunpack.c.h.b16 %v27
  %v208 = vunpack.c.l.b16 %v28
  %v209 = vunpack.c.h.b16 %v28
  %v210 = vunpack.c.l.b16 %v29
  %v211 = vunpack.c.h.b16 %v29
  %v212 = vunpack.c.l.b16 %v30
  %v213 = vunpack.c.h.b16 %v30
  %v214 = vunpack.c.l.b16 %v31
  %v215 = vunpack.c.h.b16 %v31
  %v216 = vunpack.c.l.b16 %v32
  %v217 = vunpack.c.h.b16 %v32
  %v218 = vunpack.c.l.b16 %v33
  %v219 = vunpack.c.h.b16 %v33
  %v220 = vunpack.c.l.b16 %v34
  %v221 = vunpack.c.h.b16 %v34
  %v222 = vunpack.c.l.b16 %v35
  %v223 = vunpack.c.h.b16 %v35
  %v224 = vunpack.c.l.b16 %v36
  %v225 = vunpack.c.h.b16 %v36
  %v226 = vunpack.c.l.b16 %v37
  %v227 = vunpack.c.h.b16 %v37
  %v228 = vunpack.c.l.b16 %v38
  %v229 = vunpack.c.h.b16 %v38
  %v230 = vunpack.c.l.b16 %v39
  %v231 = vunpack.c.h.b16 %v39
  %v232 = vunpack.c.l.b16 %v40
  %v233 = vunpack.c.h.b16 %v40
  %v234 = vunpack.c.l.b16 %v41
  %v235 = vunpack.c.h.b16 %v41
  %v236 = vunpack.c.l.b16 %v42
  %v237 = vunpack.c.h.b16 %v42
  %v238 = vunpack.c.l.b16 %v43
  %v239 = vunpack.c.h.b16 %v43
  %v240 = vunpack.c.l.b16 %v44
  %v241 = vunpack.c.h.b16 %v44
  %v242 = vunpack.c.l.b16 %v45
  %v243 = vunpack.c.h.b16 %v45
  %v244 = vunpack.c.l.b16 %v46
  %v245 = vunpack.c.h.b16 %v46
  %v246 = vunpack.c.l.b16 %v47
  %v247 = vunpack.c.h.b16 %v47
  %v248 = vunpack.c.l.b16 %v48
  %v249 = vunpack.c.h.b16 %v48
  %v250 = vunpack.c.l.b16 %v49
  %v251 = vunpack.c.h.b16 %v49
  %v252 = vunpack.c.l.b16 %v50
  %v253 = vunpack.c.h.b16 %v50
  %v254 = vunpack.c.l.b16 %v51
  %v255 = vunpack.c.h.b16 %v51
  %v256 = vunpack.c.l.b16 %v52
  %v257 = vunpack.c.h.b16 %v52
  %v258 = vunpack.c.l.b16 %v53
  %v259 = vunpack.c.h.b16 %v53
  %v260 = vunpack.c.l.b16 %v54
  %v261 = vunpack.c.h.b16 %v54
  %v262 = vunpack.c.l.b16 %v55
  %v263 = vunpack.c.h.b16 %v55
  %v264 = vunpack.c.l.b16 %v56
  %v265 = vunpack.c.h.b16 %v56
  %v266 = vunpack.c.l.b16 %v57
  %v267 = vunpack.c.h.b16 %v57
  %v268 = vunpack.c.l.b16 %v58
  %v269 = vunpack.c.h.b16 %v58
  %v270 = vunpack.c.l.b16 %v59
  %v271 = vunpack.c.h.b16 %v59
  %v272 = vunpack.c.l.b16 %v60
  %v273 = vunpack.c.h.b16 %v60
  %v274 = vunpack.c.l.b16 %v61
  %v275 = vunpack.c.h.b16 %v61
  %v276 = vunpack.c.l.b16 %v62
  %v277 = vunpack.c.h.b16 %v62
  %v278 = vunpack.c.l.b16 %v63
  %v279 = vunpack.c.h.b16 %v63
  %v280 = vunpack.c.l.b16 %v64
  %v281 = vunpack.c.h.b16 %v64
  %v282 = vunpack.c.l.b16 %v65
  %v283 = vunpack.c.h.b16 %v65
  %v284 = vunpack.c.l.b16 %v66
  %v285 = vunpack.c.h.b16 %v66
  %v286 = vunpack.c.l.b16 %v67
  %v287 = vunpack.c.h.b16 %v67
  %v288 = vunpack.c.l.b16 %v68
  %v289 = vunpack.c.h.b16 %v68
  %v290 = vunpack.c.l.b16 %v69
  %v291 = vunpack.c.h.b16 %v69
  %v292 = vunpack.c.l.b16 %v70
  %v293 = vunpack.c.h.b16 %v70
  %v294 = vunpack.c.l.b16 %v71
  %v295 = vunpack.c.h.b16 %v71
  %v296 = vunpack.c.l.b16 %v72
  %v297 = vunpack.c.h.b16 %v72
  %v298 = vunpack.c.l.b16 %v73
  %v299 = vunpack.c.h.b16 %v73
  %v300 = vunpack.c.l.b16 %v74
  %v301 = vunpack.c.h.b16 %v74
  %v302 = vunpack.c.l.b16 %v75
  %v303 = vunpack.c.h.b16 %v75
  %v304 = vunpack.c.l.b16 %v76
  %v305 = vunpack.c.h.b16 %v76
  %v306 = vunpack.c.l.b16 %v77
  %v307 = vunpack.c.h.b16 %v77
  %v308 = vunpack.c.l.b16 %v78
  %v309 = vunpack.c.h.b16 %v78
  %v310 = vpack.c.b16 %v184, %v182
  %v311 = vpack.c.b16 %v185, %v183
  %v312 = vpack.c.b16 %v188, %v186
  %v313 = vpack.c.b16 %v189, %v187
  %v314 = vpack.c.b16 %v192, %v190
  %v315 = vpack.c.b16 %v193, %v191
  %v316 = vpack.c.b16 %v196, %v194
  %v317 = vpack.c.b16 %v197, %v195
  %v318 = vpack.c.b16 %v200, %v198
  %v319 = vpack.c.b16 %v201, %v199
  %v320 = vpack.c.b16 %v204, %v202
  %v321 = vpack.c.b16 %v205, %v203
  %v322 = vpack.c.b16 %v208, %v206
  %v323 = vpack.c.b16 %v209, %v207
  %v324 = vpack.c.b16 %v212, %v210
  %v325 = vpack.c.b16 %v213, %v211
  %v326 = vpack.c.b16 %v216, %v214
  %v327 = vpack.c.b16 %v217, %v215
  %v328 = vpack.c.b16 %v220, %v218
  %v329 = vpack.c.b16 %v221, %v219
  %v330 = vpack.c.b16 %v224, %v222
  %v331 = vpack.c.b16 %v225, %v223
  %v332 = vpack.c.b16 %v228, %v226
  %v333 = vpack.c.b16 %v229, %v227
  %v334 = vpack.c.b16 %v232, %v230
  %v335 = vpack.c.b16 %v233, %v231
  %v336 = vpack.c.b16 %v236, %v234
  %v337 = vpack.c.b16 %v237, %v235
  %v338 = vpack.c.b16 %v240, %v238
  %v339 = vpack.c.b16 %v241, %v239
  %v340 = vpack.c.b16 %v244, %v242
  %v341 = vpack.c.b16 %v245, %v243
  %v342 = vpack.c.b16 %v248, %v246
  %v343 = vpack.c.b16 %v249, %v247
  %v344 = vpack.c.b16 %v252, %v250
  %v345 = vpack.c.b16 %v253, %v251
  %v346 = vpack.c.b16 %v256, %v254
  %v347 = vpack.c.b16 %v257, %v255
  %v348 = vpack.c.b16 %v260, %v258
  %v349 = vpack.c.b16 %v261, %v259
  %v350 = vpack.c.b16 %v264, %v262
  %v351 = vpack.c.b16 %v265, %v263
  %v352 = vpack.c.b16 %v268, %v266
  %v353 = vpack.c.b16 %v269, %v267
  %v354 = vpack.c.b16 %v272, %v270
  %v355 = vpack.c.b16 %v273, %v271
  %v356 = vpack.c.b16 %v276, %v274
  %v357 = vpack.c.b16 %v277, %v275
  %v358 = vpack.c.b16 %v280, %v278
  %v359 = vpack.c.b16 %v281, %v279
  %v360 = vpack.c.b16 %v284, %v282
  %v361 = vpack.c.b16 %v285, %v283
  %v362 = vpack.c.b16 %v288, %v286
  %v363 = vpack.c.b16 %v289, %v287
  %v364 = vpack.c.b16 %v292, %v290
  %v365 = vpack.c.b16 %v293, %v291
  %v366 = vpack.c.b16 %v296, %v294
  %v367 = vpack.c.b16 %v297, %v295
  %v368 = vpack.c.b16 %v300, %v298
  %v369 = vpack.c.b16 %v301, %v299
  %v370 = vpack.c.b16 %v304, %v302
  %v371 = vpack.c.b16 %v305, %v303
  %v372 = vpack.c.b16 %v308, %v306
  %v373 = vpack.c.b16 %v309, %v307
  %v470 = vunpack.c.l.b16 %v79
  %v471 = vunpack.c.l.b16 %v80
  %v472 = vunpack.c.l.b16 %v81
  %v473 = vunpack.c.l.b16 %v82
  %v474 = vunpack.c.l.b16 %v83
  %v475 = vunpack.c.l.b16 %v84
  %v476 = vunpack.c.l.b16 %v85
  %v477 = vunpack.c.l.b16 %v86
  %v478 = vunpack.c.l.b16 %v87
  %v479 = vunpack.c.l.b16 %v88
  %v480 = vunpack.c.l.b16 %v89
  %v481 = vunpack.c.l.b16 %v90
  %v482 = vunpack.c.l.b16 %v91
  %v483 = vunpack.c.l.b16 %v92
  %v484 = vunpack.c.l.b16 %v93
  %v485 = vunpack.c.l.b16 %v94
  %v486 = vunpack.c.l.b16 %v95
  %v487 = vunpack.c.l.b16 %v96
  %v488 = vunpack.c.l.b16 %v97
  %v489 = vunpack.c.l.b16 %v98
  %v490 = vunpack.c.l.b16 %v99
  %v491 = vunpack.c.l.b16 %v100
  %v492 = vunpack.c.l.b16 %v101
  %v493 = vunpack.c.l.b16 %v102
  %v494 = vunpack.c.l.b16 %v103
  %v495 = vunpack.c.l.b16 %v104
  %v496 = vunpack.c.l.b16 %v105
  %v497 = vunpack.c.l.b16 %v106
  %v498 = vunpack.c.l.b16 %v107
  %v499 = vunpack.c.l.b16 %v108
  %v500 = vunpack.c.l.b16 %v109
  %v501 = vunpack.c.l.b16 %v110
  %v502 = vpack.c.b16 %v471, %v470
  %v503 = vpack.c.b16 %v473, %v472
  %v504 = vpack.c.b16 %v475, %v474
  %v505 = vpack.c.b16 %v477, %v476
  %v506 = vpack.c.b16 %v479, %v478
  %v507 = vpack.c.b16 %v481, %v480
  %v508 = vpack.c.b16 %v483, %v482
  %v509 = vpack.c.b16 %v485, %v484
  %v510 = vpack.c.b16 %v487, %v486
  %v511 = vpack.c.b16 %v489, %v488
  %v512 = vpack.c.b16 %v491, %v490
  %v513 = vpack.c.b16 %v493, %v492
  %v514 = vpack.c.b16 %v495, %v494
  %v515 = vpack.c.b16 %v497, %v496
  %v516 = vpack.c.b16 %v499, %v498
  %v517 = vpack.c.b16 %v501, %v500
  %534 = vmatprep.subr.bf16.mxu0 0
  %535 = vmatpush1.bf16.msra.mxu0 %v502
  %536 = vmatprep.subr.bf16.mxu0 0
  %537 = vmatpush1.bf16.msra.mxu0 %v503
  %538 = vmatprep.subr.bf16.mxu0 0
  %539 = vmatpush1.bf16.msra.mxu0 %v504
  %540 = vmatprep.subr.bf16.mxu0 0
  %541 = vmatpush1.bf16.msra.mxu0 %v505
  %542 = vmatprep.subr.bf16.mxu0 0
  %543 = vmatpush1.bf16.msra.mxu0 %v506
  %544 = vmatprep.subr.bf16.mxu0 0
  %545 = vmatpush1.bf16.msra.mxu0 %v507
  %546 = vmatprep.subr.bf16.mxu0 0
  %547 = vmatpush1.bf16.msra.mxu0 %v508
  %548 = vmatprep.subr.bf16.mxu0 0
  %549 = vmatpush1.bf16.msra.mxu0 %v509
  %550 = vmatprep.subr.bf16.mxu0 0
  %551 = vmatpush1.bf16.msra.mxu0 %v510
  %552 = vmatprep.subr.bf16.mxu0 0
  %553 = vmatpush1.bf16.msra.mxu0 %v511
  %554 = vmatprep.subr.bf16.mxu0 0
  %555 = vmatpush1.bf16.msra.mxu0 %v512
  %556 = vmatprep.subr.bf16.mxu0 0
  %557 = vmatpush1.bf16.msra.mxu0 %v513
  %558 = vmatprep.subr.bf16.mxu0 0
  %559 = vmatpush1.bf16.msra.mxu0 %v514
  %560 = vmatprep.subr.bf16.mxu0 0
  %561 = vmatpush1.bf16.msra.mxu0 %v515
  %562 = vmatprep.subr.bf16.mxu0 0
  %563 = vmatpush1.bf16.msra.mxu0 %v516
  %564 = vmatprep.subr.bf16.mxu0 0
  %565 = vmatpush1.bf16.msra.mxu0 %v517
  %566 = vmatprep.mubr.bf16.mxu0 %v311
  %567 = vmatmul.mubr.bf16.gmra.mrb[0].mxu0 %v310
  %v568 = vpop.f32.mrb[0].mxu0
  %v569 = vadd.f32 %v116, %v568
  %v570 = vpop.f32.mrb[0].mxu0
  %v571 = vpop.f32.mrb[0].mxu0
  %v572 = vadd.f32 %v116, %v571
  %v573 = vpop.f32.mrb[0].mxu0
  %574 = vmatprep.mubr.bf16.mxu0 %v313
  %575 = vmatmul.mubr.bf16.gmra.mrb[0].mxu0 %v312
  %v576 = vpop.f32.mrb[0].mxu0
  %v577 = vadd.f32 %v116, %v576
  %v578 = vpop.f32.mrb[0].mxu0
  %v579 = vpop.f32.mrb[0].mxu0
  %v580 = vadd.f32 %v116, %v579
  %v581 = vpop.f32.mrb[0].mxu0
  %582 = vmatprep.mubr.bf16.mxu0 %v315
  %583 = vmatmul.mubr.bf16.gmra.mrb[0].mxu0 %v314
  %v584 = vpop.f32.mrb[0].mxu0
  %v585 = vadd.f32 %v116, %v584
  %v586 = vpop.f32.mrb[0].mxu0
  %v587 = vpop.f32.mrb[0].mxu0
  %v588 = vadd.f32 %v116, %v587
  %v589 = vpop.f32.mrb[0].mxu0
  %590 = vmatprep.mubr.bf16.mxu0 %v317
  %591 = vmatmul.mubr.bf16.gmra.mrb[0].mxu0 %v316
  %v592 = vpop.f32.mrb[0].mxu0
  %v593 = vadd.f32 %v116, %v592
  %v594 = vpop.f32.mrb[0].mxu0
  %v595 = vpop.f32.mrb[0].mxu0
  %v596 = vadd.f32 %v116, %v595
  %v597 = vpop.f32.mrb[0].mxu0
  %598 = vmatprep.mubr.bf16.mxu0 %v319
  %599 = vmatmul.mubr.bf16.gmra.mrb[0].mxu0 %v318
  %v600 = vpop.f32.mrb[0].mxu0
  %v601 = vadd.f32 %v116, %v600
  %v602 = vpop.f32.mrb[0].mxu0
  %v603 = vpop.f32.mrb[0].mxu0
  %v604 = vadd.f32 %v116, %v603
  %v605 = vpop.f32.mrb[0].mxu0
  %606 = vmatprep.mubr.bf16.mxu0 %v321
  %607 = vmatmul.mubr.bf16.gmra.mrb[0].mxu0 %v320
  %v608 = vpop.f32.mrb[0].mxu0
  %v609 = vadd.f32 %v116, %v608
  %v610 = vpop.f32.mrb[0].mxu0
  %v611 = vpop.f32.mrb[0].mxu0
  %v612 = vadd.f32 %v116, %v611
  %v613 = vpop.f32.mrb[0].mxu0
  %614 = vmatprep.mubr.bf16.mxu0 %v323
  %615 = vmatmul.mubr.bf16.gmra.mrb[0].mxu0 %v322
  %v616 = vpop.f32.mrb[0].mxu0
  %v617 = vadd.f32 %v116, %v616
  %v618 = vpop.f32.mrb[0].mxu0
  %v619 = vpop.f32.mrb[0].mxu0
  %v620 = vadd.f32 %v116, %v619
  %v621 = vpop.f32.mrb[0].mxu0
  %622 = vmatprep.mubr.bf16.mxu0 %v325
  %623 = vmatmul.mubr.bf16.gmra.mrb[0].mxu0 %v324
  %v624 = vpop.f32.mrb[0].mxu0
  %v625 = vadd.f32 %v116, %v624
  %v626 = vpop.f32.mrb[0].mxu0
  %v627 = vpop.f32.mrb[0].mxu0
  %v628 = vadd.f32 %v116, %v627
  %v629 = vpop.f32.mrb[0].mxu0
  %630 = vmatprep.mubr.bf16.mxu0 %v327
  %631 = vmatmul.mubr.bf16.gmra.mrb[0].mxu0 %v326
  %v632 = vpop.f32.mrb[0].mxu0
  %v633 = vadd.f32 %v116, %v632
  %v634 = vpop.f32.mrb[0].mxu0
  %v635 = vpop.f32.mrb[0].mxu0
  %v636 = vadd.f32 %v116, %v635
  %v637 = vpop.f32.mrb[0].mxu0
  %638 = vmatprep.mubr.bf16.mxu0 %v329
  %639 = vmatmul.mubr.bf16.gmra.mrb[0].mxu0 %v328
  %v640 = vpop.f32.mrb[0].mxu0
  %v641 = vadd.f32 %v116, %v640
  %v642 = vpop.f32.mrb[0].mxu0
  %v643 = vpop.f32.mrb[0].mxu0
  %v644 = vadd.f32 %v116, %v643
  %v645 = vpop.f32.mrb[0].mxu0
  %646 = vmatprep.mubr.bf16.mxu0 %v331
  %647 = vmatmul.mubr.bf16.gmra.mrb[0].mxu0 %v330
  %v648 = vpop.f32.mrb[0].mxu0
  %v649 = vadd.f32 %v116, %v648
  %v650 = vpop.f32.mrb[0].mxu0
  %v651 = vpop.f32.mrb[0].mxu0
  %v652 = vadd.f32 %v116, %v651
  %v653 = vpop.f32.mrb[0].mxu0
  %654 = vmatprep.mubr.bf16.mxu0 %v333
  %655 = vmatmul.mubr.bf16.gmra.mrb[0].mxu0 %v332
  %v656 = vpop.f32.mrb[0].mxu0
  %v657 = vadd.f32 %v116, %v656
  %v658 = vpop.f32.mrb[0].mxu0
  %v659 = vpop.f32.mrb[0].mxu0
  %v660 = vadd.f32 %v116, %v659
  %v661 = vpop.f32.mrb[0].mxu0
  %662 = vmatprep.mubr.bf16.mxu0 %v335
  %663 = vmatmul.mubr.bf16.gmra.mrb[0].mxu0 %v334
  %v664 = vpop.f32.mrb[0].mxu0
  %v665 = vadd.f32 %v116, %v664
  %v666 = vpop.f32.mrb[0].mxu0
  %v667 = vpop.f32.mrb[0].mxu0
  %v668 = vadd.f32 %v116, %v667
  %v669 = vpop.f32.mrb[0].mxu0
  %670 = vmatprep.mubr.bf16.mxu0 %v337
  %671 = vmatmul.mubr.bf16.gmra.mrb[0].mxu0 %v336
  %v672 = vpop.f32.mrb[0].mxu0
  %v673 = vadd.f32 %v116, %v672
  %v674 = vpop.f32.mrb[0].mxu0
  %v675 = vpop.f32.mrb[0].mxu0
  %v676 = vadd.f32 %v116, %v675
  %v677 = vpop.f32.mrb[0].mxu0
  %678 = vmatprep.mubr.bf16.mxu0 %v339
  %679 = vmatmul.mubr.bf16.gmra.mrb[0].mxu0 %v338
  %v680 = vpop.f32.mrb[0].mxu0
  %v681 = vadd.f32 %v116, %v680
  %v682 = vpop.f32.mrb[0].mxu0
  %v683 = vpop.f32.mrb[0].mxu0
  %v684 = vadd.f32 %v116, %v683
  %v685 = vpop.f32.mrb[0].mxu0
  %686 = vmatprep.mubr.bf16.mxu0 %v341
  %687 = vmatmul.mubr.bf16.gmra.mrb[0].mxu0 %v340
  %v688 = vpop.f32.mrb[0].mxu0
  %v689 = vadd.f32 %v116, %v688
  %v690 = vpop.f32.mrb[0].mxu0
  %v691 = vpop.f32.mrb[0].mxu0
  %v692 = vadd.f32 %v116, %v691
  %v693 = vpop.f32.mrb[0].mxu0
  %694 = vmatprep.mubr.bf16.mxu0 %v343
  %695 = vmatmul.mubr.bf16.gmra.mrb[0].mxu0 %v342
  %v696 = vpop.f32.mrb[0].mxu0
  %v697 = vadd.f32 %v116, %v696
  %v698 = vpop.f32.mrb[0].mxu0
  %v699 = vpop.f32.mrb[0].mxu0
  %v700 = vadd.f32 %v116, %v699
  %v701 = vpop.f32.mrb[0].mxu0
  %702 = vmatprep.mubr.bf16.mxu0 %v345
  %703 = vmatmul.mubr.bf16.gmra.mrb[0].mxu0 %v344
  %v704 = vpop.f32.mrb[0].mxu0
  %v705 = vadd.f32 %v116, %v704
  %v706 = vpop.f32.mrb[0].mxu0
  %v707 = vpop.f32.mrb[0].mxu0
  %v708 = vadd.f32 %v116, %v707
  %v709 = vpop.f32.mrb[0].mxu0
  %710 = vmatprep.mubr.bf16.mxu0 %v347
  %711 = vmatmul.mubr.bf16.gmra.mrb[0].mxu0 %v346
  %v712 = vpop.f32.mrb[0].mxu0
  %v713 = vadd.f32 %v116, %v712
  %v714 = vpop.f32.mrb[0].mxu0
  %v715 = vpop.f32.mrb[0].mxu0
  %v716 = vadd.f32 %v116, %v715
  %v717 = vpop.f32.mrb[0].mxu0
  %718 = vmatprep.mubr.bf16.mxu0 %v349
  %719 = vmatmul.mubr.bf16.gmra.mrb[0].mxu0 %v348
  %v720 = vpop.f32.mrb[0].mxu0
  %v721 = vadd.f32 %v116, %v720
  %v722 = vpop.f32.mrb[0].mxu0
  %v723 = vpop.f32.mrb[0].mxu0
  %v724 = vadd.f32 %v116, %v723
  %v725 = vpop.f32.mrb[0].mxu0
  %726 = vmatprep.mubr.bf16.mxu0 %v351
  %727 = vmatmul.mubr.bf16.gmra.mrb[0].mxu0 %v350
  %v728 = vpop.f32.mrb[0].mxu0
  %v729 = vadd.f32 %v116, %v728
  %v730 = vpop.f32.mrb[0].mxu0
  %v731 = vpop.f32.mrb[0].mxu0
  %v732 = vadd.f32 %v116, %v731
  %v733 = vpop.f32.mrb[0].mxu0
  %734 = vmatprep.mubr.bf16.mxu0 %v353
  %735 = vmatmul.mubr.bf16.gmra.mrb[0].mxu0 %v352
  %v736 = vpop.f32.mrb[0].mxu0
  %v737 = vadd.f32 %v116, %v736
  %v738 = vpop.f32.mrb[0].mxu0
  %v739 = vpop.f32.mrb[0].mxu0
  %v740 = vadd.f32 %v116, %v739
  %v741 = vpop.f32.mrb[0].mxu0
  %742 = vmatprep.mubr.bf16.mxu0 %v355
  %743 = vmatmul.mubr.bf16.gmra.mrb[0].mxu0 %v354
  %v744 = vpop.f32.mrb[0].mxu0
  %v745 = vadd.f32 %v116, %v744
  %v746 = vpop.f32.mrb[0].mxu0
  %v747 = vpop.f32.mrb[0].mxu0
  %v748 = vadd.f32 %v116, %v747
  %v749 = vpop.f32.mrb[0].mxu0
  %750 = vmatprep.mubr.bf16.mxu0 %v357
  %751 = vmatmul.mubr.bf16.gmra.mrb[0].mxu0 %v356
  %v752 = vpop.f32.mrb[0].mxu0
  %v753 = vadd.f32 %v116, %v752
  %v754 = vpop.f32.mrb[0].mxu0
  %v755 = vpop.f32.mrb[0].mxu0
  %v756 = vadd.f32 %v116, %v755
  %v757 = vpop.f32.mrb[0].mxu0
  %758 = vmatprep.mubr.bf16.mxu0 %v359
  %759 = vmatmul.mubr.bf16.gmra.mrb[0].mxu0 %v358
  %v760 = vpop.f32.mrb[0].mxu0
  %v761 = vadd.f32 %v116, %v760
  %v762 = vpop.f32.mrb[0].mxu0
  %v763 = vpop.f32.mrb[0].mxu0
  %v764 = vadd.f32 %v116, %v763
  %v765 = vpop.f32.mrb[0].mxu0
  %766 = vmatprep.mubr.bf16.mxu0 %v361
  %767 = vmatmul.mubr.bf16.gmra.mrb[0].mxu0 %v360
  %v768 = vpop.f32.mrb[0].mxu0
  %v769 = vadd.f32 %v116, %v768
  %v770 = vpop.f32.mrb[0].mxu0
  %v771 = vpop.f32.mrb[0].mxu0
  %v772 = vadd.f32 %v116, %v771
  %v773 = vpop.f32.mrb[0].mxu0
  %774 = vmatprep.mubr.bf16.mxu0 %v363
  %775 = vmatmul.mubr.bf16.gmra.mrb[0].mxu0 %v362
  %v776 = vpop.f32.mrb[0].mxu0
  %v777 = vadd.f32 %v116, %v776
  %v778 = vpop.f32.mrb[0].mxu0
  %v779 = vpop.f32.mrb[0].mxu0
  %v780 = vadd.f32 %v116, %v779
  %v781 = vpop.f32.mrb[0].mxu0
  %782 = vmatprep.mubr.bf16.mxu0 %v365
  %783 = vmatmul.mubr.bf16.gmra.mrb[0].mxu0 %v364
  %v784 = vpop.f32.mrb[0].mxu0
  %v785 = vadd.f32 %v116, %v784
  %v786 = vpop.f32.mrb[0].mxu0
  %v787 = vpop.f32.mrb[0].mxu0
  %v788 = vadd.f32 %v116, %v787
  %v789 = vpop.f32.mrb[0].mxu0
  %790 = vmatprep.mubr.bf16.mxu0 %v367
  %791 = vmatmul.mubr.bf16.gmra.mrb[0].mxu0 %v366
  %v792 = vpop.f32.mrb[0].mxu0
  %v793 = vadd.f32 %v116, %v792
  %v794 = vpop.f32.mrb[0].mxu0
  %v795 = vpop.f32.mrb[0].mxu0
  %v796 = vadd.f32 %v116, %v795
  %v797 = vpop.f32.mrb[0].mxu0
  %798 = vmatprep.mubr.bf16.mxu0 %v369
  %799 = vmatmul.mubr.bf16.gmra.mrb[0].mxu0 %v368
  %v800 = vpop.f32.mrb[0].mxu0
  %v801 = vadd.f32 %v116, %v800
  %v802 = vpop.f32.mrb[0].mxu0
  %v803 = vpop.f32.mrb[0].mxu0
  %v804 = vadd.f32 %v116, %v803
  %v805 = vpop.f32.mrb[0].mxu0
  %806 = vmatprep.mubr.bf16.mxu0 %v371
  %807 = vmatmul.mubr.bf16.gmra.mrb[0].mxu0 %v370
  %v808 = vpop.f32.mrb[0].mxu0
  %v809 = vadd.f32 %v116, %v808
  %v810 = vpop.f32.mrb[0].mxu0
  %v811 = vpop.f32.mrb[0].mxu0
  %v812 = vadd.f32 %v116, %v811
  %v813 = vpop.f32.mrb[0].mxu0
  %814 = vmatprep.mubr.bf16.mxu0 %v373
  %815 = vmatmul.mubr.bf16.gmra.mrb[0].mxu0 %v372
  %v816 = vpop.f32.mrb[0].mxu0
  %v817 = vadd.f32 %v116, %v816
  %v818 = vpop.f32.mrb[0].mxu0
  %v819 = vpop.f32.mrb[0].mxu0
  %v820 = vadd.f32 %v116, %v819
  %v821 = vpop.f32.mrb[0].mxu0
  %822 = vdwg.mxu0
  %v823 = vmax.f32 %v569, 0.0
  %v824 = vmax.f32 %v572, 0.0
  %v825 = vmax.f32 %v577, 0.0
  %v826 = vmax.f32 %v580, 0.0
  %v827 = vmax.f32 %v585, 0.0
  %v828 = vmax.f32 %v588, 0.0
  %v829 = vmax.f32 %v593, 0.0
  %v830 = vmax.f32 %v596, 0.0
  %v831 = vmax.f32 %v601, 0.0
  %v832 = vmax.f32 %v604, 0.0
  %v833 = vmax.f32 %v609, 0.0
  %v834 = vmax.f32 %v612, 0.0
  %v835 = vmax.f32 %v617, 0.0
  %v836 = vmax.f32 %v620, 0.0
  %v837 = vmax.f32 %v625, 0.0
  %v838 = vmax.f32 %v628, 0.0
  %v839 = vmax.f32 %v633, 0.0
  %v840 = vmax.f32 %v636, 0.0
  %v841 = vmax.f32 %v641, 0.0
  %v842 = vmax.f32 %v644, 0.0
  %v843 = vmax.f32 %v649, 0.0
  %v844 = vmax.f32 %v652, 0.0
  %v845 = vmax.f32 %v657, 0.0
  %v846 = vmax.f32 %v660, 0.0
  %v847 = vmax.f32 %v665, 0.0
  %v848 = vmax.f32 %v668, 0.0
  %v849 = vmax.f32 %v673, 0.0
  %v850 = vmax.f32 %v676, 0.0
  %v851 = vmax.f32 %v681, 0.0
  %v852 = vmax.f32 %v684, 0.0
  %v853 = vmax.f32 %v689, 0.0
  %v854 = vmax.f32 %v692, 0.0
  %v855 = vmax.f32 %v697, 0.0
  %v856 = vmax.f32 %v700, 0.0
  %v857 = vmax.f32 %v705, 0.0
  %v858 = vmax.f32 %v708, 0.0
  %v859 = vmax.f32 %v713, 0.0
  %v860 = vmax.f32 %v716, 0.0
  %v861 = vmax.f32 %v721, 0.0
  %v862 = vmax.f32 %v724, 0.0
  %v863 = vmax.f32 %v729, 0.0
  %v864 = vmax.f32 %v732, 0.0
  %v865 = vmax.f32 %v737, 0.0
  %v866 = vmax.f32 %v740, 0.0
  %v867 = vmax.f32 %v745, 0.0
  %v868 = vmax.f32 %v748, 0.0
  %v869 = vmax.f32 %v753, 0.0
  %v870 = vmax.f32 %v756, 0.0
  %v871 = vmax.f32 %v761, 0.0
  %v872 = vmax.f32 %v764, 0.0
  %v873 = vmax.f32 %v769, 0.0
  %v874 = vmax.f32 %v772, 0.0
  %v875 = vmax.f32 %v777, 0.0
  %v876 = vmax.f32 %v780, 0.0
  %v877 = vmax.f32 %v785, 0.0
  %v878 = vmax.f32 %v788, 0.0
  %v879 = vmax.f32 %v793, 0.0
  %v880 = vmax.f32 %v796, 0.0
  %v881 = vmax.f32 %v801, 0.0
  %v882 = vmax.f32 %v804, 0.0
  %v883 = vmax.f32 %v809, 0.0
  %v884 = vmax.f32 %v812, 0.0
  %v885 = vmax.f32 %v817, 0.0
  %v886 = vmax.f32 %v820, 0.0
  %v887 = vpack.c.bf16 %v824, %v823
  %v888 = vpack.c.bf16 %v826, %v825
  %v889 = vpack.c.bf16 %v828, %v827
  %v890 = vpack.c.bf16 %v830, %v829
  %v891 = vpack.c.bf16 %v832, %v831
  %v892 = vpack.c.bf16 %v834, %v833
  %v893 = vpack.c.bf16 %v836, %v835
  %v894 = vpack.c.bf16 %v838, %v837
  %v895 = vpack.c.bf16 %v840, %v839
  %v896 = vpack.c.bf16 %v842, %v841
  %v897 = vpack.c.bf16 %v844, %v843
  %v898 = vpack.c.bf16 %v846, %v845
  %v899 = vpack.c.bf16 %v848, %v847
  %v900 = vpack.c.bf16 %v850, %v849
  %v901 = vpack.c.bf16 %v852, %v851
  %v902 = vpack.c.bf16 %v854, %v853
  %v903 = vpack.c.bf16 %v856, %v855
  %v904 = vpack.c.bf16 %v858, %v857
  %v905 = vpack.c.bf16 %v860, %v859
  %v906 = vpack.c.bf16 %v862, %v861
  %v907 = vpack.c.bf16 %v864, %v863
  %v908 = vpack.c.bf16 %v866, %v865
  %v909 = vpack.c.bf16 %v868, %v867
  %v910 = vpack.c.bf16 %v870, %v869
  %v911 = vpack.c.bf16 %v872, %v871
  %v912 = vpack.c.bf16 %v874, %v873
  %v913 = vpack.c.bf16 %v876, %v875
  %v914 = vpack.c.bf16 %v878, %v877
  %v915 = vpack.c.bf16 %v880, %v879
  %v916 = vpack.c.bf16 %v882, %v881
  %v917 = vpack.c.bf16 %v884, %v883
  %v918 = vpack.c.bf16 %v886, %v885
  %v951 = vunpack.c.l.b16 %v887
  %v952 = vunpack.c.h.b16 %v887
  %v953 = vunpack.c.l.b16 %v888
  %v954 = vunpack.c.h.b16 %v888
  %v955 = vunpack.c.l.b16 %v889
  %v956 = vunpack.c.h.b16 %v889
  %v957 = vunpack.c.l.b16 %v890
  %v958 = vunpack.c.h.b16 %v890
  %v959 = vunpack.c.l.b16 %v891
  %v960 = vunpack.c.h.b16 %v891
  %v961 = vunpack.c.l.b16 %v892
  %v962 = vunpack.c.h.b16 %v892
  %v963 = vunpack.c.l.b16 %v893
  %v964 = vunpack.c.h.b16 %v893
  %v965 = vunpack.c.l.b16 %v894
  %v966 = vunpack.c.h.b16 %v894
  %v967 = vunpack.c.l.b16 %v895
  %v968 = vunpack.c.h.b16 %v895
  %v969 = vunpack.c.l.b16 %v896
  %v970 = vunpack.c.h.b16 %v896
  %v971 = vunpack.c.l.b16 %v897
  %v972 = vunpack.c.h.b16 %v897
  %v973 = vunpack.c.l.b16 %v898
  %v974 = vunpack.c.h.b16 %v898
  %v975 = vunpack.c.l.b16 %v899
  %v976 = vunpack.c.h.b16 %v899
  %v977 = vunpack.c.l.b16 %v900
  %v978 = vunpack.c.h.b16 %v900
  %v979 = vunpack.c.l.b16 %v901
  %v980 = vunpack.c.h.b16 %v901
  %v981 = vunpack.c.l.b16 %v902
  %v982 = vunpack.c.h.b16 %v902
  %v983 = vunpack.c.l.b16 %v903
  %v984 = vunpack.c.h.b16 %v903
  %v985 = vunpack.c.l.b16 %v904
  %v986 = vunpack.c.h.b16 %v904
  %v987 = vunpack.c.l.b16 %v905
  %v988 = vunpack.c.h.b16 %v905
  %v989 = vunpack.c.l.b16 %v906
  %v990 = vunpack.c.h.b16 %v906
  %v991 = vunpack.c.l.b16 %v907
  %v992 = vunpack.c.h.b16 %v907
  %v993 = vunpack.c.l.b16 %v908
  %v994 = vunpack.c.h.b16 %v908
  %v995 = vunpack.c.l.b16 %v909
  %v996 = vunpack.c.h.b16 %v909
  %v997 = vunpack.c.l.b16 %v910
  %v998 = vunpack.c.h.b16 %v910
  %v999 = vunpack.c.l.b16 %v911
  %v1000 = vunpack.c.h.b16 %v911
  %v1001 = vunpack.c.l.b16 %v912
  %v1002 = vunpack.c.h.b16 %v912
  %v1003 = vunpack.c.l.b16 %v913
  %v1004 = vunpack.c.h.b16 %v913
  %v1005 = vunpack.c.l.b16 %v914
  %v1006 = vunpack.c.h.b16 %v914
  %v1007 = vunpack.c.l.b16 %v915
  %v1008 = vunpack.c.h.b16 %v915
  %v1009 = vunpack.c.l.b16 %v916
  %v1010 = vunpack.c.h.b16 %v916
  %v1011 = vunpack.c.l.b16 %v917
  %v1012 = vunpack.c.h.b16 %v917
  %v1013 = vunpack.c.l.b16 %v918
  %v1014 = vunpack.c.h.b16 %v918
  %v1015 = vpack.c.b16 %v951, %v951
  %v1016 = vpack.c.b16 %v952, %v952
  %v1017 = vpack.c.b16 %v953, %v953
  %v1018 = vpack.c.b16 %v954, %v954
  %v1019 = vpack.c.b16 %v955, %v955
  %v1020 = vpack.c.b16 %v956, %v956
  %v1021 = vpack.c.b16 %v957, %v957
  %v1022 = vpack.c.b16 %v958, %v958
  %v1023 = vpack.c.b16 %v959, %v959
  %v1024 = vpack.c.b16 %v960, %v960
  %v1025 = vpack.c.b16 %v961, %v961
  %v1026 = vpack.c.b16 %v962, %v962
  %v1027 = vpack.c.b16 %v963, %v963
  %v1028 = vpack.c.b16 %v964, %v964
  %v1029 = vpack.c.b16 %v965, %v965
  %v1030 = vpack.c.b16 %v966, %v966
  %v1031 = vpack.c.b16 %v967, %v967
  %v1032 = vpack.c.b16 %v968, %v968
  %v1033 = vpack.c.b16 %v969, %v969
  %v1034 = vpack.c.b16 %v970, %v970
  %v1035 = vpack.c.b16 %v971, %v971
  %v1036 = vpack.c.b16 %v972, %v972
  %v1037 = vpack.c.b16 %v973, %v973
  %v1038 = vpack.c.b16 %v974, %v974
  %v1039 = vpack.c.b16 %v975, %v975
  %v1040 = vpack.c.b16 %v976, %v976
  %v1041 = vpack.c.b16 %v977, %v977
  %v1042 = vpack.c.b16 %v978, %v978
  %v1043 = vpack.c.b16 %v979, %v979
  %v1044 = vpack.c.b16 %v980, %v980
  %v1045 = vpack.c.b16 %v981, %v981
  %v1046 = vpack.c.b16 %v982, %v982
  %v1047 = vpack.c.b16 %v983, %v983
  %v1048 = vpack.c.b16 %v984, %v984
  %v1049 = vpack.c.b16 %v985, %v985
  %v1050 = vpack.c.b16 %v986, %v986
  %v1051 = vpack.c.b16 %v987, %v987
  %v1052 = vpack.c.b16 %v988, %v988
  %v1053 = vpack.c.b16 %v989, %v989
  %v1054 = vpack.c.b16 %v990, %v990
  %v1055 = vpack.c.b16 %v991, %v991
  %v1056 = vpack.c.b16 %v992, %v992
  %v1057 = vpack.c.b16 %v993, %v993
  %v1058 = vpack.c.b16 %v994, %v994
  %v1059 = vpack.c.b16 %v995, %v995
  %v1060 = vpack.c.b16 %v996, %v996
  %v1061 = vpack.c.b16 %v997, %v997
  %v1062 = vpack.c.b16 %v998, %v998
  %v1063 = vpack.c.b16 %v999, %v999
  %v1064 = vpack.c.b16 %v1000, %v1000
  %v1065 = vpack.c.b16 %v1001, %v1001
  %v1066 = vpack.c.b16 %v1002, %v1002
  %v1067 = vpack.c.b16 %v1003, %v1003
  %v1068 = vpack.c.b16 %v1004, %v1004
  %v1069 = vpack.c.b16 %v1005, %v1005
  %v1070 = vpack.c.b16 %v1006, %v1006
  %v1071 = vpack.c.b16 %v1007, %v1007
  %v1072 = vpack.c.b16 %v1008, %v1008
  %v1073 = vpack.c.b16 %v1009, %v1009
  %v1074 = vpack.c.b16 %v1010, %v1010
  %v1075 = vpack.c.b16 %v1011, %v1011
  %v1076 = vpack.c.b16 %v1012, %v1012
  %v1077 = vpack.c.b16 %v1013, %v1013
  %v1078 = vpack.c.b16 %v1014, %v1014
  %1143 = vst [vmem:[%s3] sm:$0xf] %v1015
  %1144 = vst [vmem:[%s3 + $0x4] sm:$0xf] %v1016
  %1145 = vst [vmem:[%s3 + $0x8] sm:$0xf] %v1017
  %1146 = vst [vmem:[%s3 + $0xc] sm:$0xf] %v1018
  %1147 = vst [vmem:[%s3 + $0x10] sm:$0xf] %v1019
  %1148 = vst [vmem:[%s3 + $0x14] sm:$0xf] %v1020
  %1149 = vst [vmem:[%s3 + $0x18] sm:$0xf] %v1021
  %1150 = vst [vmem:[%s3 + $0x1c] sm:$0xf] %v1022
  %1151 = vst [vmem:[%s3 + $0x20] sm:$0xf] %v1023
  %1152 = vst [vmem:[%s3 + $0x24] sm:$0xf] %v1024
  %1153 = vst [vmem:[%s3 + $0x28] sm:$0xf] %v1025
  %1154 = vst [vmem:[%s3 + $0x2c] sm:$0xf] %v1026
  %1155 = vst [vmem:[%s3 + $0x30] sm:$0xf] %v1027
  %1156 = vst [vmem:[%s3 + $0x34] sm:$0xf] %v1028
  %1157 = vst [vmem:[%s3 + $0x38] sm:$0xf] %v1029
  %1158 = vst [vmem:[%s3 + $0x3c] sm:$0xf] %v1030
  %1159 = vst [vmem:[%s3 + $0x40] sm:$0xf] %v1031
  %1160 = vst [vmem:[%s3 + $0x44] sm:$0xf] %v1032
  %1161 = vst [vmem:[%s3 + $0x48] sm:$0xf] %v1033
  %1162 = vst [vmem:[%s3 + $0x4c] sm:$0xf] %v1034
  %1163 = vst [vmem:[%s3 + $0x50] sm:$0xf] %v1035
  %1164 = vst [vmem:[%s3 + $0x54] sm:$0xf] %v1036
  %1165 = vst [vmem:[%s3 + $0x58] sm:$0xf] %v1037
  %1166 = vst [vmem:[%s3 + $0x5c] sm:$0xf] %v1038
  %1167 = vst [vmem:[%s3 + $0x60] sm:$0xf] %v1039
  %1168 = vst [vmem:[%s3 + $0x64] sm:$0xf] %v1040
  %1169 = vst [vmem:[%s3 + $0x68] sm:$0xf] %v1041
  %1170 = vst [vmem:[%s3 + $0x6c] sm:$0xf] %v1042
  %1171 = vst [vmem:[%s3 + $0x70] sm:$0xf] %v1043
  %1172 = vst [vmem:[%s3 + $0x74] sm:$0xf] %v1044
  %1173 = vst [vmem:[%s3 + $0x78] sm:$0xf] %v1045
  %1174 = vst [vmem:[%s3 + $0x7c] sm:$0xf] %v1046
  %1175 = vst [vmem:[%s3 + $0x80] sm:$0xf] %v1047
  %1176 = vst [vmem:[%s3 + $0x84] sm:$0xf] %v1048
  %1177 = vst [vmem:[%s3 + $0x88] sm:$0xf] %v1049
  %1178 = vst [vmem:[%s3 + $0x8c] sm:$0xf] %v1050
  %1179 = vst [vmem:[%s3 + $0x90] sm:$0xf] %v1051
  %1180 = vst [vmem:[%s3 + $0x94] sm:$0xf] %v1052
  %1181 = vst [vmem:[%s3 + $0x98] sm:$0xf] %v1053
  %1182 = vst [vmem:[%s3 + $0x9c] sm:$0xf] %v1054
  %1183 = vst [vmem:[%s3 + $0xa0] sm:$0xf] %v1055
  %1184 = vst [vmem:[%s3 + $0xa4] sm:$0xf] %v1056
  %1185 = vst [vmem:[%s3 + $0xa8] sm:$0xf] %v1057
  %1186 = vst [vmem:[%s3 + $0xac] sm:$0xf] %v1058
  %1187 = vst [vmem:[%s3 + $0xb0] sm:$0xf] %v1059
  %1188 = vst [vmem:[%s3 + $0xb4] sm:$0xf] %v1060
  %1189 = vst [vmem:[%s3 + $0xb8] sm:$0xf] %v1061
  %1190 = vst [vmem:[%s3 + $0xbc] sm:$0xf] %v1062
  %1191 = vst [vmem:[%s3 + $0xc0] sm:$0xf] %v1063
  %1192 = vst [vmem:[%s3 + $0xc4] sm:$0xf] %v1064
  %1193 = vst [vmem:[%s3 + $0xc8] sm:$0xf] %v1065
  %1194 = vst [vmem:[%s3 + $0xcc] sm:$0xf] %v1066
  %1195 = vst [vmem:[%s3 + $0xd0] sm:$0xf] %v1067
  %1196 = vst [vmem:[%s3 + $0xd4] sm:$0xf] %v1068
  %1197 = vst [vmem:[%s3 + $0xd8] sm:$0xf] %v1069
  %1198 = vst [vmem:[%s3 + $0xdc] sm:$0xf] %v1070
  %1199 = vst [vmem:[%s3 + $0xe0] sm:$0xf] %v1071
  %1200 = vst [vmem:[%s3 + $0xe4] sm:$0xf] %v1072
  %1201 = vst [vmem:[%s3 + $0xe8] sm:$0xf] %v1073
  %1202 = vst [vmem:[%s3 + $0xec] sm:$0xf] %v1074
  %1203 = vst [vmem:[%s3 + $0xf0] sm:$0xf] %v1075
  %1204 = vst [vmem:[%s3 + $0xf4] sm:$0xf] %v1076
  %1205 = vst [vmem:[%s3 + $0xf8] sm:$0xf] %v1077
  %1206 = vst [vmem:[%s3 + $0xfc] sm:$0xf] %v1078
  // Predicated region
  $region14: #{pint_forward.8} parent=0 // pred_check
    _
  $region15: #{pint_forward.8} parent=0 // pred_check_branch
    %1208 = sbr.rel (0) target = $region17
  $region16: #{pint_forward.8} parent=0 // pred_region
    _
  $region17: #{pint_forward.8} parent=0 // pred_fallthru
    _
  // Predicated region
  $region18: #{pint_forward.8} parent=0 // pred_check
    _
  $region19: #{pint_forward.8} parent=0 // pred_check_branch
    %1210 = sbr.rel (0) target = $region21
  $region20: #{pint_forward.8} parent=0 // pred_region
    _
  $region21: #{pint_forward.8} parent=0 // pred_fallthru
    _

// kernel: pint_forward.9
$region0: #{pint_forward.9}
  #allocation0 [shape = 'u32[]', space=smem, size = 0x4, offset = 0x4, fixed_abs, tag = 'smem constant byte address 0x4 - core index']
  #allocation1 [shape = 'u32[144,128]{1,0:T(1,128)}', space=vmem, size = 0x12000, scoped, tag = 'internal scratch']
  %s0 = inlined_call_operand.vmem [shape: bf16[512,128], index: 0, kind: input, shape index: {}]
  %s1 = inlined_call_operand.vmem [shape: bf16[128,128], index: 1, kind: input, shape index: {}]
  %s2 = inlined_call_operand.vmem [shape: f32[1,128], index: 2, kind: input, shape index: {}]
  %s3 = inlined_call_operand.vmem [shape: bf16[512,128], index: 3, kind: output, shape index: {}]
  %s4 = sld [smem:[#allocation0]]
  $region22: #{pint_forward.9} parent=0
    _
  %s6 = ssub.s32 1, %s4
  %s7 = scalar_select 0, %s6, %s4
  // Predicated region
  $region2: #{pint_forward.9} parent=0 // pred_check
    _
  $region3: #{pint_forward.9} parent=0 // pred_check_branch
    %9 = sbr.rel (0) target = $region5
  $region4: #{pint_forward.9} parent=0 // pred_region
    _
  $region5: #{pint_forward.9} parent=0 // pred_fallthru
    _
  // Predicated region
  $region6: #{pint_forward.9} parent=0 // pred_check
    _
  $region7: #{pint_forward.9} parent=0 // pred_check_branch
    %11 = sbr.rel (0) target = $region9
  $region8: #{pint_forward.9} parent=0 // pred_region
    _
  $region9: #{pint_forward.9} parent=0 // pred_fallthru
    _
  // Predicated region
  $region10: #{pint_forward.9} parent=0 // pred_check
    _
  $region11: #{pint_forward.9} parent=0 // pred_check_branch
    %13 = sbr.rel (0) target = $region13
  $region12: #{pint_forward.9} parent=0 // pred_region
    _
  $region13: #{pint_forward.9} parent=0 // pred_fallthru
    _
  %v15 = vld [vmem:[%s0] sm:$0xf]
  %v16 = vld [vmem:[%s0 + $0x4] sm:$0xf]
  %v17 = vld [vmem:[%s0 + $0x8] sm:$0xf]
  %v18 = vld [vmem:[%s0 + $0xc] sm:$0xf]
  %v19 = vld [vmem:[%s0 + $0x10] sm:$0xf]
  %v20 = vld [vmem:[%s0 + $0x14] sm:$0xf]
  %v21 = vld [vmem:[%s0 + $0x18] sm:$0xf]
  %v22 = vld [vmem:[%s0 + $0x1c] sm:$0xf]
  %v23 = vld [vmem:[%s0 + $0x20] sm:$0xf]
  %v24 = vld [vmem:[%s0 + $0x24] sm:$0xf]
  %v25 = vld [vmem:[%s0 + $0x28] sm:$0xf]
  %v26 = vld [vmem:[%s0 + $0x2c] sm:$0xf]
  %v27 = vld [vmem:[%s0 + $0x30] sm:$0xf]
  %v28 = vld [vmem:[%s0 + $0x34] sm:$0xf]
  %v29 = vld [vmem:[%s0 + $0x38] sm:$0xf]
  %v30 = vld [vmem:[%s0 + $0x3c] sm:$0xf]
  %v31 = vld [vmem:[%s0 + $0x40] sm:$0xf]
  %v32 = vld [vmem:[%s0 + $0x44] sm:$0xf]
  %v33 = vld [vmem:[%s0 + $0x48] sm:$0xf]
  %v34 = vld [vmem:[%s0 + $0x4c] sm:$0xf]
  %v35 = vld [vmem:[%s0 + $0x50] sm:$0xf]
  %v36 = vld [vmem:[%s0 + $0x54] sm:$0xf]
  %v37 = vld [vmem:[%s0 + $0x58] sm:$0xf]
  %v38 = vld [vmem:[%s0 + $0x5c] sm:$0xf]
  %v39 = vld [vmem:[%s0 + $0x60] sm:$0xf]
  %v40 = vld [vmem:[%s0 + $0x64] sm:$0xf]
  %v41 = vld [vmem:[%s0 + $0x68] sm:$0xf]
  %v42 = vld [vmem:[%s0 + $0x6c] sm:$0xf]
  %v43 = vld [vmem:[%s0 + $0x70] sm:$0xf]
  %v44 = vld [vmem:[%s0 + $0x74] sm:$0xf]
  %v45 = vld [vmem:[%s0 + $0x78] sm:$0xf]
  %v46 = vld [vmem:[%s0 + $0x7c] sm:$0xf]
  %v47 = vld [vmem:[%s0 + $0x80] sm:$0xf]
  %v48 = vld [vmem:[%s0 + $0x84] sm:$0xf]
  %v49 = vld [vmem:[%s0 + $0x88] sm:$0xf]
  %v50 = vld [vmem:[%s0 + $0x8c] sm:$0xf]
  %v51 = vld [vmem:[%s0 + $0x90] sm:$0xf]
  %v52 = vld [vmem:[%s0 + $0x94] sm:$0xf]
  %v53 = vld [vmem:[%s0 + $0x98] sm:$0xf]
  %v54 = vld [vmem:[%s0 + $0x9c] sm:$0xf]
  %v55 = vld [vmem:[%s0 + $0xa0] sm:$0xf]
  %v56 = vld [vmem:[%s0 + $0xa4] sm:$0xf]
  %v57 = vld [vmem:[%s0 + $0xa8] sm:$0xf]
  %v58 = vld [vmem:[%s0 + $0xac] sm:$0xf]
  %v59 = vld [vmem:[%s0 + $0xb0] sm:$0xf]
  %v60 = vld [vmem:[%s0 + $0xb4] sm:$0xf]
  %v61 = vld [vmem:[%s0 + $0xb8] sm:$0xf]
  %v62 = vld [vmem:[%s0 + $0xbc] sm:$0xf]
  %v63 = vld [vmem:[%s0 + $0xc0] sm:$0xf]
  %v64 = vld [vmem:[%s0 + $0xc4] sm:$0xf]
  %v65 = vld [vmem:[%s0 + $0xc8] sm:$0xf]
  %v66 = vld [vmem:[%s0 + $0xcc] sm:$0xf]
  %v67 = vld [vmem:[%s0 + $0xd0] sm:$0xf]
  %v68 = vld [vmem:[%s0 + $0xd4] sm:$0xf]
  %v69 = vld [vmem:[%s0 + $0xd8] sm:$0xf]
  %v70 = vld [vmem:[%s0 + $0xdc] sm:$0xf]
  %v71 = vld [vmem:[%s0 + $0xe0] sm:$0xf]
  %v72 = vld [vmem:[%s0 + $0xe4] sm:$0xf]
  %v73 = vld [vmem:[%s0 + $0xe8] sm:$0xf]
  %v74 = vld [vmem:[%s0 + $0xec] sm:$0xf]
  %v75 = vld [vmem:[%s0 + $0xf0] sm:$0xf]
  %v76 = vld [vmem:[%s0 + $0xf4] sm:$0xf]
  %v77 = vld [vmem:[%s0 + $0xf8] sm:$0xf]
  %v78 = vld [vmem:[%s0 + $0xfc] sm:$0xf]
  %v79 = vld [vmem:[%s1] sm:$0xf]
  %v80 = vld [vmem:[%s1 + $0x4] sm:$0xf]
  %v81 = vld [vmem:[%s1 + $0x8] sm:$0xf]
  %v82 = vld [vmem:[%s1 + $0xc] sm:$0xf]
  %v83 = vld [vmem:[%s1 + $0x10] sm:$0xf]
  %v84 = vld [vmem:[%s1 + $0x14] sm:$0xf]
  %v85 = vld [vmem:[%s1 + $0x18] sm:$0xf]
  %v86 = vld [vmem:[%s1 + $0x1c] sm:$0xf]
  %v87 = vld [vmem:[%s1 + $0x20] sm:$0xf]
  %v88 = vld [vmem:[%s1 + $0x24] sm:$0xf]
  %v89 = vld [vmem:[%s1 + $0x28] sm:$0xf]
  %v90 = vld [vmem:[%s1 + $0x2c] sm:$0xf]
  %v91 = vld [vmem:[%s1 + $0x30] sm:$0xf]
  %v92 = vld [vmem:[%s1 + $0x34] sm:$0xf]
  %v93 = vld [vmem:[%s1 + $0x38] sm:$0xf]
  %v94 = vld [vmem:[%s1 + $0x3c] sm:$0xf]
  %v95 = vld [vmem:[%s2] sm:$0x1]
  %v97 = vlaneseq
  %v98 = vshrl.u32 %v97, 7
  %v99 = vsub.s32 0, %v98
  %v100 = vrot.slane %v95, %v99
  %v166 = vunpack.c.l.b16 %v15
  %v167 = vunpack.c.l.b16 %v16
  %v168 = vunpack.c.l.b16 %v17
  %v169 = vunpack.c.l.b16 %v18
  %v170 = vunpack.c.l.b16 %v19
  %v171 = vunpack.c.l.b16 %v20
  %v172 = vunpack.c.l.b16 %v21
  %v173 = vunpack.c.l.b16 %v22
  %v174 = vunpack.c.l.b16 %v23
  %v175 = vunpack.c.l.b16 %v24
  %v176 = vunpack.c.l.b16 %v25
  %v177 = vunpack.c.l.b16 %v26
  %v178 = vunpack.c.l.b16 %v27
  %v179 = vunpack.c.l.b16 %v28
  %v180 = vunpack.c.l.b16 %v29
  %v181 = vunpack.c.l.b16 %v30
  %v182 = vunpack.c.l.b16 %v31
  %v183 = vunpack.c.l.b16 %v32
  %v184 = vunpack.c.l.b16 %v33
  %v185 = vunpack.c.l.b16 %v34
  %v186 = vunpack.c.l.b16 %v35
  %v187 = vunpack.c.l.b16 %v36
  %v188 = vunpack.c.l.b16 %v37
  %v189 = vunpack.c.l.b16 %v38
  %v190 = vunpack.c.l.b16 %v39
  %v191 = vunpack.c.l.b16 %v40
  %v192 = vunpack.c.l.b16 %v41
  %v193 = vunpack.c.l.b16 %v42
  %v194 = vunpack.c.l.b16 %v43
  %v195 = vunpack.c.l.b16 %v44
  %v196 = vunpack.c.l.b16 %v45
  %v197 = vunpack.c.l.b16 %v46
  %v198 = vunpack.c.l.b16 %v47
  %v199 = vunpack.c.l.b16 %v48
  %v200 = vunpack.c.l.b16 %v49
  %v201 = vunpack.c.l.b16 %v50
  %v202 = vunpack.c.l.b16 %v51
  %v203 = vunpack.c.l.b16 %v52
  %v204 = vunpack.c.l.b16 %v53
  %v205 = vunpack.c.l.b16 %v54
  %v206 = vunpack.c.l.b16 %v55
  %v207 = vunpack.c.l.b16 %v56
  %v208 = vunpack.c.l.b16 %v57
  %v209 = vunpack.c.l.b16 %v58
  %v210 = vunpack.c.l.b16 %v59
  %v211 = vunpack.c.l.b16 %v60
  %v212 = vunpack.c.l.b16 %v61
  %v213 = vunpack.c.l.b16 %v62
  %v214 = vunpack.c.l.b16 %v63
  %v215 = vunpack.c.l.b16 %v64
  %v216 = vunpack.c.l.b16 %v65
  %v217 = vunpack.c.l.b16 %v66
  %v218 = vunpack.c.l.b16 %v67
  %v219 = vunpack.c.l.b16 %v68
  %v220 = vunpack.c.l.b16 %v69
  %v221 = vunpack.c.l.b16 %v70
  %v222 = vunpack.c.l.b16 %v71
  %v223 = vunpack.c.l.b16 %v72
  %v224 = vunpack.c.l.b16 %v73
  %v225 = vunpack.c.l.b16 %v74
  %v226 = vunpack.c.l.b16 %v75
  %v227 = vunpack.c.l.b16 %v76
  %v228 = vunpack.c.l.b16 %v77
  %v229 = vunpack.c.l.b16 %v78
  %v230 = vpack.c.b16 %v167, %v166
  %v231 = vpack.c.b16 %v169, %v168
  %v232 = vpack.c.b16 %v171, %v170
  %v233 = vpack.c.b16 %v173, %v172
  %v234 = vpack.c.b16 %v175, %v174
  %v235 = vpack.c.b16 %v177, %v176
  %v236 = vpack.c.b16 %v179, %v178
  %v237 = vpack.c.b16 %v181, %v180
  %v238 = vpack.c.b16 %v183, %v182
  %v239 = vpack.c.b16 %v185, %v184
  %v240 = vpack.c.b16 %v187, %v186
  %v241 = vpack.c.b16 %v189, %v188
  %v242 = vpack.c.b16 %v191, %v190
  %v243 = vpack.c.b16 %v193, %v192
  %v244 = vpack.c.b16 %v195, %v194
  %v245 = vpack.c.b16 %v197, %v196
  %v246 = vpack.c.b16 %v199, %v198
  %v247 = vpack.c.b16 %v201, %v200
  %v248 = vpack.c.b16 %v203, %v202
  %v249 = vpack.c.b16 %v205, %v204
  %v250 = vpack.c.b16 %v207, %v206
  %v251 = vpack.c.b16 %v209, %v208
  %v252 = vpack.c.b16 %v211, %v210
  %v253 = vpack.c.b16 %v213, %v212
  %v254 = vpack.c.b16 %v215, %v214
  %v255 = vpack.c.b16 %v217, %v216
  %v256 = vpack.c.b16 %v219, %v218
  %v257 = vpack.c.b16 %v221, %v220
  %v258 = vpack.c.b16 %v223, %v222
  %v259 = vpack.c.b16 %v225, %v224
  %v260 = vpack.c.b16 %v227, %v226
  %v261 = vpack.c.b16 %v229, %v228
  %v310 = vunpack.c.l.b16 %v79
  %v311 = vunpack.c.l.b16 %v80
  %v312 = vunpack.c.l.b16 %v81
  %v313 = vunpack.c.l.b16 %v82
  %v314 = vunpack.c.l.b16 %v83
  %v315 = vunpack.c.l.b16 %v84
  %v316 = vunpack.c.l.b16 %v85
  %v317 = vunpack.c.l.b16 %v86
  %v318 = vunpack.c.l.b16 %v87
  %v319 = vunpack.c.l.b16 %v88
  %v320 = vunpack.c.l.b16 %v89
  %v321 = vunpack.c.l.b16 %v90
  %v322 = vunpack.c.l.b16 %v91
  %v323 = vunpack.c.l.b16 %v92
  %v324 = vunpack.c.l.b16 %v93
  %v325 = vunpack.c.l.b16 %v94
  %v326 = vpack.c.b16 %v311, %v310
  %v327 = vpack.c.b16 %v313, %v312
  %v328 = vpack.c.b16 %v315, %v314
  %v329 = vpack.c.b16 %v317, %v316
  %v330 = vpack.c.b16 %v319, %v318
  %v331 = vpack.c.b16 %v321, %v320
  %v332 = vpack.c.b16 %v323, %v322
  %v333 = vpack.c.b16 %v325, %v324
  %342 = vmatprep.subr.bf16.mxu0 0
  %343 = vmatpush1.bf16.msra.mxu0 %v326
  %344 = vmatprep.subr.bf16.mxu0 0
  %345 = vmatpush1.bf16.msra.mxu0 %v327
  %346 = vmatprep.subr.bf16.mxu0 0
  %347 = vmatpush1.bf16.msra.mxu0 %v328
  %348 = vmatprep.subr.bf16.mxu0 0
  %349 = vmatpush1.bf16.msra.mxu0 %v329
  %350 = vmatprep.subr.bf16.mxu0 0
  %351 = vmatpush1.bf16.msra.mxu0 %v330
  %352 = vmatprep.subr.bf16.mxu0 0
  %353 = vmatpush1.bf16.msra.mxu0 %v331
  %354 = vmatprep.subr.bf16.mxu0 0
  %355 = vmatpush1.bf16.msra.mxu0 %v332
  %356 = vmatprep.subr.bf16.mxu0 0
  %357 = vmatpush1.bf16.msra.mxu0 %v333
  %358 = vmatprep.subr.bf16.mxu0 0
  %359 = vmatpush1.bf16.msra.mxu0 0
  %360 = vmatprep.subr.bf16.mxu0 0
  %361 = vmatpush1.bf16.msra.mxu0 0
  %362 = vmatprep.subr.bf16.mxu0 0
  %363 = vmatpush1.bf16.msra.mxu0 0
  %364 = vmatprep.subr.bf16.mxu0 0
  %365 = vmatpush1.bf16.msra.mxu0 0
  %366 = vmatprep.subr.bf16.mxu0 0
  %367 = vmatpush1.bf16.msra.mxu0 0
  %368 = vmatprep.subr.bf16.mxu0 0
  %369 = vmatpush1.bf16.msra.mxu0 0
  %370 = vmatprep.subr.bf16.mxu0 0
  %371 = vmatpush1.bf16.msra.mxu0 0
  %372 = vmatprep.subr.bf16.mxu0 0
  %373 = vmatpush1.bf16.msra.mxu0 0
  %374 = vmatprep.mubr.bf16.mxu0 0
  %375 = vmatmul.mubr.bf16.gmra.mrb[0].mxu0 %v230
  %v376 = vpop.f32.mrb[0].mxu0
  %v377 = vadd.f32 %v100, %v376
  %v378 = vpop.f32.mrb[0].mxu0
  %v379 = vpop.f32.mrb[0].mxu0
  %v380 = vadd.f32 %v100, %v379
  %v381 = vpop.f32.mrb[0].mxu0
  %382 = vmatprep.mubr.bf16.mxu0 0
  %383 = vmatmul.mubr.bf16.gmra.mrb[0].mxu0 %v231
  %v384 = vpop.f32.mrb[0].mxu0
  %v385 = vadd.f32 %v100, %v384
  %v386 = vpop.f32.mrb[0].mxu0
  %v387 = vpop.f32.mrb[0].mxu0
  %v388 = vadd.f32 %v100, %v387
  %v389 = vpop.f32.mrb[0].mxu0
  %390 = vmatprep.mubr.bf16.mxu0 0
  %391 = vmatmul.mubr.bf16.gmra.mrb[0].mxu0 %v232
  %v392 = vpop.f32.mrb[0].mxu0
  %v393 = vadd.f32 %v100, %v392
  %v394 = vpop.f32.mrb[0].mxu0
  %v395 = vpop.f32.mrb[0].mxu0
  %v396 = vadd.f32 %v100, %v395
  %v397 = vpop.f32.mrb[0].mxu0
  %398 = vmatprep.mubr.bf16.mxu0 0
  %399 = vmatmul.mubr.bf16.gmra.mrb[0].mxu0 %v233
  %v400 = vpop.f32.mrb[0].mxu0
  %v401 = vadd.f32 %v100, %v400
  %v402 = vpop.f32.mrb[0].mxu0
  %v403 = vpop.f32.mrb[0].mxu0
  %v404 = vadd.f32 %v100, %v403
  %v405 = vpop.f32.mrb[0].mxu0
  %406 = vmatprep.mubr.bf16.mxu0 0
  %407 = vmatmul.mubr.bf16.gmra.mrb[0].mxu0 %v234
  %v408 = vpop.f32.mrb[0].mxu0
  %v409 = vadd.f32 %v100, %v408
  %v410 = vpop.f32.mrb[0].mxu0
  %v411 = vpop.f32.mrb[0].mxu0
  %v412 = vadd.f32 %v100, %v411
  %v413 = vpop.f32.mrb[0].mxu0
  %414 = vmatprep.mubr.bf16.mxu0 0
  %415 = vmatmul.mubr.bf16.gmra.mrb[0].mxu0 %v235
  %v416 = vpop.f32.mrb[0].mxu0
  %v417 = vadd.f32 %v100, %v416
  %v418 = vpop.f32.mrb[0].mxu0
  %v419 = vpop.f32.mrb[0].mxu0
  %v420 = vadd.f32 %v100, %v419
  %v421 = vpop.f32.mrb[0].mxu0
  %422 = vmatprep.mubr.bf16.mxu0 0
  %423 = vmatmul.mubr.bf16.gmra.mrb[0].mxu0 %v236
  %v424 = vpop.f32.mrb[0].mxu0
  %v425 = vadd.f32 %v100, %v424
  %v426 = vpop.f32.mrb[0].mxu0
  %v427 = vpop.f32.mrb[0].mxu0
  %v428 = vadd.f32 %v100, %v427
  %v429 = vpop.f32.mrb[0].mxu0
  %430 = vmatprep.mubr.bf16.mxu0 0
  %431 = vmatmul.mubr.bf16.gmra.mrb[0].mxu0 %v237
  %v432 = vpop.f32.mrb[0].mxu0
  %v433 = vadd.f32 %v100, %v432
  %v434 = vpop.f32.mrb[0].mxu0
  %v435 = vpop.f32.mrb[0].mxu0
  %v436 = vadd.f32 %v100, %v435
  %v437 = vpop.f32.mrb[0].mxu0
  %438 = vmatprep.mubr.bf16.mxu0 0
  %439 = vmatmul.mubr.bf16.gmra.mrb[0].mxu0 %v238
  %v440 = vpop.f32.mrb[0].mxu0
  %v441 = vadd.f32 %v100, %v440
  %v442 = vpop.f32.mrb[0].mxu0
  %v443 = vpop.f32.mrb[0].mxu0
  %v444 = vadd.f32 %v100, %v443
  %v445 = vpop.f32.mrb[0].mxu0
  %446 = vmatprep.mubr.bf16.mxu0 0
  %447 = vmatmul.mubr.bf16.gmra.mrb[0].mxu0 %v239
  %v448 = vpop.f32.mrb[0].mxu0
  %v449 = vadd.f32 %v100, %v448
  %v450 = vpop.f32.mrb[0].mxu0
  %v451 = vpop.f32.mrb[0].mxu0
  %v452 = vadd.f32 %v100, %v451
  %v453 = vpop.f32.mrb[0].mxu0
  %454 = vmatprep.mubr.bf16.mxu0 0
  %455 = vmatmul.mubr.bf16.gmra.mrb[0].mxu0 %v240
  %v456 = vpop.f32.mrb[0].mxu0
  %v457 = vadd.f32 %v100, %v456
  %v458 = vpop.f32.mrb[0].mxu0
  %v459 = vpop.f32.mrb[0].mxu0
  %v460 = vadd.f32 %v100, %v459
  %v461 = vpop.f32.mrb[0].mxu0
  %462 = vmatprep.mubr.bf16.mxu0 0
  %463 = vmatmul.mubr.bf16.gmra.mrb[0].mxu0 %v241
  %v464 = vpop.f32.mrb[0].mxu0
  %v465 = vadd.f32 %v100, %v464
  %v466 = vpop.f32.mrb[0].mxu0
  %v467 = vpop.f32.mrb[0].mxu0
  %v468 = vadd.f32 %v100, %v467
  %v469 = vpop.f32.mrb[0].mxu0
  %470 = vmatprep.mubr.bf16.mxu0 0
  %471 = vmatmul.mubr.bf16.gmra.mrb[0].mxu0 %v242
  %v472 = vpop.f32.mrb[0].mxu0
  %v473 = vadd.f32 %v100, %v472
  %v474 = vpop.f32.mrb[0].mxu0
  %v475 = vpop.f32.mrb[0].mxu0
  %v476 = vadd.f32 %v100, %v475
  %v477 = vpop.f32.mrb[0].mxu0
  %478 = vmatprep.mubr.bf16.mxu0 0
  %479 = vmatmul.mubr.bf16.gmra.mrb[0].mxu0 %v243
  %v480 = vpop.f32.mrb[0].mxu0
  %v481 = vadd.f32 %v100, %v480
  %v482 = vpop.f32.mrb[0].mxu0
  %v483 = vpop.f32.mrb[0].mxu0
  %v484 = vadd.f32 %v100, %v483
  %v485 = vpop.f32.mrb[0].mxu0
  %486 = vmatprep.mubr.bf16.mxu0 0
  %487 = vmatmul.mubr.bf16.gmra.mrb[0].mxu0 %v244
  %v488 = vpop.f32.mrb[0].mxu0
  %v489 = vadd.f32 %v100, %v488
  %v490 = vpop.f32.mrb[0].mxu0
  %v491 = vpop.f32.mrb[0].mxu0
  %v492 = vadd.f32 %v100, %v491
  %v493 = vpop.f32.mrb[0].mxu0
  %494 = vmatprep.mubr.bf16.mxu0 0
  %495 = vmatmul.mubr.bf16.gmra.mrb[0].mxu0 %v245
  %v496 = vpop.f32.mrb[0].mxu0
  %v497 = vadd.f32 %v100, %v496
  %v498 = vpop.f32.mrb[0].mxu0
  %v499 = vpop.f32.mrb[0].mxu0
  %v500 = vadd.f32 %v100, %v499
  %v501 = vpop.f32.mrb[0].mxu0
  %502 = vmatprep.mubr.bf16.mxu0 0
  %503 = vmatmul.mubr.bf16.gmra.mrb[0].mxu0 %v246
  %v504 = vpop.f32.mrb[0].mxu0
  %v505 = vadd.f32 %v100, %v504
  %v506 = vpop.f32.mrb[0].mxu0
  %v507 = vpop.f32.mrb[0].mxu0
  %v508 = vadd.f32 %v100, %v507
  %v509 = vpop.f32.mrb[0].mxu0
  %510 = vmatprep.mubr.bf16.mxu0 0
  %511 = vmatmul.mubr.bf16.gmra.mrb[0].mxu0 %v247
  %v512 = vpop.f32.mrb[0].mxu0
  %v513 = vadd.f32 %v100, %v512
  %v514 = vpop.f32.mrb[0].mxu0
  %v515 = vpop.f32.mrb[0].mxu0
  %v516 = vadd.f32 %v100, %v515
  %v517 = vpop.f32.mrb[0].mxu0
  %518 = vmatprep.mubr.bf16.mxu0 0
  %519 = vmatmul.mubr.bf16.gmra.mrb[0].mxu0 %v248
  %v520 = vpop.f32.mrb[0].mxu0
  %v521 = vadd.f32 %v100, %v520
  %v522 = vpop.f32.mrb[0].mxu0
  %v523 = vpop.f32.mrb[0].mxu0
  %v524 = vadd.f32 %v100, %v523
  %v525 = vpop.f32.mrb[0].mxu0
  %526 = vmatprep.mubr.bf16.mxu0 0
  %527 = vmatmul.mubr.bf16.gmra.mrb[0].mxu0 %v249
  %v528 = vpop.f32.mrb[0].mxu0
  %v529 = vadd.f32 %v100, %v528
  %v530 = vpop.f32.mrb[0].mxu0
  %v531 = vpop.f32.mrb[0].mxu0
  %v532 = vadd.f32 %v100, %v531
  %v533 = vpop.f32.mrb[0].mxu0
  %534 = vmatprep.mubr.bf16.mxu0 0
  %535 = vmatmul.mubr.bf16.gmra.mrb[0].mxu0 %v250
  %v536 = vpop.f32.mrb[0].mxu0
  %v537 = vadd.f32 %v100, %v536
  %v538 = vpop.f32.mrb[0].mxu0
  %v539 = vpop.f32.mrb[0].mxu0
  %v540 = vadd.f32 %v100, %v539
  %v541 = vpop.f32.mrb[0].mxu0
  %542 = vmatprep.mubr.bf16.mxu0 0
  %543 = vmatmul.mubr.bf16.gmra.mrb[0].mxu0 %v251
  %v544 = vpop.f32.mrb[0].mxu0
  %v545 = vadd.f32 %v100, %v544
  %v546 = vpop.f32.mrb[0].mxu0
  %v547 = vpop.f32.mrb[0].mxu0
  %v548 = vadd.f32 %v100, %v547
  %v549 = vpop.f32.mrb[0].mxu0
  %550 = vmatprep.mubr.bf16.mxu0 0
  %551 = vmatmul.mubr.bf16.gmra.mrb[0].mxu0 %v252
  %v552 = vpop.f32.mrb[0].mxu0
  %v553 = vadd.f32 %v100, %v552
  %v554 = vpop.f32.mrb[0].mxu0
  %v555 = vpop.f32.mrb[0].mxu0
  %v556 = vadd.f32 %v100, %v555
  %v557 = vpop.f32.mrb[0].mxu0
  %558 = vmatprep.mubr.bf16.mxu0 0
  %559 = vmatmul.mubr.bf16.gmra.mrb[0].mxu0 %v253
  %v560 = vpop.f32.mrb[0].mxu0
  %v561 = vadd.f32 %v100, %v560
  %v562 = vpop.f32.mrb[0].mxu0
  %v563 = vpop.f32.mrb[0].mxu0
  %v564 = vadd.f32 %v100, %v563
  %v565 = vpop.f32.mrb[0].mxu0
  %566 = vmatprep.mubr.bf16.mxu0 0
  %567 = vmatmul.mubr.bf16.gmra.mrb[0].mxu0 %v254
  %v568 = vpop.f32.mrb[0].mxu0
  %v569 = vadd.f32 %v100, %v568
  %v570 = vpop.f32.mrb[0].mxu0
  %v571 = vpop.f32.mrb[0].mxu0
  %v572 = vadd.f32 %v100, %v571
  %v573 = vpop.f32.mrb[0].mxu0
  %574 = vmatprep.mubr.bf16.mxu0 0
  %575 = vmatmul.mubr.bf16.gmra.mrb[0].mxu0 %v255
  %v576 = vpop.f32.mrb[0].mxu0
  %v577 = vadd.f32 %v100, %v576
  %v578 = vpop.f32.mrb[0].mxu0
  %v579 = vpop.f32.mrb[0].mxu0
  %v580 = vadd.f32 %v100, %v579
  %v581 = vpop.f32.mrb[0].mxu0
  %582 = vmatprep.mubr.bf16.mxu0 0
  %583 = vmatmul.mubr.bf16.gmra.mrb[0].mxu0 %v256
  %v584 = vpop.f32.mrb[0].mxu0
  %v585 = vadd.f32 %v100, %v584
  %v586 = vpop.f32.mrb[0].mxu0
  %v587 = vpop.f32.mrb[0].mxu0
  %v588 = vadd.f32 %v100, %v587
  %v589 = vpop.f32.mrb[0].mxu0
  %590 = vmatprep.mubr.bf16.mxu0 0
  %591 = vmatmul.mubr.bf16.gmra.mrb[0].mxu0 %v257
  %v592 = vpop.f32.mrb[0].mxu0
  %v593 = vadd.f32 %v100, %v592
  %v594 = vpop.f32.mrb[0].mxu0
  %v595 = vpop.f32.mrb[0].mxu0
  %v596 = vadd.f32 %v100, %v595
  %v597 = vpop.f32.mrb[0].mxu0
  %598 = vmatprep.mubr.bf16.mxu0 0
  %599 = vmatmul.mubr.bf16.gmra.mrb[0].mxu0 %v258
  %v600 = vpop.f32.mrb[0].mxu0
  %v601 = vadd.f32 %v100, %v600
  %v602 = vpop.f32.mrb[0].mxu0
  %v603 = vpop.f32.mrb[0].mxu0
  %v604 = vadd.f32 %v100, %v603
  %v605 = vpop.f32.mrb[0].mxu0
  %606 = vmatprep.mubr.bf16.mxu0 0
  %607 = vmatmul.mubr.bf16.gmra.mrb[0].mxu0 %v259
  %v608 = vpop.f32.mrb[0].mxu0
  %v609 = vadd.f32 %v100, %v608
  %v610 = vpop.f32.mrb[0].mxu0
  %v611 = vpop.f32.mrb[0].mxu0
  %v612 = vadd.f32 %v100, %v611
  %v613 = vpop.f32.mrb[0].mxu0
  %614 = vmatprep.mubr.bf16.mxu0 0
  %615 = vmatmul.mubr.bf16.gmra.mrb[0].mxu0 %v260
  %v616 = vpop.f32.mrb[0].mxu0
  %v617 = vadd.f32 %v100, %v616
  %v618 = vpop.f32.mrb[0].mxu0
  %v619 = vpop.f32.mrb[0].mxu0
  %v620 = vadd.f32 %v100, %v619
  %v621 = vpop.f32.mrb[0].mxu0
  %622 = vmatprep.mubr.bf16.mxu0 0
  %623 = vmatmul.mubr.bf16.gmra.mrb[0].mxu0 %v261
  %v624 = vpop.f32.mrb[0].mxu0
  %v625 = vadd.f32 %v100, %v624
  %v626 = vpop.f32.mrb[0].mxu0
  %v627 = vpop.f32.mrb[0].mxu0
  %v628 = vadd.f32 %v100, %v627
  %v629 = vpop.f32.mrb[0].mxu0
  %630 = vdwg.mxu0
  %v631 = vpack.c.bf16 %v380, %v377
  %v632 = vpack.c.bf16 %v388, %v385
  %v633 = vpack.c.bf16 %v396, %v393
  %v634 = vpack.c.bf16 %v404, %v401
  %v635 = vpack.c.bf16 %v412, %v409
  %v636 = vpack.c.bf16 %v420, %v417
  %v637 = vpack.c.bf16 %v428, %v425
  %v638 = vpack.c.bf16 %v436, %v433
  %v639 = vpack.c.bf16 %v444, %v441
  %v640 = vpack.c.bf16 %v452, %v449
  %v641 = vpack.c.bf16 %v460, %v457
  %v642 = vpack.c.bf16 %v468, %v465
  %v643 = vpack.c.bf16 %v476, %v473
  %v644 = vpack.c.bf16 %v484, %v481
  %v645 = vpack.c.bf16 %v492, %v489
  %v646 = vpack.c.bf16 %v500, %v497
  %v647 = vpack.c.bf16 %v508, %v505
  %v648 = vpack.c.bf16 %v516, %v513
  %v649 = vpack.c.bf16 %v524, %v521
  %v650 = vpack.c.bf16 %v532, %v529
  %v651 = vpack.c.bf16 %v540, %v537
  %v652 = vpack.c.bf16 %v548, %v545
  %v653 = vpack.c.bf16 %v556, %v553
  %v654 = vpack.c.bf16 %v564, %v561
  %v655 = vpack.c.bf16 %v572, %v569
  %v656 = vpack.c.bf16 %v580, %v577
  %v657 = vpack.c.bf16 %v588, %v585
  %v658 = vpack.c.bf16 %v596, %v593
  %v659 = vpack.c.bf16 %v604, %v601
  %v660 = vpack.c.bf16 %v612, %v609
  %v661 = vpack.c.bf16 %v620, %v617
  %v662 = vpack.c.bf16 %v628, %v625
  %v695 = vunpack.c.l.b16 %v631
  %v696 = vunpack.c.h.b16 %v631
  %v697 = vunpack.c.l.b16 %v632
  %v698 = vunpack.c.h.b16 %v632
  %v699 = vunpack.c.l.b16 %v633
  %v700 = vunpack.c.h.b16 %v633
  %v701 = vunpack.c.l.b16 %v634
  %v702 = vunpack.c.h.b16 %v634
  %v703 = vunpack.c.l.b16 %v635
  %v704 = vunpack.c.h.b16 %v635
  %v705 = vunpack.c.l.b16 %v636
  %v706 = vunpack.c.h.b16 %v636
  %v707 = vunpack.c.l.b16 %v637
  %v708 = vunpack.c.h.b16 %v637
  %v709 = vunpack.c.l.b16 %v638
  %v710 = vunpack.c.h.b16 %v638
  %v711 = vunpack.c.l.b16 %v639
  %v712 = vunpack.c.h.b16 %v639
  %v713 = vunpack.c.l.b16 %v640
  %v714 = vunpack.c.h.b16 %v640
  %v715 = vunpack.c.l.b16 %v641
  %v716 = vunpack.c.h.b16 %v641
  %v717 = vunpack.c.l.b16 %v642
  %v718 = vunpack.c.h.b16 %v642
  %v719 = vunpack.c.l.b16 %v643
  %v720 = vunpack.c.h.b16 %v643
  %v721 = vunpack.c.l.b16 %v644
  %v722 = vunpack.c.h.b16 %v644
  %v723 = vunpack.c.l.b16 %v645
  %v724 = vunpack.c.h.b16 %v645
  %v725 = vunpack.c.l.b16 %v646
  %v726 = vunpack.c.h.b16 %v646
  %v727 = vunpack.c.l.b16 %v647
  %v728 = vunpack.c.h.b16 %v647
  %v729 = vunpack.c.l.b16 %v648
  %v730 = vunpack.c.h.b16 %v648
  %v731 = vunpack.c.l.b16 %v649
  %v732 = vunpack.c.h.b16 %v649
  %v733 = vunpack.c.l.b16 %v650
  %v734 = vunpack.c.h.b16 %v650
  %v735 = vunpack.c.l.b16 %v651
  %v736 = vunpack.c.h.b16 %v651
  %v737 = vunpack.c.l.b16 %v652
  %v738 = vunpack.c.h.b16 %v652
  %v739 = vunpack.c.l.b16 %v653
  %v740 = vunpack.c.h.b16 %v653
  %v741 = vunpack.c.l.b16 %v654
  %v742 = vunpack.c.h.b16 %v654
  %v743 = vunpack.c.l.b16 %v655
  %v744 = vunpack.c.h.b16 %v655
  %v745 = vunpack.c.l.b16 %v656
  %v746 = vunpack.c.h.b16 %v656
  %v747 = vunpack.c.l.b16 %v657
  %v748 = vunpack.c.h.b16 %v657
  %v749 = vunpack.c.l.b16 %v658
  %v750 = vunpack.c.h.b16 %v658
  %v751 = vunpack.c.l.b16 %v659
  %v752 = vunpack.c.h.b16 %v659
  %v753 = vunpack.c.l.b16 %v660
  %v754 = vunpack.c.h.b16 %v660
  %v755 = vunpack.c.l.b16 %v661
  %v756 = vunpack.c.h.b16 %v661
  %v757 = vunpack.c.l.b16 %v662
  %v758 = vunpack.c.h.b16 %v662
  %v759 = vpack.c.b16 %v695, %v695
  %v760 = vpack.c.b16 %v696, %v696
  %v761 = vpack.c.b16 %v697, %v697
  %v762 = vpack.c.b16 %v698, %v698
  %v763 = vpack.c.b16 %v699, %v699
  %v764 = vpack.c.b16 %v700, %v700
  %v765 = vpack.c.b16 %v701, %v701
  %v766 = vpack.c.b16 %v702, %v702
  %v767 = vpack.c.b16 %v703, %v703
  %v768 = vpack.c.b16 %v704, %v704
  %v769 = vpack.c.b16 %v705, %v705
  %v770 = vpack.c.b16 %v706, %v706
  %v771 = vpack.c.b16 %v707, %v707
  %v772 = vpack.c.b16 %v708, %v708
  %v773 = vpack.c.b16 %v709, %v709
  %v774 = vpack.c.b16 %v710, %v710
  %v775 = vpack.c.b16 %v711, %v711
  %v776 = vpack.c.b16 %v712, %v712
  %v777 = vpack.c.b16 %v713, %v713
  %v778 = vpack.c.b16 %v714, %v714
  %v779 = vpack.c.b16 %v715, %v715
  %v780 = vpack.c.b16 %v716, %v716
  %v781 = vpack.c.b16 %v717, %v717
  %v782 = vpack.c.b16 %v718, %v718
  %v783 = vpack.c.b16 %v719, %v719
  %v784 = vpack.c.b16 %v720, %v720
  %v785 = vpack.c.b16 %v721, %v721
  %v786 = vpack.c.b16 %v722, %v722
  %v787 = vpack.c.b16 %v723, %v723
  %v788 = vpack.c.b16 %v724, %v724
  %v789 = vpack.c.b16 %v725, %v725
  %v790 = vpack.c.b16 %v726, %v726
  %v791 = vpack.c.b16 %v727, %v727
  %v792 = vpack.c.b16 %v728, %v728
  %v793 = vpack.c.b16 %v729, %v729
  %v794 = vpack.c.b16 %v730, %v730
  %v795 = vpack.c.b16 %v731, %v731
  %v796 = vpack.c.b16 %v732, %v732
  %v797 = vpack.c.b16 %v733, %v733
  %v798 = vpack.c.b16 %v734, %v734
  %v799 = vpack.c.b16 %v735, %v735
  %v800 = vpack.c.b16 %v736, %v736
  %v801 = vpack.c.b16 %v737, %v737
  %v802 = vpack.c.b16 %v738, %v738
  %v803 = vpack.c.b16 %v739, %v739
  %v804 = vpack.c.b16 %v740, %v740
  %v805 = vpack.c.b16 %v741, %v741
  %v806 = vpack.c.b16 %v742, %v742
  %v807 = vpack.c.b16 %v743, %v743
  %v808 = vpack.c.b16 %v744, %v744
  %v809 = vpack.c.b16 %v745, %v745
  %v810 = vpack.c.b16 %v746, %v746
  %v811 = vpack.c.b16 %v747, %v747
  %v812 = vpack.c.b16 %v748, %v748
  %v813 = vpack.c.b16 %v749, %v749
  %v814 = vpack.c.b16 %v750, %v750
  %v815 = vpack.c.b16 %v751, %v751
  %v816 = vpack.c.b16 %v752, %v752
  %v817 = vpack.c.b16 %v753, %v753
  %v818 = vpack.c.b16 %v754, %v754
  %v819 = vpack.c.b16 %v755, %v755
  %v820 = vpack.c.b16 %v756, %v756
  %v821 = vpack.c.b16 %v757, %v757
  %v822 = vpack.c.b16 %v758, %v758
  %887 = vst [vmem:[%s3] sm:$0xf] %v759
  %888 = vst [vmem:[%s3 + $0x4] sm:$0xf] %v760
  %889 = vst [vmem:[%s3 + $0x8] sm:$0xf] %v761
  %890 = vst [vmem:[%s3 + $0xc] sm:$0xf] %v762
  %891 = vst [vmem:[%s3 + $0x10] sm:$0xf] %v763
  %892 = vst [vmem:[%s3 + $0x14] sm:$0xf] %v764
  %893 = vst [vmem:[%s3 + $0x18] sm:$0xf] %v765
  %894 = vst [vmem:[%s3 + $0x1c] sm:$0xf] %v766
  %895 = vst [vmem:[%s3 + $0x20] sm:$0xf] %v767
  %896 = vst [vmem:[%s3 + $0x24] sm:$0xf] %v768
  %897 = vst [vmem:[%s3 + $0x28] sm:$0xf] %v769
  %898 = vst [vmem:[%s3 + $0x2c] sm:$0xf] %v770
  %899 = vst [vmem:[%s3 + $0x30] sm:$0xf] %v771
  %900 = vst [vmem:[%s3 + $0x34] sm:$0xf] %v772
  %901 = vst [vmem:[%s3 + $0x38] sm:$0xf] %v773
  %902 = vst [vmem:[%s3 + $0x3c] sm:$0xf] %v774
  %903 = vst [vmem:[%s3 + $0x40] sm:$0xf] %v775
  %904 = vst [vmem:[%s3 + $0x44] sm:$0xf] %v776
  %905 = vst [vmem:[%s3 + $0x48] sm:$0xf] %v777
  %906 = vst [vmem:[%s3 + $0x4c] sm:$0xf] %v778
  %907 = vst [vmem:[%s3 + $0x50] sm:$0xf] %v779
  %908 = vst [vmem:[%s3 + $0x54] sm:$0xf] %v780
  %909 = vst [vmem:[%s3 + $0x58] sm:$0xf] %v781
  %910 = vst [vmem:[%s3 + $0x5c] sm:$0xf] %v782
  %911 = vst [vmem:[%s3 + $0x60] sm:$0xf] %v783
  %912 = vst [vmem:[%s3 + $0x64] sm:$0xf] %v784
  %913 = vst [vmem:[%s3 + $0x68] sm:$0xf] %v785
  %914 = vst [vmem:[%s3 + $0x6c] sm:$0xf] %v786
  %915 = vst [vmem:[%s3 + $0x70] sm:$0xf] %v787
  %916 = vst [vmem:[%s3 + $0x74] sm:$0xf] %v788
  %917 = vst [vmem:[%s3 + $0x78] sm:$0xf] %v789
  %918 = vst [vmem:[%s3 + $0x7c] sm:$0xf] %v790
  %919 = vst [vmem:[%s3 + $0x80] sm:$0xf] %v791
  %920 = vst [vmem:[%s3 + $0x84] sm:$0xf] %v792
  %921 = vst [vmem:[%s3 + $0x88] sm:$0xf] %v793
  %922 = vst [vmem:[%s3 + $0x8c] sm:$0xf] %v794
  %923 = vst [vmem:[%s3 + $0x90] sm:$0xf] %v795
  %924 = vst [vmem:[%s3 + $0x94] sm:$0xf] %v796
  %925 = vst [vmem:[%s3 + $0x98] sm:$0xf] %v797
  %926 = vst [vmem:[%s3 + $0x9c] sm:$0xf] %v798
  %927 = vst [vmem:[%s3 + $0xa0] sm:$0xf] %v799
  %928 = vst [vmem:[%s3 + $0xa4] sm:$0xf] %v800
  %929 = vst [vmem:[%s3 + $0xa8] sm:$0xf] %v801
  %930 = vst [vmem:[%s3 + $0xac] sm:$0xf] %v802
  %931 = vst [vmem:[%s3 + $0xb0] sm:$0xf] %v803
  %932 = vst [vmem:[%s3 + $0xb4] sm:$0xf] %v804
  %933 = vst [vmem:[%s3 + $0xb8] sm:$0xf] %v805
  %934 = vst [vmem:[%s3 + $0xbc] sm:$0xf] %v806
  %935 = vst [vmem:[%s3 + $0xc0] sm:$0xf] %v807
  %936 = vst [vmem:[%s3 + $0xc4] sm:$0xf] %v808
  %937 = vst [vmem:[%s3 + $0xc8] sm:$0xf] %v809
  %938 = vst [vmem:[%s3 + $0xcc] sm:$0xf] %v810
  %939 = vst [vmem:[%s3 + $0xd0] sm:$0xf] %v811
  %940 = vst [vmem:[%s3 + $0xd4] sm:$0xf] %v812
  %941 = vst [vmem:[%s3 + $0xd8] sm:$0xf] %v813
  %942 = vst [vmem:[%s3 + $0xdc] sm:$0xf] %v814
  %943 = vst [vmem:[%s3 + $0xe0] sm:$0xf] %v815
  %944 = vst [vmem:[%s3 + $0xe4] sm:$0xf] %v816
  %945 = vst [vmem:[%s3 + $0xe8] sm:$0xf] %v817
  %946 = vst [vmem:[%s3 + $0xec] sm:$0xf] %v818
  %947 = vst [vmem:[%s3 + $0xf0] sm:$0xf] %v819
  %948 = vst [vmem:[%s3 + $0xf4] sm:$0xf] %v820
  %949 = vst [vmem:[%s3 + $0xf8] sm:$0xf] %v821
  %950 = vst [vmem:[%s3 + $0xfc] sm:$0xf] %v822
  // Predicated region
  $region14: #{pint_forward.9} parent=0 // pred_check
    _
  $region15: #{pint_forward.9} parent=0 // pred_check_branch
    %952 = sbr.rel (0) target = $region17
  $region16: #{pint_forward.9} parent=0 // pred_region
    _
  $region17: #{pint_forward.9} parent=0 // pred_fallthru
    _
  // Predicated region
  $region18: #{pint_forward.9} parent=0 // pred_check
    _
  $region19: #{pint_forward.9} parent=0 // pred_check_branch
    %954 = sbr.rel (0) target = $region21
  $region20: #{pint_forward.9} parent=0 // pred_region
    _
  $region21: #{pint_forward.9} parent=0 // pred_fallthru
    _

// kernel: pint_forward.13
$region0: #{pint_forward.13}
  #allocation0 [shape = 'u32[]', space=smem, size = 0x4, offset = 0x4, fixed_abs, tag = 'smem constant byte address 0x4 - core index']
  #allocation1 [shape = 'u32[144,128]{1,0:T(1,128)}', space=vmem, size = 0x12000, scoped, tag = 'internal scratch']
  %s0 = inlined_call_operand.vmem [shape: f32[16,128], index: 0, kind: input, shape index: {}]
  %s1 = inlined_call_operand.vmem [shape: f32[16,128], index: 1, kind: input, shape index: {}]
  %s2 = inlined_call_operand.vmem [shape: s32[16,128], index: 2, kind: input, shape index: {}]
  %s3 = inlined_call_operand.vmem [shape: f32[1,128], index: 3, kind: output, shape index: {0}]
  %s4 = inlined_call_operand.vmem [shape: f32[1,128], index: 4, kind: output, shape index: {1}]
  %5 = xla_tuple %s3, %s4
  %s6 = sld [smem:[#allocation0]]
  $region34: #{pint_forward.13} parent=0
    _
  %s8 = ssub.s32 1, %s6
  %s9 = scalar_select 0, %s8, %s6
  // Predicated region
  $region2: #{pint_forward.13} parent=0 // pred_check
    _
  $region3: #{pint_forward.13} parent=0 // pred_check_branch
    %11 = sbr.rel (0) target = $region5
  $region4: #{pint_forward.13} parent=0 // pred_region
    _
  $region5: #{pint_forward.13} parent=0 // pred_fallthru
    _
  // Predicated region
  $region6: #{pint_forward.13} parent=0 // pred_check
    _
  $region7: #{pint_forward.13} parent=0 // pred_check_branch
    %13 = sbr.rel (0) target = $region9
  $region8: #{pint_forward.13} parent=0 // pred_region
    _
  $region9: #{pint_forward.13} parent=0 // pred_fallthru
    _
  // Predicated region
  $region10: #{pint_forward.13} parent=0 // pred_check
    _
  $region11: #{pint_forward.13} parent=0 // pred_check_branch
    %15 = sbr.rel (0) target = $region13
  $region12: #{pint_forward.13} parent=0 // pred_region
    _
  $region13: #{pint_forward.13} parent=0 // pred_fallthru
    _
  %p16 = scmp.eq.s32.totalorder 0, 0
  // Predicated region
  $region14: #{pint_forward.13} parent=0 // pred_check
    %p17 = pneg %p16
  $region15: #{pint_forward.13} parent=0 // pred_check_branch
    %19 = sbr.rel (%p17) target = $region17
  $region16: #{pint_forward.13} parent=0 // pred_region
    %20 = vst [vmem:[%s3] sm:$0x1] 0.0
    %21 = vst [vmem:[%s4] sm:$0x1] 0.0
  $region17: #{pint_forward.13} parent=0 // pred_fallthru
    _
  %v22 = vld [vmem:[%s0] sm:$0xff]
  %v23 = vld [vmem:[%s0 + $0x8] sm:$0xff]
  %v24 = vld [vmem:[%s1] sm:$0xff]
  %v25 = vld [vmem:[%s1 + $0x8] sm:$0xff]
  %v26 = vsub.f32 %v22, %v24
  %v27 = vsub.f32 %v23, %v25
  %v28 = vand.u32 2147483647, %v26
  %v29 = vand.u32 2147483647, %v27
  %vm30 = vcmp.lt.f32.partialorder %v28, 1.0
  %vm31 = vcmp.lt.f32.partialorder %v29, 1.0
  %v32 = vmul.f32 %v26, 0.5
  %v33 = vmul.f32 %v27, 0.5
  %v34 = vmul.f32 %v32, %v26
  %v35 = vmul.f32 %v33, %v27
  %v36 = vsub.f32 %v28, 0.5
  %v37 = vsub.f32 %v29, 0.5
  %v38 = vsel %vm30, %v34, %v36
  %v39 = vsel %vm31, %v35, %v37
  %v40 = vld [vmem:[%s2] sm:$0xff]
  %v41 = vld [vmem:[%s2 + $0x8] sm:$0xff]
  %vm42 = vcmp.eq.s32.totalorder %v40, 1
  %vm43 = vcmp.eq.s32.totalorder %v41, 1
  %v44 = vsel %vm42, 1, 0
  %v45 = vsel %vm43, 1, 0
  %v46 = vcvt.s32.f32 %v44
  %v47 = vcvt.s32.f32 %v45
  %v48 = vld [vmem:[%s3] sm:$0x1]
  %v49 = vmul.f32 %v38, %v46
  %v50 = vmul.f32 %v39, %v47
  %v51 = vadd.f32 %v49, %v50
  %v52 = vrot.slane %v51, 4
  %v53 = vadd.f32 %v51, %v52
  %v54 = vrot.slane %v53, 2
  %v55 = vadd.f32 %v53, %v54
  %v56 = vrot.slane %v55, 1
  %v57 = vadd.f32 %v55, %v56
  %v58 = vadd.f32 %v48, %v57
  %59 = vst [vmem:[%s3] sm:$0x1] %v58
  %v60 = vld [vmem:[%s4] sm:$0x1]
  %v61 = vadd.f32 %v46, %v47
  %v62 = vrot.slane %v61, 4
  %v63 = vadd.f32 %v61, %v62
  %v64 = vrot.slane %v63, 2
  %v65 = vadd.f32 %v63, %v64
  %v66 = vrot.slane %v65, 1
  %v67 = vadd.f32 %v65, %v66
  %v68 = vadd.f32 %v60, %v67
  %69 = vst [vmem:[%s4] sm:$0x1] %v68
  // Predicated region
  $region18: #{pint_forward.13} parent=0 // pred_check
    _
  $region19: #{pint_forward.13} parent=0 // pred_check_branch
    %71 = sbr.rel (0) target = $region21
  $region20: #{pint_forward.13} parent=0 // pred_region
    _
  $region21: #{pint_forward.13} parent=0 // pred_fallthru
    _
  // Predicated region
  $region22: #{pint_forward.13} parent=0 // pred_check
    _
  $region23: #{pint_forward.13} parent=0 // pred_check_branch
    %73 = sbr.rel (0) target = $region25
  $region24: #{pint_forward.13} parent=0 // pred_region
    _
  $region25: #{pint_forward.13} parent=0 // pred_fallthru
    _
  // Predicated region
  $region26: #{pint_forward.13} parent=0 // pred_check
    _
  $region27: #{pint_forward.13} parent=0 // pred_check_branch
    %75 = sbr.rel (0) target = $region29
  $region28: #{pint_forward.13} parent=0 // pred_region
    _
  $region29: #{pint_forward.13} parent=0 // pred_fallthru
    _
  // Predicated region
  $region30: #{pint_forward.13} parent=0 // pred_check
    _
  $region31: #{pint_forward.13} parent=0 // pred_check_branch
    %77 = sbr.rel (0) target = $region33
  $region32: #{pint_forward.13} parent=0 // pred_region
    _
  $region33: #{pint_forward.13} parent=0 // pred_fallthru
    _

</llo_original>
